<compile_context>
chip_gen: v6e
topology: v6e:2x2x1
jax: 0.10.0
libtpu: 0.0.40
codegen_flags: <defaults>
</compile_context>

<pallas_src>
import functools

import numpy as np
import jax
import jax.numpy as jnp
from jax.experimental import pallas as pl
from jax.experimental.pallas import tpu as pltpu


def _round_up(x, m):
    return ((x + m - 1) // m) * m


def _pad_to(a, shape):
    pads = [(0, t - s) for s, t in zip(a.shape, shape)]
    if all(p == (0, 0) for p in pads):
        return a
    return jnp.pad(a, pads)


def bottleneck_kernel(x_ref, w1_ref, s1_ref, b1_ref,
                      w2_ref, s2_ref, b2_ref,
                      w3_ref, s3_ref, b3_ref,
                      f1w_ref, f1b_ref, f2w_ref, f2b_ref,
                      out_ref, *, H, W):
    """One grid step == one image: (HW, C) lane-dense tiles."""
    HW = H * W

    # ---- conv1 (1x1) + bn1 + relu ---------------------------------------
    # Only the bf16 copy of x stays live through conv2 (residual re-read later).
    xb = x_ref[...].astype(jnp.bfloat16)
    h1 = jnp.dot(xb, w1_ref[...], preferred_element_type=jnp.float32)
    h1 = jnp.maximum(h1 * s1_ref[...] + b1_ref[...], 0.0)           # (HW, P) f32

    # ---- conv2 (3x3, stride=1, pad=1) + bn2 + relu -----------------------
    # 9 taps = pltpu.roll (sublane rotate, XLU slot) of h1, masked at image
    # borders with (HW, 1) iota masks (lane-broadcast multiply in f32),
    # lane-concatenated and contracted in ONE fused K=9P MXU matmul.
    ridx = jax.lax.broadcasted_iota(jnp.int32, (HW, 1), 0)           # flat index
    col = ridx % W
    row_ok = {-1: ridx >= W, 0: None, 1: ridx < (H - 1) * W}
    col_ok = {-1: col >= 1, 0: None, 1: col < (W - 1)}

    taps = []
    for dy in (-1, 0, 1):
        for dx in (-1, 0, 1):
            delta = dy * W + dx
            if delta == 0:
                sh = h1
            else:
                sh = pltpu.roll(h1, shift=(-delta) % HW, axis=0)     # (HW, P)
            m = row_ok[dy]
            c = col_ok[dx]
            if m is None:
                m = c
            elif c is not None:
                m = m & c
            if m is not None:
                # f32 mask-mul before the bf16 cast (native VPU path on v5e);
                # the rotate wrap-around rows are always masked off here.
                sh = sh * m.astype(jnp.float32)
            taps.append(sh.astype(jnp.bfloat16))
    patches = jnp.concatenate(taps, axis=1)                          # (HW, 9P)
    h2 = jnp.dot(patches, w2_ref[...], preferred_element_type=jnp.float32)
    h2 = jnp.maximum(h2 * s2_ref[...] + b2_ref[...], 0.0)            # (HW, P) f32

    # ---- conv3 (1x1) + bn3 ------------------------------------------------
    h3 = jnp.dot(h2.astype(jnp.bfloat16), w3_ref[...],
                 preferred_element_type=jnp.float32)
    h3 = h3 * s3_ref[...] + b3_ref[...]                              # (HW, C4) f32

    # ---- SE (pool -> fc -> relu -> fc -> sigmoid), residual add, relu -----
    y = jnp.mean(h3, axis=0, keepdims=True)                          # (1, C4)
    y = jnp.dot(y.astype(jnp.bfloat16), f1w_ref[...],
                preferred_element_type=jnp.float32) + f1b_ref[...]
    y = jnp.maximum(y, 0.0)
    z = jnp.dot(y.astype(jnp.bfloat16), f2w_ref[...],
                preferred_element_type=jnp.float32) + f2b_ref[...]
    gate = 1.0 / (1.0 + jnp.exp(-z))            # exp on EUP; (1, C4) is tiny

    # Residual x read only here -> lower peak live VMEM/vregs through conv2.
    out_ref[...] = jnp.maximum(h3 * gate + x_ref[...], 0.0)


def bottleneck_pallas(x_nchw, params, H, W):
    B, Cin = int(x_nchw.shape[0]), int(x_nchw.shape[1])
    HW = H * W
    assert HW % 8 == 0, "kernel assumes H*W is a multiple of the sublane tile (8)"
    P = int(params["w1"].shape[1])
    C4 = int(params["w3"].shape[1])
    assert Cin == C4, "identity residual path requires inplanes == 4*planes"

    LANE = 128
    Cp = _round_up(max(Cin, LANE), LANE)     # padded Cin == padded C4
    Pp = _round_up(max(P, LANE), LANE)
    bf = jnp.bfloat16

    # NCHW -> (B*HW, C): channels on the lane axis, zero-padded to 128 lanes.
    x_flat = jnp.transpose(x_nchw, (0, 2, 3, 1)).reshape(B * HW, Cin)
    x_flat = _pad_to(x_flat.astype(jnp.float32), (B * HW, Cp))

    w1 = _pad_to(params["w1"], (Cp, Pp)).astype(bf)
    w2 = jnp.stack([_pad_to(params["w2"][k], (Pp, Pp)) for k in range(9)], 0)
    w2f = w2.reshape(9 * Pp, Pp).astype(bf)                      # fused K = 9P
    w3 = _pad_to(params["w3"], (Pp, Cp)).astype(bf)
    f1w = _pad_to(params["f1w"], (Cp, Cp)).astype(bf)
    f2w = _pad_to(params["f2w"], (Cp, Cp)).astype(bf)
    s1 = _pad_to(params["s1"], (1, Pp)); b1 = _pad_to(params["b1"], (1, Pp))
    s2 = _pad_to(params["s2"], (1, Pp)); b2 = _pad_to(params["b2"], (1, Pp))
    s3 = _pad_to(params["s3"], (1, Cp)); b3 = _pad_to(params["b3"], (1, Cp))
    f1b = _pad_to(params["f1b"], (1, Cp)); f2b = _pad_to(params["f2b"], (1, Cp))

    def resident(shape):          # weights / BN params: same block every step
        return pl.BlockSpec(shape, lambda b: (0,) * len(shape))

    kernel = functools.partial(bottleneck_kernel, H=H, W=W)

    # Right-size the scoped VMEM budget from the per-step footprint, capped at
    # ~75% of the chip's physical VMEM (safe on v5e/v6e 128 MiB and v7x 64 MiB).
    est = (
        2 * 2 * HW * Cp * 4                                    # x / out tiles, f32, 2-buf
        + 2 * (Cp * Pp + 9 * Pp * Pp + Pp * Cp + 2 * Cp * Cp)  # bf16 weights
        + 4 * 4 * Pp + 6 * 4 * Cp                              # BN / fc scale & bias
        + HW * (2 * Pp * 4 + 9 * Pp * 2 + Cp * 4)              # h1/h2 f32, patches bf16, h3 f32
    )
    try:
        cap = int(getattr(pltpu.get_tpu_info(), "vmem_capacity_bytes",
                          64 * 1024 * 1024))
    except Exception:  # pragma: no cover - conservative fallback
        cap = 64 * 1024 * 1024
    vmem_limit = min(int(0.75 * cap), max(32 * 1024 * 1024, 2 * est))

    grid_spec = pltpu.PrefetchScalarGridSpec(
        num_scalar_prefetch=0,
        grid=(B,),                                   # one image per step, pipelined
        in_specs=[
            pl.BlockSpec((HW, Cp), lambda b: (b, 0)),            # x (one image)
            resident((Cp, Pp)), resident((1, Pp)), resident((1, Pp)),   # conv1/bn1
            resident((9 * Pp, Pp)), resident((1, Pp)), resident((1, Pp)),  # conv2/bn2
            resident((Pp, Cp)), resident((1, Cp)), resident((1, Cp)),   # conv3/bn3
            resident((Cp, Cp)), resident((1, Cp)),                       # SE fc1
            resident((Cp, Cp)), resident((1, Cp)),                       # SE fc2
        ],
        out_specs=pl.BlockSpec((HW, Cp), lambda b: (b, 0)),
    )

    out_flat = pl.pallas_call(
        kernel,
        out_shape=jax.ShapeDtypeStruct((B * HW, Cp), jnp.float32),
        grid_spec=grid_spec,
        compiler_params=pltpu.CompilerParams(
            dimension_semantics=("parallel",),       # megacore split on v7x
            vmem_limit_bytes=vmem_limit,
        ),
    )(x_flat, w1, s1, b1, w2f, s2, b2, w3, s3, b3, f1w, f1b, f2w, f2b)

    out = out_flat[:, :C4].reshape(B, H, W, C4)      # drop padded lanes first
    return jnp.transpose(out, (0, 3, 1, 2))


def make_params(key, inplanes, planes):
    C4 = planes * 4
    eps = 1e-5
    ks = jax.random.split(key, 19)

    def nrm(k, shape, scale=0.1):
        return (scale * jax.random.normal(k, shape)).astype(jnp.float32)

    def bn_fold(kg, kb, km, kv, c):
        gamma = 1.0 + 0.1 * jax.random.normal(kg, (c,))
        beta = 0.1 * jax.random.normal(kb, (c,))
        mean = 0.1 * jax.random.normal(km, (c,))
        var = 1.0 + 0.5 * jax.random.uniform(kv, (c,))
        scale = gamma / jnp.sqrt(var + eps)
        bias = beta - mean * scale
        return (scale.reshape(1, c).astype(jnp.float32),
                bias.reshape(1, c).astype(jnp.float32))

    s1, b1 = bn_fold(ks[1], ks[2], ks[3], ks[4], planes)
    s2, b2 = bn_fold(ks[6], ks[7], ks[8], ks[9], planes)
    s3, b3 = bn_fold(ks[11], ks[12], ks[13], ks[14], C4)

    return dict(
        w1=nrm(ks[0], (inplanes, planes)), s1=s1, b1=b1,          # (in, out)
        w2=nrm(ks[5], (9, planes, planes)), s2=s2, b2=b2,         # (tap, in, out)
        w3=nrm(ks[10], (planes, C4)), s3=s3, b3=b3,
        f1w=nrm(ks[15], (C4, C4)), f1b=nrm(ks[16], (1, C4)),
        f2w=nrm(ks[17], (C4, C4)), f2b=nrm(ks[18], (1, C4)),
    )


def bottleneck_reference(x_nchw, params, H, W):
    """Plain-JAX (NHWC) reference with the same bf16-matmul / f32-accumulate
    numerics as the kernel, for a tight correctness check."""
    bf = jnp.bfloat16
    x = jnp.transpose(x_nchw, (0, 2, 3, 1))                      # (B,H,W,Cin) f32
    h1 = jnp.einsum("bhwc,cp->bhwp", x.astype(bf), params["w1"].astype(bf),
                    preferred_element_type=jnp.float32)
    h1 = jnp.maximum(h1 * params["s1"][0] + params["b1"][0], 0.0)
    xp = jnp.pad(h1.astype(bf), ((0, 0), (1, 1), (1, 1), (0, 0)))
    acc = jnp.zeros(h1.shape, jnp.float32)
    for ky in range(3):
        for kx in range(3):
            acc = acc + jnp.einsum("bhwc,cp->bhwp",
                                   xp[:, ky:ky + H, kx:kx + W, :],
                                   params["w2"][ky * 3 + kx].astype(bf),
                                   preferred_element_type=jnp.float32)
    h2 = jnp.maximum(acc * params["s2"][0] + params["b2"][0], 0.0)
    h3 = jnp.einsum("bhwc,cp->bhwp", h2.astype(bf), params["w3"].astype(bf),
                    preferred_element_type=jnp.float32)
    h3 = h3 * params["s3"][0] + params["b3"][0]
    y = jnp.mean(h3, axis=(1, 2))                                # (B, C4) f32
    y = jnp.maximum(jnp.dot(y.astype(bf), params["f1w"].astype(bf),
                            preferred_element_type=jnp.float32)
                    + params["f1b"][0], 0.0)
    z = jnp.dot(y.astype(bf), params["f2w"].astype(bf),
                preferred_element_type=jnp.float32) + params["f2b"][0]
    g = 1.0 / (1.0 + jnp.exp(-z))
    out = jnp.maximum(h3 * g[:, None, None, :] + x, 0.0)
    return jnp.transpose(out, (0, 3, 1, 2))


if __name__ == "__main__":
    B, inplanes, planes, H, W = 2, 16, 4, 16, 16                 # 4*planes == inplanes
    key = jax.random.PRNGKey(0)
    kx, kp = jax.random.split(key)
    x = jax.random.normal(kx, (B, inplanes, H, W), dtype=jnp.float32)  # NCHW input
    params = make_params(kp, inplanes, planes)

    out = jax.block_until_ready(bottleneck_pallas(x, params, H, W))
    ref = jax.block_until_ready(bottleneck_reference(x, params, H, W))
    np.testing.assert_allclose(np.asarray(out), np.asarray(ref),
                               rtol=1e-3, atol=1e-3)

    print("KERNEL_OK")
</pallas_src>

<mosaic_0001>
module attributes {stable_mosaic.version = 11 : i64} {
  func.func @bottleneck_kernel(%arg0: i32, %arg1: memref<256x128xf32, #tpu.memory_space<vmem>>, %arg2: memref<128x128xbf16, #tpu.memory_space<vmem>>, %arg3: memref<1x128xf32, #tpu.memory_space<vmem>>, %arg4: memref<1x128xf32, #tpu.memory_space<vmem>>, %arg5: memref<1152x128xbf16, #tpu.memory_space<vmem>>, %arg6: memref<1x128xf32, #tpu.memory_space<vmem>>, %arg7: memref<1x128xf32, #tpu.memory_space<vmem>>, %arg8: memref<128x128xbf16, #tpu.memory_space<vmem>>, %arg9: memref<1x128xf32, #tpu.memory_space<vmem>>, %arg10: memref<1x128xf32, #tpu.memory_space<vmem>>, %arg11: memref<128x128xbf16, #tpu.memory_space<vmem>>, %arg12: memref<1x128xf32, #tpu.memory_space<vmem>>, %arg13: memref<128x128xbf16, #tpu.memory_space<vmem>>, %arg14: memref<1x128xf32, #tpu.memory_space<vmem>>, %arg15: memref<256x128xf32, #tpu.memory_space<vmem>>) attributes {dimension_semantics = [#tpu.dimension_semantics<parallel>], iteration_bounds = array<i64: 2>, scalar_prefetch = 0 : i64, scratch_operands = 0 : i64, tpu.core_type = #tpu.core_type<tc>, window_params = [{transform_indices = @transform_0, window_bounds = array<i64: 256, 128>}, {pipeline_mode = #tpu.pipeline_mode<synchronous>, transform_indices = @transform_1, window_bounds = array<i64: 128, 128>}, {pipeline_mode = #tpu.pipeline_mode<synchronous>, transform_indices = @transform_2, window_bounds = array<i64: 1, 128>}, {pipeline_mode = #tpu.pipeline_mode<synchronous>, transform_indices = @transform_3, window_bounds = array<i64: 1, 128>}, {pipeline_mode = #tpu.pipeline_mode<synchronous>, transform_indices = @transform_4, window_bounds = array<i64: 1152, 128>}, {pipeline_mode = #tpu.pipeline_mode<synchronous>, transform_indices = @transform_5, window_bounds = array<i64: 1, 128>}, {pipeline_mode = #tpu.pipeline_mode<synchronous>, transform_indices = @transform_6, window_bounds = array<i64: 1, 128>}, {pipeline_mode = #tpu.pipeline_mode<synchronous>, transform_indices = @transform_7, window_bounds = array<i64: 128, 128>}, {pipeline_mode = #tpu.pipeline_mode<synchronous>, transform_indices = @transform_8, window_bounds = array<i64: 1, 128>}, {pipeline_mode = #tpu.pipeline_mode<synchronous>, transform_indices = @transform_9, window_bounds = array<i64: 1, 128>}, {pipeline_mode = #tpu.pipeline_mode<synchronous>, transform_indices = @transform_10, window_bounds = array<i64: 128, 128>}, {pipeline_mode = #tpu.pipeline_mode<synchronous>, transform_indices = @transform_11, window_bounds = array<i64: 1, 128>}, {pipeline_mode = #tpu.pipeline_mode<synchronous>, transform_indices = @transform_12, window_bounds = array<i64: 128, 128>}, {pipeline_mode = #tpu.pipeline_mode<synchronous>, transform_indices = @transform_13, window_bounds = array<i64: 1, 128>}, {transform_indices = @transform_14, window_bounds = array<i64: 256, 128>}]} {
    %c0 = arith.constant 0 : index
    %c0_0 = arith.constant 0 : index
    %0 = vector.load %arg1[%c0, %c0_0] : memref<256x128xf32, #tpu.memory_space<vmem>>, vector<256x128xf32>
    %1 = arith.truncf %0 : vector<256x128xf32> to vector<256x128xbf16>
    %c0_1 = arith.constant 0 : index
    %c0_2 = arith.constant 0 : index
    %2 = vector.load %arg2[%c0_1, %c0_2] : memref<128x128xbf16, #tpu.memory_space<vmem>>, vector<128x128xbf16>
    %cst = arith.constant dense<0.000000e+00> : vector<256x128xf32>
    %3 = tpu.matmul %1, %2, %cst {dimension_numbers = #tpu.dot_dimension_numbers<[1], [0], [0], [1], [0, 0, 1, 1], [], []>} : vector<256x128xbf16>, vector<128x128xbf16>, vector<256x128xf32> -> vector<256x128xf32>
    %c0_3 = arith.constant 0 : index
    %c0_4 = arith.constant 0 : index
    %4 = vector.load %arg3[%c0_3, %c0_4] : memref<1x128xf32, #tpu.memory_space<vmem>>, vector<1x128xf32>
    %5 = vector.broadcast %4 : vector<1x128xf32> to vector<256x128xf32>
    %6 = arith.mulf %3, %5 : vector<256x128xf32>
    %c0_5 = arith.constant 0 : index
    %c0_6 = arith.constant 0 : index
    %7 = vector.load %arg4[%c0_5, %c0_6] : memref<1x128xf32, #tpu.memory_space<vmem>>, vector<1x128xf32>
    %8 = vector.broadcast %7 : vector<1x128xf32> to vector<256x128xf32>
    %9 = arith.addf %6, %8 : vector<256x128xf32>
    %cst_7 = arith.constant 0.000000e+00 : f32
    %10 = vector.broadcast %cst_7 : f32 to vector<256x128xf32>
    %11 = arith.maximumf %9, %10 : vector<256x128xf32>
    %12 = tpu.iota {dimensions = array<i32: 0>} : vector<256x1xi32>
    %c16_i32 = arith.constant 16 : i32
    %c0_i32 = arith.constant 0 : i32
    %13 = arith.cmpi eq, %c16_i32, %c0_i32 : i32
    %c1_i32 = arith.constant 1 : i32
    %14 = arith.select %13, %c1_i32, %c16_i32 : i32
    %15 = vector.broadcast %14 : i32 to vector<256x1xi32>
    %16 = arith.remsi %12, %15 : vector<256x1xi32>
    %c0_i32_8 = arith.constant 0 : i32
    %17 = vector.broadcast %c0_i32_8 : i32 to vector<256x1xi32>
    %18 = arith.cmpi ne, %16, %17 : vector<256x1xi32>
    %c0_i32_9 = arith.constant 0 : i32
    %19 = vector.broadcast %c0_i32_9 : i32 to vector<256x1xi32>
    %20 = arith.cmpi slt, %16, %19 : vector<256x1xi32>
    %c0_i32_10 = arith.constant 0 : i32
    %21 = arith.cmpi slt, %14, %c0_i32_10 : i32
    %22 = vector.broadcast %21 : i1 to vector<256x1xi1>
    %23 = vector.broadcast %22 : vector<256x1xi1> to vector<256x1xi1>
    %24 = arith.xori %20, %23 : vector<256x1xi1>
    %25 = arith.andi %24, %18 : vector<256x1xi1>
    %26 = vector.broadcast %14 : i32 to vector<256x1xi32>
    %27 = arith.addi %16, %26 : vector<256x1xi32>
    %28 = arith.select %25, %27, %16 : vector<256x1xi1>, vector<256x1xi32>
    %c16_i32_11 = arith.constant 16 : i32
    %29 = vector.broadcast %c16_i32_11 : i32 to vector<256x1xi32>
    %30 = arith.cmpi sge, %12, %29 : vector<256x1xi32>
    %c240_i32 = arith.constant 240 : i32
    %31 = vector.broadcast %c240_i32 : i32 to vector<256x1xi32>
    %32 = arith.cmpi slt, %12, %31 : vector<256x1xi32>
    %c1_i32_12 = arith.constant 1 : i32
    %33 = vector.broadcast %c1_i32_12 : i32 to vector<256x1xi32>
    %34 = arith.cmpi sge, %28, %33 : vector<256x1xi32>
    %c15_i32 = arith.constant 15 : i32
    %35 = vector.broadcast %c15_i32 : i32 to vector<256x1xi32>
    %36 = arith.cmpi slt, %28, %35 : vector<256x1xi32>
    %c17_i32 = arith.constant 17 : i32
    %37 = tpu.dynamic_rotate %11 by %c17_i32 dim 0 : vector<256x128xf32>, i32 -> vector<256x128xf32>
    %38 = arith.andi %30, %34 : vector<256x1xi1>
    %39 = arith.extui %38 : vector<256x1xi1> to vector<256x1xi32>
    %40 = arith.sitofp %39 : vector<256x1xi32> to vector<256x1xf32>
    %41 = vector.broadcast %40 : vector<256x1xf32> to vector<256x128xf32>
    %42 = arith.mulf %37, %41 : vector<256x128xf32>
    %43 = arith.truncf %42 : vector<256x128xf32> to vector<256x128xbf16>
    %c16_i32_13 = arith.constant 16 : i32
    %44 = tpu.dynamic_rotate %11 by %c16_i32_13 dim 0 : vector<256x128xf32>, i32 -> vector<256x128xf32>
    %45 = arith.extui %30 : vector<256x1xi1> to vector<256x1xi32>
    %46 = arith.sitofp %45 : vector<256x1xi32> to vector<256x1xf32>
    %47 = vector.broadcast %46 : vector<256x1xf32> to vector<256x128xf32>
    %48 = arith.mulf %44, %47 : vector<256x128xf32>
    %49 = arith.truncf %48 : vector<256x128xf32> to vector<256x128xbf16>
    %c15_i32_14 = arith.constant 15 : i32
    %50 = tpu.dynamic_rotate %11 by %c15_i32_14 dim 0 : vector<256x128xf32>, i32 -> vector<256x128xf32>
    %51 = arith.andi %30, %36 : vector<256x1xi1>
    %52 = arith.extui %51 : vector<256x1xi1> to vector<256x1xi32>
    %53 = arith.sitofp %52 : vector<256x1xi32> to vector<256x1xf32>
    %54 = vector.broadcast %53 : vector<256x1xf32> to vector<256x128xf32>
    %55 = arith.mulf %50, %54 : vector<256x128xf32>
    %56 = arith.truncf %55 : vector<256x128xf32> to vector<256x128xbf16>
    %c1_i32_15 = arith.constant 1 : i32
    %57 = tpu.dynamic_rotate %11 by %c1_i32_15 dim 0 : vector<256x128xf32>, i32 -> vector<256x128xf32>
    %58 = arith.extui %34 : vector<256x1xi1> to vector<256x1xi32>
    %59 = arith.sitofp %58 : vector<256x1xi32> to vector<256x1xf32>
    %60 = vector.broadcast %59 : vector<256x1xf32> to vector<256x128xf32>
    %61 = arith.mulf %57, %60 : vector<256x128xf32>
    %62 = arith.truncf %61 : vector<256x128xf32> to vector<256x128xbf16>
    %63 = arith.truncf %11 : vector<256x128xf32> to vector<256x128xbf16>
    %c255_i32 = arith.constant 255 : i32
    %64 = tpu.dynamic_rotate %11 by %c255_i32 dim 0 : vector<256x128xf32>, i32 -> vector<256x128xf32>
    %65 = arith.extui %36 : vector<256x1xi1> to vector<256x1xi32>
    %66 = arith.sitofp %65 : vector<256x1xi32> to vector<256x1xf32>
    %67 = vector.broadcast %66 : vector<256x1xf32> to vector<256x128xf32>
    %68 = arith.mulf %64, %67 : vector<256x128xf32>
    %69 = arith.truncf %68 : vector<256x128xf32> to vector<256x128xbf16>
    %c241_i32 = arith.constant 241 : i32
    %70 = tpu.dynamic_rotate %11 by %c241_i32 dim 0 : vector<256x128xf32>, i32 -> vector<256x128xf32>
    %71 = arith.andi %32, %34 : vector<256x1xi1>
    %72 = arith.extui %71 : vector<256x1xi1> to vector<256x1xi32>
    %73 = arith.sitofp %72 : vector<256x1xi32> to vector<256x1xf32>
    %74 = vector.broadcast %73 : vector<256x1xf32> to vector<256x128xf32>
    %75 = arith.mulf %70, %74 : vector<256x128xf32>
    %76 = arith.truncf %75 : vector<256x128xf32> to vector<256x128xbf16>
    %c240_i32_16 = arith.constant 240 : i32
    %77 = tpu.dynamic_rotate %11 by %c240_i32_16 dim 0 : vector<256x128xf32>, i32 -> vector<256x128xf32>
    %78 = arith.extui %32 : vector<256x1xi1> to vector<256x1xi32>
    %79 = arith.sitofp %78 : vector<256x1xi32> to vector<256x1xf32>
    %80 = vector.broadcast %79 : vector<256x1xf32> to vector<256x128xf32>
    %81 = arith.mulf %77, %80 : vector<256x128xf32>
    %82 = arith.truncf %81 : vector<256x128xf32> to vector<256x128xbf16>
    %c239_i32 = arith.constant 239 : i32
    %83 = tpu.dynamic_rotate %11 by %c239_i32 dim 0 : vector<256x128xf32>, i32 -> vector<256x128xf32>
    %84 = arith.andi %32, %36 : vector<256x1xi1>
    %85 = arith.extui %84 : vector<256x1xi1> to vector<256x1xi32>
    %86 = arith.sitofp %85 : vector<256x1xi32> to vector<256x1xf32>
    %87 = vector.broadcast %86 : vector<256x1xf32> to vector<256x128xf32>
    %88 = arith.mulf %83, %87 : vector<256x128xf32>
    %89 = arith.truncf %88 : vector<256x128xf32> to vector<256x128xbf16>
    %90 = tpu.concatenate %43, %49, %56, %62, %63, %69, %76, %82, %89 in 1 : vector<256x128xbf16>, vector<256x128xbf16>, vector<256x128xbf16>, vector<256x128xbf16>, vector<256x128xbf16>, vector<256x128xbf16>, vector<256x128xbf16>, vector<256x128xbf16>, vector<256x128xbf16> -> vector<256x1152xbf16>
    %c0_17 = arith.constant 0 : index
    %c0_18 = arith.constant 0 : index
    %91 = vector.load %arg5[%c0_17, %c0_18] : memref<1152x128xbf16, #tpu.memory_space<vmem>>, vector<1152x128xbf16>
    %cst_19 = arith.constant dense<0.000000e+00> : vector<256x128xf32>
    %92 = tpu.matmul %90, %91, %cst_19 {dimension_numbers = #tpu.dot_dimension_numbers<[1], [0], [0], [1], [0, 0, 1, 1], [], []>} : vector<256x1152xbf16>, vector<1152x128xbf16>, vector<256x128xf32> -> vector<256x128xf32>
    %c0_20 = arith.constant 0 : index
    %c0_21 = arith.constant 0 : index
    %93 = vector.load %arg6[%c0_20, %c0_21] : memref<1x128xf32, #tpu.memory_space<vmem>>, vector<1x128xf32>
    %94 = vector.broadcast %93 : vector<1x128xf32> to vector<256x128xf32>
    %95 = arith.mulf %92, %94 : vector<256x128xf32>
    %c0_22 = arith.constant 0 : index
    %c0_23 = arith.constant 0 : index
    %96 = vector.load %arg7[%c0_22, %c0_23] : memref<1x128xf32, #tpu.memory_space<vmem>>, vector<1x128xf32>
    %97 = vector.broadcast %96 : vector<1x128xf32> to vector<256x128xf32>
    %98 = arith.addf %95, %97 : vector<256x128xf32>
    %cst_24 = arith.constant 0.000000e+00 : f32
    %99 = vector.broadcast %cst_24 : f32 to vector<256x128xf32>
    %100 = arith.maximumf %98, %99 : vector<256x128xf32>
    %101 = arith.truncf %100 : vector<256x128xf32> to vector<256x128xbf16>
    %c0_25 = arith.constant 0 : index
    %c0_26 = arith.constant 0 : index
    %102 = vector.load %arg8[%c0_25, %c0_26] : memref<128x128xbf16, #tpu.memory_space<vmem>>, vector<128x128xbf16>
    %cst_27 = arith.constant dense<0.000000e+00> : vector<256x128xf32>
    %103 = tpu.matmul %101, %102, %cst_27 {dimension_numbers = #tpu.dot_dimension_numbers<[1], [0], [0], [1], [0, 0, 1, 1], [], []>} : vector<256x128xbf16>, vector<128x128xbf16>, vector<256x128xf32> -> vector<256x128xf32>
    %c0_28 = arith.constant 0 : index
    %c0_29 = arith.constant 0 : index
    %104 = vector.load %arg9[%c0_28, %c0_29] : memref<1x128xf32, #tpu.memory_space<vmem>>, vector<1x128xf32>
    %105 = vector.broadcast %104 : vector<1x128xf32> to vector<256x128xf32>
    %106 = arith.mulf %103, %105 : vector<256x128xf32>
    %c0_30 = arith.constant 0 : index
    %c0_31 = arith.constant 0 : index
    %107 = vector.load %arg10[%c0_30, %c0_31] : memref<1x128xf32, #tpu.memory_space<vmem>>, vector<1x128xf32>
    %108 = vector.broadcast %107 : vector<1x128xf32> to vector<256x128xf32>
    %109 = arith.addf %106, %108 : vector<256x128xf32>
    %cst_32 = arith.constant dense<0.000000e+00> : vector<128xf32>
    %110 = vector.multi_reduction <add>, %109, %cst_32 [0] : vector<256x128xf32> to vector<128xf32>
    %111 = vector.shape_cast %110 : vector<128xf32> to vector<1x128xf32>
    %cst_33 = arith.constant 2.560000e+02 : f32
    %112 = vector.broadcast %cst_33 : f32 to vector<1x128xf32>
    %113 = arith.divf %111, %112 : vector<1x128xf32>
    %114 = arith.truncf %113 : vector<1x128xf32> to vector<1x128xbf16>
    %c0_34 = arith.constant 0 : index
    %c0_35 = arith.constant 0 : index
    %115 = vector.load %arg11[%c0_34, %c0_35] : memref<128x128xbf16, #tpu.memory_space<vmem>>, vector<128x128xbf16>
    %cst_36 = arith.constant dense<0.000000e+00> : vector<1x128xf32>
    %116 = tpu.matmul %114, %115, %cst_36 {dimension_numbers = #tpu.dot_dimension_numbers<[1], [0], [0], [1], [0, 0, 1, 1], [], []>} : vector<1x128xbf16>, vector<128x128xbf16>, vector<1x128xf32> -> vector<1x128xf32>
    %c0_37 = arith.constant 0 : index
    %c0_38 = arith.constant 0 : index
    %117 = vector.load %arg12[%c0_37, %c0_38] : memref<1x128xf32, #tpu.memory_space<vmem>>, vector<1x128xf32>
    %118 = arith.addf %116, %117 : vector<1x128xf32>
    %cst_39 = arith.constant 0.000000e+00 : f32
    %119 = vector.broadcast %cst_39 : f32 to vector<1x128xf32>
    %120 = arith.maximumf %118, %119 : vector<1x128xf32>
    %121 = arith.truncf %120 : vector<1x128xf32> to vector<1x128xbf16>
    %c0_40 = arith.constant 0 : index
    %c0_41 = arith.constant 0 : index
    %122 = vector.load %arg13[%c0_40, %c0_41] : memref<128x128xbf16, #tpu.memory_space<vmem>>, vector<128x128xbf16>
    %cst_42 = arith.constant dense<0.000000e+00> : vector<1x128xf32>
    %123 = tpu.matmul %121, %122, %cst_42 {dimension_numbers = #tpu.dot_dimension_numbers<[1], [0], [0], [1], [0, 0, 1, 1], [], []>} : vector<1x128xbf16>, vector<128x128xbf16>, vector<1x128xf32> -> vector<1x128xf32>
    %c0_43 = arith.constant 0 : index
    %c0_44 = arith.constant 0 : index
    %124 = vector.load %arg14[%c0_43, %c0_44] : memref<1x128xf32, #tpu.memory_space<vmem>>, vector<1x128xf32>
    %125 = arith.addf %123, %124 : vector<1x128xf32>
    %cst_45 = arith.constant 0.000000e+00 : f32
    %126 = vector.broadcast %cst_45 : f32 to vector<1x128xf32>
    %127 = arith.subf %126, %125 : vector<1x128xf32>
    %128 = math.exp %127 : vector<1x128xf32>
    %cst_46 = arith.constant 1.000000e+00 : f32
    %129 = vector.broadcast %cst_46 : f32 to vector<1x128xf32>
    %130 = arith.addf %129, %128 : vector<1x128xf32>
    %cst_47 = arith.constant 1.000000e+00 : f32
    %131 = vector.broadcast %cst_47 : f32 to vector<1x128xf32>
    %132 = arith.divf %131, %130 : vector<1x128xf32>
    %133 = vector.broadcast %132 : vector<1x128xf32> to vector<256x128xf32>
    %134 = arith.mulf %109, %133 : vector<256x128xf32>
    %c0_48 = arith.constant 0 : index
    %c0_49 = arith.constant 0 : index
    %135 = vector.load %arg1[%c0_48, %c0_49] : memref<256x128xf32, #tpu.memory_space<vmem>>, vector<256x128xf32>
    %136 = arith.addf %134, %135 : vector<256x128xf32>
    %cst_50 = arith.constant 0.000000e+00 : f32
    %137 = vector.broadcast %cst_50 : f32 to vector<256x128xf32>
    %138 = arith.maximumf %136, %137 : vector<256x128xf32>
    %c0_51 = arith.constant 0 : index
    %c0_52 = arith.constant 0 : index
    %139 = vector.load %arg15[%c0_51, %c0_52] : memref<256x128xf32, #tpu.memory_space<vmem>>, vector<256x128xf32>
    tpu.vector_store %arg15[%c0_51, %c0_52], %138 {strides = array<i32>} : memref<256x128xf32, #tpu.memory_space<vmem>>, vector<256x128xf32>,
    return
  }
  func.func @transform_0(%arg0: i32) -> (i32, i32) {
    %c0_i32 = arith.constant 0 : i32
    %c0_i32_0 = arith.constant 0 : i32
    return %arg0, %c0_i32 : i32, i32
  }
  func.func @transform_1(%arg0: i32) -> (i32, i32) {
    %c0_i32 = arith.constant 0 : i32
    %c0_i32_0 = arith.constant 0 : i32
    %c0_i32_1 = arith.constant 0 : i32
    return %c0_i32, %c0_i32_0 : i32, i32
  }
  func.func @transform_2(%arg0: i32) -> (i32, i32) {
    %c0_i32 = arith.constant 0 : i32
    %c0_i32_0 = arith.constant 0 : i32
    %c0_i32_1 = arith.constant 0 : i32
    return %c0_i32, %c0_i32_0 : i32, i32
  }
  func.func @transform_3(%arg0: i32) -> (i32, i32) {
    %c0_i32 = arith.constant 0 : i32
    %c0_i32_0 = arith.constant 0 : i32
    %c0_i32_1 = arith.constant 0 : i32
    return %c0_i32, %c0_i32_0 : i32, i32
  }
  func.func @transform_4(%arg0: i32) -> (i32, i32) {
    %c0_i32 = arith.constant 0 : i32
    %c0_i32_0 = arith.constant 0 : i32
    %c0_i32_1 = arith.constant 0 : i32
    return %c0_i32, %c0_i32_0 : i32, i32
  }
  func.func @transform_5(%arg0: i32) -> (i32, i32) {
    %c0_i32 = arith.constant 0 : i32
    %c0_i32_0 = arith.constant 0 : i32
    %c0_i32_1 = arith.constant 0 : i32
    return %c0_i32, %c0_i32_0 : i32, i32
  }
  func.func @transform_6(%arg0: i32) -> (i32, i32) {
    %c0_i32 = arith.constant 0 : i32
    %c0_i32_0 = arith.constant 0 : i32
    %c0_i32_1 = arith.constant 0 : i32
    return %c0_i32, %c0_i32_0 : i32, i32
  }
  func.func @transform_7(%arg0: i32) -> (i32, i32) {
    %c0_i32 = arith.constant 0 : i32
    %c0_i32_0 = arith.constant 0 : i32
    %c0_i32_1 = arith.constant 0 : i32
    return %c0_i32, %c0_i32_0 : i32, i32
  }
  func.func @transform_8(%arg0: i32) -> (i32, i32) {
    %c0_i32 = arith.constant 0 : i32
    %c0_i32_0 = arith.constant 0 : i32
    %c0_i32_1 = arith.constant 0 : i32
    return %c0_i32, %c0_i32_0 : i32, i32
  }
  func.func @transform_9(%arg0: i32) -> (i32, i32) {
    %c0_i32 = arith.constant 0 : i32
    %c0_i32_0 = arith.constant 0 : i32
    %c0_i32_1 = arith.constant 0 : i32
    return %c0_i32, %c0_i32_0 : i32, i32
  }
  func.func @transform_10(%arg0: i32) -> (i32, i32) {
    %c0_i32 = arith.constant 0 : i32
    %c0_i32_0 = arith.constant 0 : i32
    %c0_i32_1 = arith.constant 0 : i32
    return %c0_i32, %c0_i32_0 : i32, i32
  }
  func.func @transform_11(%arg0: i32) -> (i32, i32) {
    %c0_i32 = arith.constant 0 : i32
    %c0_i32_0 = arith.constant 0 : i32
    %c0_i32_1 = arith.constant 0 : i32
    return %c0_i32, %c0_i32_0 : i32, i32
  }
  func.func @transform_12(%arg0: i32) -> (i32, i32) {
    %c0_i32 = arith.constant 0 : i32
    %c0_i32_0 = arith.constant 0 : i32
    %c0_i32_1 = arith.constant 0 : i32
    return %c0_i32, %c0_i32_0 : i32, i32
  }
  func.func @transform_13(%arg0: i32) -> (i32, i32) {
    %c0_i32 = arith.constant 0 : i32
    %c0_i32_0 = arith.constant 0 : i32
    %c0_i32_1 = arith.constant 0 : i32
    return %c0_i32, %c0_i32_0 : i32, i32
  }
  func.func @transform_14(%arg0: i32) -> (i32, i32) {
    %c0_i32 = arith.constant 0 : i32
    %c0_i32_0 = arith.constant 0 : i32
    return %arg0, %c0_i32 : i32, i32
  }
}

</mosaic_0001>

<llo_original>
// kernel: tpu_custom_call.1
$region0: #{tpu_custom_call.1}
  #allocation0 [shape = 'u32[]', space=smem, size = 0x4, offset = 0x4, fixed_abs, tag = 'smem constant byte address 0x4 - core index']
  #allocation1 [shape = 'u32[144,128]{1,0:T(1,128)}', space=vmem, size = 0x12000, scoped, tag = 'internal scratch']
  %s0 = inlined_call_operand.hbm [shape: f32[512,128], index: 0, kind: input, shape index: {}]
  %s1 = inlined_call_operand.hbm [shape: bf16[128,128], index: 1, kind: input, shape index: {}]
  %s2 = inlined_call_operand.vmem [shape: f32[1,128], index: 2, kind: input, shape index: {}]
  %s3 = inlined_call_operand.vmem [shape: f32[1,128], index: 3, kind: input, shape index: {}]
  %s4 = inlined_call_operand.hbm [shape: bf16[1152,128], index: 4, kind: input, shape index: {}]
  %s5 = inlined_call_operand.vmem [shape: f32[1,128], index: 5, kind: input, shape index: {}]
  %s6 = inlined_call_operand.vmem [shape: f32[1,128], index: 6, kind: input, shape index: {}]
  %s7 = inlined_call_operand.hbm [shape: bf16[128,128], index: 7, kind: input, shape index: {}]
  %s8 = inlined_call_operand.vmem [shape: f32[1,128], index: 8, kind: input, shape index: {}]
  %s9 = inlined_call_operand.vmem [shape: f32[1,128], index: 9, kind: input, shape index: {}]
  %s10 = inlined_call_operand.hbm [shape: bf16[128,128], index: 10, kind: input, shape index: {}]
  %s11 = inlined_call_operand.vmem [shape: f32[1,128], index: 11, kind: input, shape index: {}]
  %s12 = inlined_call_operand.hbm [shape: bf16[128,128], index: 12, kind: input, shape index: {}]
  %s13 = inlined_call_operand.vmem [shape: f32[1,128], index: 13, kind: input, shape index: {}]
  %s14 = inlined_call_operand.hbm [shape: f32[512,128], index: 14, kind: output, shape index: {}]
  %s15 = sld [smem:[#allocation0]]
  $region113: #{tpu_custom_call.1} parent=0
    _
  %s17 = ssub.s32 1, %s15
  %s18 = scalar_select 0, %s17, %s15
  $region1: #{tpu_custom_call.1} parent=0
    #allocation2 [shape = 'u8[262144]{0}', space=vmem, size = 0x40000, scoped, tag = 'input window, operand 0']
    #allocation3 [shape = 's32[2]{0}', space=sflag, size = 0x8, scoped, tag = 'scoped memory for tpu_custom_call.1']
    #allocation4 [shape = 's32[2]{0}', space=sflag, size = 0x8, scoped, tag = 'scoped memory for tpu_custom_call.1']
    #allocation5 [shape = 'u8[32768]{0}', space=vmem, size = 0x8000, scoped, tag = 'input window, operand 1, single buffered']
    #allocation6 [shape = 's32[1]{0}', space=sflag, size = 0x4, scoped, tag = 'scoped memory for tpu_custom_call.1']
    #allocation7 [shape = 'u8[294912]{0}', space=vmem, size = 0x48000, scoped, tag = 'input window, operand 4, single buffered']
    #allocation8 [shape = 'u8[32768]{0}', space=vmem, size = 0x8000, scoped, tag = 'input window, operand 7, single buffered']
    #allocation9 [shape = 's32[1]{0}', space=sflag, size = 0x4, scoped, tag = 'scoped memory for tpu_custom_call.1']
    #allocation10 [shape = 'u8[32768]{0}', space=vmem, size = 0x8000, scoped, tag = 'input window, operand 10, single buffered']
    #allocation11 [shape = 'u8[32768]{0}', space=vmem, size = 0x8000, scoped, tag = 'input window, operand 12, single buffered']
    #allocation12 [shape = 's32[1]{0}', space=sflag, size = 0x4, scoped, tag = 'scoped memory for tpu_custom_call.1']
    #allocation13 [shape = 'u8[262144]{0}', space=vmem, size = 0x40000, scoped, tag = 'output window, operand 0']
    %19 = vsyncpa [#allocation3], 0
    %s20 = scalar_lea.sflag [#allocation3], 1
    %21 = vsyncpa %s20, 0
    %22 = vsyncpa [#allocation6], 0
    %23 = vsyncpa [#allocation9], 0
    %24 = vsyncpa [#allocation12], 0
    %25 = vsyncpa [#allocation4], 0
    %s26 = scalar_lea.sflag [#allocation4], 1
    %27 = vsyncpa %s26, 0
    loop: start=0, step=1, limit=4
    $region2: #{tpu_custom_call.1} parent=1 // loop_pre_header
      _
    $region3: #{tpu_custom_call.1} parent=1 // loop_header
      %s29 = sphi 0, %s33
      %p30 = scmp.ge.s32.totalorder %s29, 4
      %s39 = sphi 0, %s41
      %s42 = sphi 0, %s39
      %s43 = sphi 0, %s42
      %s59 = sphi 0, %s43
      %s63 = sphi 0, %s63
      %s65 = sphi 0, %s63
      %s66 = sphi 0, %s65
      %s80 = sphi 0, %s66
      %s84 = sphi 0, %s84
      %s86 = sphi 0, %s84
      %s87 = sphi 0, %s86
      %s101 = sphi 0, %s87
      %s105 = sphi 0, %s105
      %s107 = sphi 0, %s105
      %s108 = sphi 0, %s107
      %s122 = sphi 0, %s108
      %s126 = sphi 0, %s126
      %s128 = sphi 0, %s126
      %s129 = sphi 0, %s128
      %s143 = sphi 0, %s129
      %s147 = sphi 0, %s147
      %s149 = sphi 0, %s147
      %s150 = sphi 0, %s149
      %s164 = sphi 0, %s150
      %s168 = sphi 0, %s168
      %s170 = sphi 0, %s168
      %s171 = sphi 0, %s170
      %s185 = sphi 0, %s171
      %s189 = sphi 0, %s189
      %s191 = sphi 0, %s189
      %s192 = sphi 0, %s191
      %s206 = sphi 0, %s192
      %s210 = sphi 0, %s210
      %s212 = sphi 0, %s210
      %s213 = sphi 0, %s212
      %s227 = sphi 0, %s213
      %s231 = sphi 0, %s231
      %s233 = sphi 0, %s231
      %s234 = sphi 0, %s233
      %s248 = sphi 0, %s234
      %s252 = sphi 0, %s252
      %s254 = sphi 0, %s252
      %s255 = sphi 0, %s254
      %s269 = sphi 0, %s255
      %s273 = sphi 0, %s273
      %s275 = sphi 0, %s273
      %s276 = sphi 0, %s275
      %s290 = sphi 0, %s276
      %s294 = sphi 0, %s294
      %s296 = sphi 0, %s294
      %s297 = sphi 0, %s296
      %s311 = sphi 0, %s297
      %s315 = sphi 0, %s315
      %s317 = sphi 0, %s315
      %s318 = sphi 0, %s317
      %s332 = sphi 0, %s318
      %s338 = sphi 0, %s340
      %s341 = sphi 0, %s338
      %s342 = sphi 0, %s341
      %s358 = sphi 0, %s342
    $region4: #{tpu_custom_call.1} parent=1 // loop_header_branch
      %32 = sbr.rel (%p30) target = $region8
    $region5: #{tpu_custom_call.1} parent=1 // loop_body
      %s34 = ssub.s32 %s29, 1
      %s35 = ssub.s32 %s29, 2
      %s36 = sadd.s32 %s29, 1
      %s37 = ssub.s32 %s29, %s36
      %p38 = scmp.eq.s32.totalorder %s37, 0
      %s40 = sadd.s32 %s39, 1
      %s41 = scalar_select %p38, %s39, %s40
      %p44 = pneg %p38
      %p45 = scmp.eq.s32.totalorder %s29, 1
      %p46 = por %p44, %p45
      %p47 = scmp.ne.s32.totalorder %s39, %s42
      %p48 = scmp.eq.s32.totalorder %s29, 0
      %p49 = por %p47, %p48
      %p50 = scmp.ne.s32.totalorder %s39, %s42
      %p51 = scmp.eq.s32.totalorder %s34, 1
      %p52 = por %p50, %p51
      %p53 = scmp.ne.s32.totalorder %s42, %s43
      %p54 = scmp.eq.s32.totalorder %s34, 0
      %p55 = por %p53, %p54
      %p56 = scmp.ne.s32.totalorder %s42, %s43
      %p57 = scmp.eq.s32.totalorder %s35, 1
      %p58 = por %p56, %p57
      %p60 = scmp.ne.s32.totalorder %s43, %s59
      %p61 = scmp.eq.s32.totalorder %s35, 0
      %p62 = por %p60, %p61
      %s64 = sadd.s32 %s63, 1
      %p67 = scmp.eq.s32.totalorder %s29, 1
      %p68 = scmp.ne.s32.totalorder %s63, %s65
      %p69 = scmp.eq.s32.totalorder %s29, 0
      %p70 = por %p68, %p69
      %p71 = scmp.ne.s32.totalorder %s63, %s65
      %p72 = scmp.eq.s32.totalorder %s34, 1
      %p73 = por %p71, %p72
      %p74 = scmp.ne.s32.totalorder %s65, %s66
      %p75 = scmp.eq.s32.totalorder %s34, 0
      %p76 = por %p74, %p75
      %p77 = scmp.ne.s32.totalorder %s65, %s66
      %p78 = scmp.eq.s32.totalorder %s35, 1
      %p79 = por %p77, %p78
      %p81 = scmp.ne.s32.totalorder %s66, %s80
      %p82 = scmp.eq.s32.totalorder %s35, 0
      %p83 = por %p81, %p82
      %s85 = sadd.s32 %s84, 1
      %p88 = scmp.eq.s32.totalorder %s29, 1
      %p89 = scmp.ne.s32.totalorder %s84, %s86
      %p90 = scmp.eq.s32.totalorder %s29, 0
      %p91 = por %p89, %p90
      %p92 = scmp.ne.s32.totalorder %s84, %s86
      %p93 = scmp.eq.s32.totalorder %s34, 1
      %p94 = por %p92, %p93
      %p95 = scmp.ne.s32.totalorder %s86, %s87
      %p96 = scmp.eq.s32.totalorder %s34, 0
      %p97 = por %p95, %p96
      %p98 = scmp.ne.s32.totalorder %s86, %s87
      %p99 = scmp.eq.s32.totalorder %s35, 1
      %p100 = por %p98, %p99
      %p102 = scmp.ne.s32.totalorder %s87, %s101
      %p103 = scmp.eq.s32.totalorder %s35, 0
      %p104 = por %p102, %p103
      %s106 = sadd.s32 %s105, 1
      %p109 = scmp.eq.s32.totalorder %s29, 1
      %p110 = scmp.ne.s32.totalorder %s105, %s107
      %p111 = scmp.eq.s32.totalorder %s29, 0
      %p112 = por %p110, %p111
      %p113 = scmp.ne.s32.totalorder %s105, %s107
      %p114 = scmp.eq.s32.totalorder %s34, 1
      %p115 = por %p113, %p114
      %p116 = scmp.ne.s32.totalorder %s107, %s108
      %p117 = scmp.eq.s32.totalorder %s34, 0
      %p118 = por %p116, %p117
      %p119 = scmp.ne.s32.totalorder %s107, %s108
      %p120 = scmp.eq.s32.totalorder %s35, 1
      %p121 = por %p119, %p120
      %p123 = scmp.ne.s32.totalorder %s108, %s122
      %p124 = scmp.eq.s32.totalorder %s35, 0
      %p125 = por %p123, %p124
      %s127 = sadd.s32 %s126, 1
      %p130 = scmp.eq.s32.totalorder %s29, 1
      %p131 = scmp.ne.s32.totalorder %s126, %s128
      %p132 = scmp.eq.s32.totalorder %s29, 0
      %p133 = por %p131, %p132
      %p134 = scmp.ne.s32.totalorder %s126, %s128
      %p135 = scmp.eq.s32.totalorder %s34, 1
      %p136 = por %p134, %p135
      %p137 = scmp.ne.s32.totalorder %s128, %s129
      %p138 = scmp.eq.s32.totalorder %s34, 0
      %p139 = por %p137, %p138
      %p140 = scmp.ne.s32.totalorder %s128, %s129
      %p141 = scmp.eq.s32.totalorder %s35, 1
      %p142 = por %p140, %p141
      %p144 = scmp.ne.s32.totalorder %s129, %s143
      %p145 = scmp.eq.s32.totalorder %s35, 0
      %p146 = por %p144, %p145
      %s148 = sadd.s32 %s147, 1
      %p151 = scmp.eq.s32.totalorder %s29, 1
      %p152 = scmp.ne.s32.totalorder %s147, %s149
      %p153 = scmp.eq.s32.totalorder %s29, 0
      %p154 = por %p152, %p153
      %p155 = scmp.ne.s32.totalorder %s147, %s149
      %p156 = scmp.eq.s32.totalorder %s34, 1
      %p157 = por %p155, %p156
      %p158 = scmp.ne.s32.totalorder %s149, %s150
      %p159 = scmp.eq.s32.totalorder %s34, 0
      %p160 = por %p158, %p159
      %p161 = scmp.ne.s32.totalorder %s149, %s150
      %p162 = scmp.eq.s32.totalorder %s35, 1
      %p163 = por %p161, %p162
      %p165 = scmp.ne.s32.totalorder %s150, %s164
      %p166 = scmp.eq.s32.totalorder %s35, 0
      %p167 = por %p165, %p166
      %s169 = sadd.s32 %s168, 1
      %p172 = scmp.eq.s32.totalorder %s29, 1
      %p173 = scmp.ne.s32.totalorder %s168, %s170
      %p174 = scmp.eq.s32.totalorder %s29, 0
      %p175 = por %p173, %p174
      %p176 = scmp.ne.s32.totalorder %s168, %s170
      %p177 = scmp.eq.s32.totalorder %s34, 1
      %p178 = por %p176, %p177
      %p179 = scmp.ne.s32.totalorder %s170, %s171
      %p180 = scmp.eq.s32.totalorder %s34, 0
      %p181 = por %p179, %p180
      %p182 = scmp.ne.s32.totalorder %s170, %s171
      %p183 = scmp.eq.s32.totalorder %s35, 1
      %p184 = por %p182, %p183
      %p186 = scmp.ne.s32.totalorder %s171, %s185
      %p187 = scmp.eq.s32.totalorder %s35, 0
      %p188 = por %p186, %p187
      %s190 = sadd.s32 %s189, 1
      %p193 = scmp.eq.s32.totalorder %s29, 1
      %p194 = scmp.ne.s32.totalorder %s189, %s191
      %p195 = scmp.eq.s32.totalorder %s29, 0
      %p196 = por %p194, %p195
      %p197 = scmp.ne.s32.totalorder %s189, %s191
      %p198 = scmp.eq.s32.totalorder %s34, 1
      %p199 = por %p197, %p198
      %p200 = scmp.ne.s32.totalorder %s191, %s192
      %p201 = scmp.eq.s32.totalorder %s34, 0
      %p202 = por %p200, %p201
      %p203 = scmp.ne.s32.totalorder %s191, %s192
      %p204 = scmp.eq.s32.totalorder %s35, 1
      %p205 = por %p203, %p204
      %p207 = scmp.ne.s32.totalorder %s192, %s206
      %p208 = scmp.eq.s32.totalorder %s35, 0
      %p209 = por %p207, %p208
      %s211 = sadd.s32 %s210, 1
      %p214 = scmp.eq.s32.totalorder %s29, 1
      %p215 = scmp.ne.s32.totalorder %s210, %s212
      %p216 = scmp.eq.s32.totalorder %s29, 0
      %p217 = por %p215, %p216
      %p218 = scmp.ne.s32.totalorder %s210, %s212
      %p219 = scmp.eq.s32.totalorder %s34, 1
      %p220 = por %p218, %p219
      %p221 = scmp.ne.s32.totalorder %s212, %s213
      %p222 = scmp.eq.s32.totalorder %s34, 0
      %p223 = por %p221, %p222
      %p224 = scmp.ne.s32.totalorder %s212, %s213
      %p225 = scmp.eq.s32.totalorder %s35, 1
      %p226 = por %p224, %p225
      %p228 = scmp.ne.s32.totalorder %s213, %s227
      %p229 = scmp.eq.s32.totalorder %s35, 0
      %p230 = por %p228, %p229
      %s232 = sadd.s32 %s231, 1
      %p235 = scmp.eq.s32.totalorder %s29, 1
      %p236 = scmp.ne.s32.totalorder %s231, %s233
      %p237 = scmp.eq.s32.totalorder %s29, 0
      %p238 = por %p236, %p237
      %p239 = scmp.ne.s32.totalorder %s231, %s233
      %p240 = scmp.eq.s32.totalorder %s34, 1
      %p241 = por %p239, %p240
      %p242 = scmp.ne.s32.totalorder %s233, %s234
      %p243 = scmp.eq.s32.totalorder %s34, 0
      %p244 = por %p242, %p243
      %p245 = scmp.ne.s32.totalorder %s233, %s234
      %p246 = scmp.eq.s32.totalorder %s35, 1
      %p247 = por %p245, %p246
      %p249 = scmp.ne.s32.totalorder %s234, %s248
      %p250 = scmp.eq.s32.totalorder %s35, 0
      %p251 = por %p249, %p250
      %s253 = sadd.s32 %s252, 1
      %p256 = scmp.eq.s32.totalorder %s29, 1
      %p257 = scmp.ne.s32.totalorder %s252, %s254
      %p258 = scmp.eq.s32.totalorder %s29, 0
      %p259 = por %p257, %p258
      %p260 = scmp.ne.s32.totalorder %s252, %s254
      %p261 = scmp.eq.s32.totalorder %s34, 1
      %p262 = por %p260, %p261
      %p263 = scmp.ne.s32.totalorder %s254, %s255
      %p264 = scmp.eq.s32.totalorder %s34, 0
      %p265 = por %p263, %p264
      %p266 = scmp.ne.s32.totalorder %s254, %s255
      %p267 = scmp.eq.s32.totalorder %s35, 1
      %p268 = por %p266, %p267
      %p270 = scmp.ne.s32.totalorder %s255, %s269
      %p271 = scmp.eq.s32.totalorder %s35, 0
      %p272 = por %p270, %p271
      %s274 = sadd.s32 %s273, 1
      %p277 = scmp.eq.s32.totalorder %s29, 1
      %p278 = scmp.ne.s32.totalorder %s273, %s275
      %p279 = scmp.eq.s32.totalorder %s29, 0
      %p280 = por %p278, %p279
      %p281 = scmp.ne.s32.totalorder %s273, %s275
      %p282 = scmp.eq.s32.totalorder %s34, 1
      %p283 = por %p281, %p282
      %p284 = scmp.ne.s32.totalorder %s275, %s276
      %p285 = scmp.eq.s32.totalorder %s34, 0
      %p286 = por %p284, %p285
      %p287 = scmp.ne.s32.totalorder %s275, %s276
      %p288 = scmp.eq.s32.totalorder %s35, 1
      %p289 = por %p287, %p288
      %p291 = scmp.ne.s32.totalorder %s276, %s290
      %p292 = scmp.eq.s32.totalorder %s35, 0
      %p293 = por %p291, %p292
      %s295 = sadd.s32 %s294, 1
      %p298 = scmp.eq.s32.totalorder %s29, 1
      %p299 = scmp.ne.s32.totalorder %s294, %s296
      %p300 = scmp.eq.s32.totalorder %s29, 0
      %p301 = por %p299, %p300
      %p302 = scmp.ne.s32.totalorder %s294, %s296
      %p303 = scmp.eq.s32.totalorder %s34, 1
      %p304 = por %p302, %p303
      %p305 = scmp.ne.s32.totalorder %s296, %s297
      %p306 = scmp.eq.s32.totalorder %s34, 0
      %p307 = por %p305, %p306
      %p308 = scmp.ne.s32.totalorder %s296, %s297
      %p309 = scmp.eq.s32.totalorder %s35, 1
      %p310 = por %p308, %p309
      %p312 = scmp.ne.s32.totalorder %s297, %s311
      %p313 = scmp.eq.s32.totalorder %s35, 0
      %p314 = por %p312, %p313
      %s316 = sadd.s32 %s315, 1
      %p319 = scmp.eq.s32.totalorder %s29, 1
      %p320 = scmp.ne.s32.totalorder %s315, %s317
      %p321 = scmp.eq.s32.totalorder %s29, 0
      %p322 = por %p320, %p321
      %p323 = scmp.ne.s32.totalorder %s315, %s317
      %p324 = scmp.eq.s32.totalorder %s34, 1
      %p325 = por %p323, %p324
      %p326 = scmp.ne.s32.totalorder %s317, %s318
      %p327 = scmp.eq.s32.totalorder %s34, 0
      %p328 = por %p326, %p327
      %p329 = scmp.ne.s32.totalorder %s317, %s318
      %p330 = scmp.eq.s32.totalorder %s35, 1
      %p331 = por %p329, %p330
      %p333 = scmp.ne.s32.totalorder %s318, %s332
      %p334 = scmp.eq.s32.totalorder %s35, 0
      %p335 = por %p333, %p334
      %s336 = ssub.s32 %s29, %s36
      %p337 = scmp.eq.s32.totalorder %s336, 0
      %s339 = sadd.s32 %s338, 1
      %s340 = scalar_select %p337, %s338, %s339
      %p343 = pneg %p337
      %p344 = scmp.eq.s32.totalorder %s29, 1
      %p345 = por %p343, %p344
      %p346 = scmp.ne.s32.totalorder %s338, %s341
      %p347 = scmp.eq.s32.totalorder %s29, 0
      %p348 = por %p346, %p347
      %p349 = scmp.ne.s32.totalorder %s338, %s341
      %p350 = scmp.eq.s32.totalorder %s34, 1
      %p351 = por %p349, %p350
      %p352 = scmp.ne.s32.totalorder %s341, %s342
      %p353 = scmp.eq.s32.totalorder %s34, 0
      %p354 = por %p352, %p353
      %p355 = scmp.ne.s32.totalorder %s341, %s342
      %p356 = scmp.eq.s32.totalorder %s35, 1
      %p357 = por %p355, %p356
      %p359 = scmp.ne.s32.totalorder %s342, %s358
      %p360 = scmp.eq.s32.totalorder %s35, 0
      %p361 = por %p359, %p360
      %p362 = scmp.le.s32.totalorder 1, %s29
      %p363 = scmp.lt.s32.totalorder %s29, 3
      %p364 = pnand %p362, %p363
      %p365 = pneg %p364
      // Predicated region
      $region9: #{tpu_custom_call.1} parent=5 // pred_check
        _
      $region10: #{tpu_custom_call.1} parent=5 // pred_check_branch
        %367 = sbr.rel (%p364) target = $region12
      $region11: #{tpu_custom_call.1} parent=5 // pred_region
        %s368 = ssub.s32 %s29, 1
        // Predicated region
        $region13: #{tpu_custom_call.1} parent=11 // pred_check
          %p369 = pneg %p76
        $region14: #{tpu_custom_call.1} parent=11 // pred_check_branch
          %371 = sbr.rel (%p369) target = $region16
        $region15: #{tpu_custom_call.1} parent=11 // pred_region
          %s373 = ssub.s32 1024, 1024
          %374 = vsyncadd [#allocation6], %s373
          %s375 = sshll.u32 [#allocation5], 4
          %s376 = int_to_ptr.vmem [resolvable:$true] %s375
          %381 = dma.hbm_to_vmem [thread:$0]  %s1, 1024, %s376, [#allocation6], 64, 64, 4
        $region16: #{tpu_custom_call.1} parent=11 // pred_fallthru
          _
        // Predicated region
        $region17: #{tpu_custom_call.1} parent=11 // pred_check
          %p382 = pneg %p97
        $region18: #{tpu_custom_call.1} parent=11 // pred_check_branch
          %384 = sbr.rel (%p382) target = $region20
        $region19: #{tpu_custom_call.1} parent=11 // pred_region
          _
        $region20: #{tpu_custom_call.1} parent=11 // pred_fallthru
          _
        // Predicated region
        $region21: #{tpu_custom_call.1} parent=11 // pred_check
          %p385 = pneg %p118
        $region22: #{tpu_custom_call.1} parent=11 // pred_check_branch
          %387 = sbr.rel (%p385) target = $region24
        $region23: #{tpu_custom_call.1} parent=11 // pred_region
          _
        $region24: #{tpu_custom_call.1} parent=11 // pred_fallthru
          _
        // Predicated region
        $region25: #{tpu_custom_call.1} parent=11 // pred_check
          %p388 = pneg %p139
        $region26: #{tpu_custom_call.1} parent=11 // pred_check_branch
          %390 = sbr.rel (%p388) target = $region28
        $region27: #{tpu_custom_call.1} parent=11 // pred_region
          %s392 = ssub.s32 9216, 9216
          %393 = vsyncadd [#allocation6], %s392
          %s394 = sshll.u32 [#allocation7], 4
          %s395 = int_to_ptr.vmem [resolvable:$true] %s394
          %400 = dma.hbm_to_vmem [thread:$0]  %s4, 9216, %s395, [#allocation6], 64, 64, 4
        $region28: #{tpu_custom_call.1} parent=11 // pred_fallthru
          _
        // Predicated region
        $region29: #{tpu_custom_call.1} parent=11 // pred_check
          %p401 = pneg %p160
        $region30: #{tpu_custom_call.1} parent=11 // pred_check_branch
          %403 = sbr.rel (%p401) target = $region32
        $region31: #{tpu_custom_call.1} parent=11 // pred_region
          _
        $region32: #{tpu_custom_call.1} parent=11 // pred_fallthru
          _
        // Predicated region
        $region33: #{tpu_custom_call.1} parent=11 // pred_check
          %p404 = pneg %p181
        $region34: #{tpu_custom_call.1} parent=11 // pred_check_branch
          %406 = sbr.rel (%p404) target = $region36
        $region35: #{tpu_custom_call.1} parent=11 // pred_region
          _
        $region36: #{tpu_custom_call.1} parent=11 // pred_fallthru
          _
        // Predicated region
        $region37: #{tpu_custom_call.1} parent=11 // pred_check
          %p407 = pneg %p202
        $region38: #{tpu_custom_call.1} parent=11 // pred_check_branch
          %409 = sbr.rel (%p407) target = $region40
        $region39: #{tpu_custom_call.1} parent=11 // pred_region
          %s411 = ssub.s32 1024, 1024
          %412 = vsyncadd [#allocation9], %s411
          %s413 = sshll.u32 [#allocation8], 4
          %s414 = int_to_ptr.vmem [resolvable:$true] %s413
          %419 = dma.hbm_to_vmem [thread:$0]  %s7, 1024, %s414, [#allocation9], 64, 64, 4
        $region40: #{tpu_custom_call.1} parent=11 // pred_fallthru
          _
        // Predicated region
        $region41: #{tpu_custom_call.1} parent=11 // pred_check
          %p420 = pneg %p223
        $region42: #{tpu_custom_call.1} parent=11 // pred_check_branch
          %422 = sbr.rel (%p420) target = $region44
        $region43: #{tpu_custom_call.1} parent=11 // pred_region
          _
        $region44: #{tpu_custom_call.1} parent=11 // pred_fallthru
          _
        // Predicated region
        $region45: #{tpu_custom_call.1} parent=11 // pred_check
          %p423 = pneg %p244
        $region46: #{tpu_custom_call.1} parent=11 // pred_check_branch
          %425 = sbr.rel (%p423) target = $region48
        $region47: #{tpu_custom_call.1} parent=11 // pred_region
          _
        $region48: #{tpu_custom_call.1} parent=11 // pred_fallthru
          _
        // Predicated region
        $region49: #{tpu_custom_call.1} parent=11 // pred_check
          %p426 = pneg %p265
        $region50: #{tpu_custom_call.1} parent=11 // pred_check_branch
          %428 = sbr.rel (%p426) target = $region52
        $region51: #{tpu_custom_call.1} parent=11 // pred_region
          %s430 = ssub.s32 1024, 1024
          %431 = vsyncadd [#allocation9], %s430
          %s432 = sshll.u32 [#allocation10], 4
          %s433 = int_to_ptr.vmem [resolvable:$true] %s432
          %438 = dma.hbm_to_vmem [thread:$0]  %s10, 1024, %s433, [#allocation9], 64, 64, 4
        $region52: #{tpu_custom_call.1} parent=11 // pred_fallthru
          _
        // Predicated region
        $region53: #{tpu_custom_call.1} parent=11 // pred_check
          %p439 = pneg %p286
        $region54: #{tpu_custom_call.1} parent=11 // pred_check_branch
          %441 = sbr.rel (%p439) target = $region56
        $region55: #{tpu_custom_call.1} parent=11 // pred_region
          _
        $region56: #{tpu_custom_call.1} parent=11 // pred_fallthru
          _
        // Predicated region
        $region57: #{tpu_custom_call.1} parent=11 // pred_check
          %p442 = pneg %p307
        $region58: #{tpu_custom_call.1} parent=11 // pred_check_branch
          %444 = sbr.rel (%p442) target = $region60
        $region59: #{tpu_custom_call.1} parent=11 // pred_region
          %s446 = ssub.s32 1024, 1024
          %447 = vsyncadd [#allocation12], %s446
          %s448 = sshll.u32 [#allocation11], 4
          %s449 = int_to_ptr.vmem [resolvable:$true] %s448
          %454 = dma.hbm_to_vmem [thread:$0]  %s12, 1024, %s449, [#allocation12], 64, 64, 4
        $region60: #{tpu_custom_call.1} parent=11 // pred_fallthru
          _
        // Predicated region
        $region61: #{tpu_custom_call.1} parent=11 // pred_check
          %p455 = pneg %p328
        $region62: #{tpu_custom_call.1} parent=11 // pred_check_branch
          %457 = sbr.rel (%p455) target = $region64
        $region63: #{tpu_custom_call.1} parent=11 // pred_region
          _
        $region64: #{tpu_custom_call.1} parent=11 // pred_fallthru
          _
      $region12: #{tpu_custom_call.1} parent=5 // pred_fallthru
        _
      %p458 = scmp.lt.s32.totalorder %s29, 2
      // Predicated region
      $region65: #{tpu_custom_call.1} parent=5 // pred_check
        %p459 = pneg %p458
      $region66: #{tpu_custom_call.1} parent=5 // pred_check_branch
        %461 = sbr.rel (%p459) target = $region68
      $region67: #{tpu_custom_call.1} parent=5 // pred_region
        // Predicated region
        $region69: #{tpu_custom_call.1} parent=67 // pred_check
          %p462 = pneg %p49
        $region70: #{tpu_custom_call.1} parent=67 // pred_check_branch
          %464 = sbr.rel (%p462) target = $region72
        $region71: #{tpu_custom_call.1} parent=67 // pred_region
          %s465 = sand.u32 %s39, 1
          %s466 = scalar_lea.sflag [#allocation3], %s465
          %s467 = sand.u32 %s39, 1
          %s468 = smul.addr %s467, 256
          %s469 = scalar_lea.vmem [#allocation2], %s468
          %s470 = smul.u32 32, %s29
          %s472 = ssub.s32 4096, 4096
          %473 = vsyncadd %s466, %s472
          %s474 = smul.addr %s470, 128
          %s475 = scalar_lea.hbm %s0, %s474
          %s476 = sshll.u32 %s469, 4
          %s477 = int_to_ptr.vmem [resolvable:$true] %s476
          %482 = dma.hbm_to_vmem [thread:$0]  %s475, 4096, %s477, %s466, 128, 128, 8
        $region72: #{tpu_custom_call.1} parent=67 // pred_fallthru
          _
      $region68: #{tpu_custom_call.1} parent=5 // pred_fallthru
        _
      %p483 = scmp.le.s32.totalorder 1, %s29
      %p484 = scmp.lt.s32.totalorder %s29, 3
      %p485 = pnand %p483, %p484
      %p486 = pneg %p485
      // Predicated region
      $region73: #{tpu_custom_call.1} parent=5 // pred_check
        _
      $region74: #{tpu_custom_call.1} parent=5 // pred_check_branch
        %488 = sbr.rel (%p485) target = $region76
      $region75: #{tpu_custom_call.1} parent=5 // pred_region
        %s489 = ssub.s32 %s29, 1
        %s490 = sand.u32 %s42, 1
        %s491 = scalar_lea.sflag [#allocation3], %s490
        %s492 = sand.u32 %s42, 1
        %s493 = smul.addr %s492, 256
        %s494 = scalar_lea.vmem [#allocation2], %s493
        // Predicated region
        $region77: #{tpu_custom_call.1} parent=75 // pred_check
          %p495 = pneg %p55
        $region78: #{tpu_custom_call.1} parent=75 // pred_check_branch
          %497 = sbr.rel (%p495) target = $region80
        $region79: #{tpu_custom_call.1} parent=75 // pred_region
          %498 = dma.done %s491, 4096
        $region80: #{tpu_custom_call.1} parent=75 // pred_fallthru
          _
        // Predicated region
        $region81: #{tpu_custom_call.1} parent=75 // pred_check
          %p499 = pneg %p76
        $region82: #{tpu_custom_call.1} parent=75 // pred_check_branch
          %501 = sbr.rel (%p499) target = $region84
        $region83: #{tpu_custom_call.1} parent=75 // pred_region
          %502 = dma.done [#allocation6], 1024
        $region84: #{tpu_custom_call.1} parent=75 // pred_fallthru
          _
        // Predicated region
        $region85: #{tpu_custom_call.1} parent=75 // pred_check
          %p503 = pneg %p139
        $region86: #{tpu_custom_call.1} parent=75 // pred_check_branch
          %505 = sbr.rel (%p503) target = $region88
        $region87: #{tpu_custom_call.1} parent=75 // pred_region
          %506 = dma.done [#allocation6], 9216
        $region88: #{tpu_custom_call.1} parent=75 // pred_fallthru
          _
        // Predicated region
        $region89: #{tpu_custom_call.1} parent=75 // pred_check
          %p507 = pneg %p202
        $region90: #{tpu_custom_call.1} parent=75 // pred_check_branch
          %509 = sbr.rel (%p507) target = $region92
        $region91: #{tpu_custom_call.1} parent=75 // pred_region
          %510 = dma.done [#allocation9], 1024
        $region92: #{tpu_custom_call.1} parent=75 // pred_fallthru
          _
        // Predicated region
        $region93: #{tpu_custom_call.1} parent=75 // pred_check
          %p511 = pneg %p265
        $region94: #{tpu_custom_call.1} parent=75 // pred_check_branch
          %513 = sbr.rel (%p511) target = $region96
        $region95: #{tpu_custom_call.1} parent=75 // pred_region
          %514 = dma.done [#allocation9], 1024
        $region96: #{tpu_custom_call.1} parent=75 // pred_fallthru
          _
        // Predicated region
        $region97: #{tpu_custom_call.1} parent=75 // pred_check
          %p515 = pneg %p307
        $region98: #{tpu_custom_call.1} parent=75 // pred_check_branch
          %517 = sbr.rel (%p515) target = $region100
        $region99: #{tpu_custom_call.1} parent=75 // pred_region
          %518 = dma.done [#allocation12], 1024
        $region100: #{tpu_custom_call.1} parent=75 // pred_fallthru
          _
        %s519 = sand.u32 %s42, 1
        %s520 = scalar_lea.sflag [#allocation3], %s519
        %s521 = sand.u32 %s42, 1
        %s522 = smul.addr %s521, 256
        %s523 = scalar_lea.vmem [#allocation2], %s522
        %p524 = pneg %p55
        %p525 = pneg %p52
        %p526 = pneg %p76
        %p527 = pneg %p73
        %p528 = pneg %p97
        %p529 = pneg %p94
        %p530 = pneg %p118
        %p531 = pneg %p115
        %p532 = pneg %p139
        %p533 = pneg %p136
        %p534 = pneg %p160
        %p535 = pneg %p157
        %p536 = pneg %p181
        %p537 = pneg %p178
        %p538 = pneg %p202
        %p539 = pneg %p199
        %p540 = pneg %p223
        %p541 = pneg %p220
        %p542 = pneg %p244
        %p543 = pneg %p241
        %p544 = pneg %p265
        %p545 = pneg %p262
        %p546 = pneg %p286
        %p547 = pneg %p283
        %p548 = pneg %p307
        %p549 = pneg %p304
        %p550 = pneg %p328
        %p551 = pneg %p325
        %p552 = pneg %p354
        %p553 = pneg %p351
        %s554 = sand.u32 %s341, 1
        %s555 = scalar_lea.sflag [#allocation4], %s554
        %s556 = sand.u32 %s341, 1
        %s557 = smul.addr %s556, 256
        %s558 = scalar_lea.vmem [#allocation13], %s557
        %s559 = smul.u32 32, %s34
        %s560 = smul.u32 32, %s34
        %v562 = vld [vmem:[%s494] sm:$0xff]
        %v563 = vld [vmem:[%s494 + $0x8] sm:$0xff]
        %v564 = vld [vmem:[%s494 + $0x10] sm:$0xff]
        %v565 = vld [vmem:[%s494 + $0x18] sm:$0xff]
        %v566 = vld [vmem:[%s494 + $0x20] sm:$0xff]
        %v567 = vld [vmem:[%s494 + $0x28] sm:$0xff]
        %v568 = vld [vmem:[%s494 + $0x30] sm:$0xff]
        %v569 = vld [vmem:[%s494 + $0x38] sm:$0xff]
        %v570 = vld [vmem:[%s494 + $0x40] sm:$0xff]
        %v571 = vld [vmem:[%s494 + $0x48] sm:$0xff]
        %v572 = vld [vmem:[%s494 + $0x50] sm:$0xff]
        %v573 = vld [vmem:[%s494 + $0x58] sm:$0xff]
        %v574 = vld [vmem:[%s494 + $0x60] sm:$0xff]
        %v575 = vld [vmem:[%s494 + $0x68] sm:$0xff]
        %v576 = vld [vmem:[%s494 + $0x70] sm:$0xff]
        %v577 = vld [vmem:[%s494 + $0x78] sm:$0xff]
        %v578 = vld [vmem:[%s494 + $0x80] sm:$0xff]
        %v579 = vld [vmem:[%s494 + $0x88] sm:$0xff]
        %v580 = vld [vmem:[%s494 + $0x90] sm:$0xff]
        %v581 = vld [vmem:[%s494 + $0x98] sm:$0xff]
        %v582 = vld [vmem:[%s494 + $0xa0] sm:$0xff]
        %v583 = vld [vmem:[%s494 + $0xa8] sm:$0xff]
        %v584 = vld [vmem:[%s494 + $0xb0] sm:$0xff]
        %v585 = vld [vmem:[%s494 + $0xb8] sm:$0xff]
        %v586 = vld [vmem:[%s494 + $0xc0] sm:$0xff]
        %v587 = vld [vmem:[%s494 + $0xc8] sm:$0xff]
        %v588 = vld [vmem:[%s494 + $0xd0] sm:$0xff]
        %v589 = vld [vmem:[%s494 + $0xd8] sm:$0xff]
        %v590 = vld [vmem:[%s494 + $0xe0] sm:$0xff]
        %v591 = vld [vmem:[%s494 + $0xe8] sm:$0xff]
        %v592 = vld [vmem:[%s494 + $0xf0] sm:$0xff]
        %v593 = vld [vmem:[%s494 + $0xf8] sm:$0xff]
        %v594 = vpack.c.bf16 %v563, %v562
        %v595 = vpack.c.bf16 %v565, %v564
        %v596 = vpack.c.bf16 %v567, %v566
        %v597 = vpack.c.bf16 %v569, %v568
        %v598 = vpack.c.bf16 %v571, %v570
        %v599 = vpack.c.bf16 %v573, %v572
        %v600 = vpack.c.bf16 %v575, %v574
        %v601 = vpack.c.bf16 %v577, %v576
        %v602 = vpack.c.bf16 %v579, %v578
        %v603 = vpack.c.bf16 %v581, %v580
        %v604 = vpack.c.bf16 %v583, %v582
        %v605 = vpack.c.bf16 %v585, %v584
        %v606 = vpack.c.bf16 %v587, %v586
        %v607 = vpack.c.bf16 %v589, %v588
        %v608 = vpack.c.bf16 %v591, %v590
        %v609 = vpack.c.bf16 %v593, %v592
        %v610 = vld [vmem:[#allocation5] sm:$0xf]
        %v611 = vld [vmem:[#allocation5 + $0x4] sm:$0xf]
        %v612 = vld [vmem:[#allocation5 + $0x8] sm:$0xf]
        %v613 = vld [vmem:[#allocation5 + $0xc] sm:$0xf]
        %v614 = vld [vmem:[#allocation5 + $0x10] sm:$0xf]
        %v615 = vld [vmem:[#allocation5 + $0x14] sm:$0xf]
        %v616 = vld [vmem:[#allocation5 + $0x18] sm:$0xf]
        %v617 = vld [vmem:[#allocation5 + $0x1c] sm:$0xf]
        %v618 = vld [vmem:[#allocation5 + $0x20] sm:$0xf]
        %v619 = vld [vmem:[#allocation5 + $0x24] sm:$0xf]
        %v620 = vld [vmem:[#allocation5 + $0x28] sm:$0xf]
        %v621 = vld [vmem:[#allocation5 + $0x2c] sm:$0xf]
        %v622 = vld [vmem:[#allocation5 + $0x30] sm:$0xf]
        %v623 = vld [vmem:[#allocation5 + $0x34] sm:$0xf]
        %v624 = vld [vmem:[#allocation5 + $0x38] sm:$0xf]
        %v625 = vld [vmem:[#allocation5 + $0x3c] sm:$0xf]
        %v642 = vunpack.c.l.b16 %v610
        %v643 = vunpack.c.l.b16 %v611
        %v644 = vunpack.c.l.b16 %v612
        %v645 = vunpack.c.l.b16 %v613
        %v646 = vunpack.c.l.b16 %v614
        %v647 = vunpack.c.l.b16 %v615
        %v648 = vunpack.c.l.b16 %v616
        %v649 = vunpack.c.l.b16 %v617
        %v650 = vunpack.c.l.b16 %v618
        %v651 = vunpack.c.l.b16 %v619
        %v652 = vunpack.c.l.b16 %v620
        %v653 = vunpack.c.l.b16 %v621
        %v654 = vunpack.c.l.b16 %v622
        %v655 = vunpack.c.l.b16 %v623
        %v656 = vunpack.c.l.b16 %v624
        %v657 = vunpack.c.l.b16 %v625
        %v658 = vpack.c.b16 %v643, %v642
        %v659 = vpack.c.b16 %v645, %v644
        %v660 = vpack.c.b16 %v647, %v646
        %v661 = vpack.c.b16 %v649, %v648
        %v662 = vpack.c.b16 %v651, %v650
        %v663 = vpack.c.b16 %v653, %v652
        %v664 = vpack.c.b16 %v655, %v654
        %v665 = vpack.c.b16 %v657, %v656
        %674 = vmatprep.subr.bf16.mxu0 0
        %675 = vmatpush1.bf16.msra.mxu0 %v665
        %676 = vmatprep.subr.bf16.mxu0 0
        %677 = vmatpush1.bf16.msra.mxu0 %v664
        %678 = vmatprep.subr.bf16.mxu0 0
        %679 = vmatpush1.bf16.msra.mxu0 %v663
        %680 = vmatprep.subr.bf16.mxu0 0
        %681 = vmatpush1.bf16.msra.mxu0 %v662
        %682 = vmatprep.subr.bf16.mxu0 0
        %683 = vmatpush1.bf16.msra.mxu0 %v661
        %684 = vmatprep.subr.bf16.mxu0 0
        %685 = vmatpush1.bf16.msra.mxu0 %v660
        %686 = vmatprep.subr.bf16.mxu0 0
        %687 = vmatpush1.bf16.msra.mxu0 %v659
        %688 = vmatprep.subr.bf16.mxu0 0
        %689 = vmatpush1.bf16.msra.mxu0 %v658
        %690 = vmatprep.subr.bf16.mxu0 0
        %691 = vmatpush2.bf16.msra.mxu0 0
        %692 = vmatprep.subr.bf16.mxu0 0
        %693 = vmatpush2.bf16.msra.mxu0 0
        %694 = vmatprep.subr.bf16.mxu0 0
        %695 = vmatpush2.bf16.msra.mxu0 0
        %696 = vmatprep.subr.bf16.mxu0 0
        %697 = vmatpush2.bf16.msra.mxu0 0
        %698 = vmatprep.subr.bf16.mxu0 0
        %699 = vmatpush2.bf16.msra.mxu0 0
        %700 = vmatprep.subr.bf16.mxu0 0
        %701 = vmatpush2.bf16.msra.mxu0 0
        %702 = vmatprep.subr.bf16.mxu0 0
        %703 = vmatpush2.bf16.msra.mxu0 0
        %704 = vmatprep.subr.bf16.mxu0 0
        %705 = vmatpush2.bf16.msra.mxu0 0
        %706 = vmatprep.mubr.bf16.mxu0 0
        %707 = vmatmul.mubr.bf16.gmra.mxu0 %v594
        %v708 = vpop.f32.mrf.mxu0
        %v709 = vadd.f32 0.0, %v708
        %v710 = vpop.f32.mrf.mxu0
        %v711 = vpop.f32.mrf.mxu0
        %v712 = vadd.f32 0.0, %v711
        %v713 = vpop.f32.mrf.mxu0
        %714 = vmatprep.mubr.bf16.mxu0 0
        %715 = vmatmul.mubr.bf16.gmra.mxu0 %v595
        %v716 = vpop.f32.mrf.mxu0
        %v717 = vadd.f32 0.0, %v716
        %v718 = vpop.f32.mrf.mxu0
        %v719 = vpop.f32.mrf.mxu0
        %v720 = vadd.f32 0.0, %v719
        %v721 = vpop.f32.mrf.mxu0
        %722 = vmatprep.mubr.bf16.mxu0 0
        %723 = vmatmul.mubr.bf16.gmra.mxu0 %v596
        %v724 = vpop.f32.mrf.mxu0
        %v725 = vadd.f32 0.0, %v724
        %v726 = vpop.f32.mrf.mxu0
        %v727 = vpop.f32.mrf.mxu0
        %v728 = vadd.f32 0.0, %v727
        %v729 = vpop.f32.mrf.mxu0
        %730 = vmatprep.mubr.bf16.mxu0 0
        %731 = vmatmul.mubr.bf16.gmra.mxu0 %v597
        %v732 = vpop.f32.mrf.mxu0
        %v733 = vadd.f32 0.0, %v732
        %v734 = vpop.f32.mrf.mxu0
        %v735 = vpop.f32.mrf.mxu0
        %v736 = vadd.f32 0.0, %v735
        %v737 = vpop.f32.mrf.mxu0
        %738 = vmatprep.mubr.bf16.mxu0 0
        %739 = vmatmul.mubr.bf16.gmra.mxu0 %v598
        %v740 = vpop.f32.mrf.mxu0
        %v741 = vadd.f32 0.0, %v740
        %v742 = vpop.f32.mrf.mxu0
        %v743 = vpop.f32.mrf.mxu0
        %v744 = vadd.f32 0.0, %v743
        %v745 = vpop.f32.mrf.mxu0
        %746 = vmatprep.mubr.bf16.mxu0 0
        %747 = vmatmul.mubr.bf16.gmra.mxu0 %v599
        %v748 = vpop.f32.mrf.mxu0
        %v749 = vadd.f32 0.0, %v748
        %v750 = vpop.f32.mrf.mxu0
        %v751 = vpop.f32.mrf.mxu0
        %v752 = vadd.f32 0.0, %v751
        %v753 = vpop.f32.mrf.mxu0
        %754 = vmatprep.mubr.bf16.mxu0 0
        %755 = vmatmul.mubr.bf16.gmra.mxu0 %v600
        %v756 = vpop.f32.mrf.mxu0
        %v757 = vadd.f32 0.0, %v756
        %v758 = vpop.f32.mrf.mxu0
        %v759 = vpop.f32.mrf.mxu0
        %v760 = vadd.f32 0.0, %v759
        %v761 = vpop.f32.mrf.mxu0
        %762 = vmatprep.mubr.bf16.mxu0 0
        %763 = vmatmul.mubr.bf16.gmra.mxu0 %v601
        %v764 = vpop.f32.mrf.mxu0
        %v765 = vadd.f32 0.0, %v764
        %v766 = vpop.f32.mrf.mxu0
        %v767 = vpop.f32.mrf.mxu0
        %v768 = vadd.f32 0.0, %v767
        %v769 = vpop.f32.mrf.mxu0
        %770 = vmatprep.mubr.bf16.mxu0 0
        %771 = vmatmul.mubr.bf16.gmra.mxu0 %v602
        %v772 = vpop.f32.mrf.mxu0
        %v773 = vadd.f32 0.0, %v772
        %v774 = vpop.f32.mrf.mxu0
        %v775 = vpop.f32.mrf.mxu0
        %v776 = vadd.f32 0.0, %v775
        %v777 = vpop.f32.mrf.mxu0
        %778 = vmatprep.mubr.bf16.mxu0 0
        %779 = vmatmul.mubr.bf16.gmra.mxu0 %v603
        %v780 = vpop.f32.mrf.mxu0
        %v781 = vadd.f32 0.0, %v780
        %v782 = vpop.f32.mrf.mxu0
        %v783 = vpop.f32.mrf.mxu0
        %v784 = vadd.f32 0.0, %v783
        %v785 = vpop.f32.mrf.mxu0
        %786 = vmatprep.mubr.bf16.mxu0 0
        %787 = vmatmul.mubr.bf16.gmra.mxu0 %v604
        %v788 = vpop.f32.mrf.mxu0
        %v789 = vadd.f32 0.0, %v788
        %v790 = vpop.f32.mrf.mxu0
        %v791 = vpop.f32.mrf.mxu0
        %v792 = vadd.f32 0.0, %v791
        %v793 = vpop.f32.mrf.mxu0
        %794 = vmatprep.mubr.bf16.mxu0 0
        %795 = vmatmul.mubr.bf16.gmra.mxu0 %v605
        %v796 = vpop.f32.mrf.mxu0
        %v797 = vadd.f32 0.0, %v796
        %v798 = vpop.f32.mrf.mxu0
        %v799 = vpop.f32.mrf.mxu0
        %v800 = vadd.f32 0.0, %v799
        %v801 = vpop.f32.mrf.mxu0
        %802 = vmatprep.mubr.bf16.mxu0 0
        %803 = vmatmul.mubr.bf16.gmra.mxu0 %v606
        %v804 = vpop.f32.mrf.mxu0
        %v805 = vadd.f32 0.0, %v804
        %v806 = vpop.f32.mrf.mxu0
        %v807 = vpop.f32.mrf.mxu0
        %v808 = vadd.f32 0.0, %v807
        %v809 = vpop.f32.mrf.mxu0
        %810 = vmatprep.mubr.bf16.mxu0 0
        %811 = vmatmul.mubr.bf16.gmra.mxu0 %v607
        %v812 = vpop.f32.mrf.mxu0
        %v813 = vadd.f32 0.0, %v812
        %v814 = vpop.f32.mrf.mxu0
        %v815 = vpop.f32.mrf.mxu0
        %v816 = vadd.f32 0.0, %v815
        %v817 = vpop.f32.mrf.mxu0
        %818 = vmatprep.mubr.bf16.mxu0 0
        %819 = vmatmul.mubr.bf16.gmra.mxu0 %v608
        %v820 = vpop.f32.mrf.mxu0
        %v821 = vadd.f32 0.0, %v820
        %v822 = vpop.f32.mrf.mxu0
        %v823 = vpop.f32.mrf.mxu0
        %v824 = vadd.f32 0.0, %v823
        %v825 = vpop.f32.mrf.mxu0
        %826 = vmatprep.mubr.bf16.mxu0 0
        %827 = vmatmul.mubr.bf16.gmra.mxu0 %v609
        %v828 = vpop.f32.mrf.mxu0
        %v829 = vadd.f32 0.0, %v828
        %v830 = vpop.f32.mrf.mxu0
        %v831 = vpop.f32.mrf.mxu0
        %v832 = vadd.f32 0.0, %v831
        %v833 = vpop.f32.mrf.mxu0
        %834 = vdwg.mxu0
        %v835 = vld [vmem:[%s2] sm:$0x1]
        %v837 = vlaneseq
        %v838 = vshrl.u32 %v837, 7
        %v839 = vsub.s32 0, %v838
        %v840 = vrot.slane %v835, %v839
        %v842 = vmul.f32 %v709, %v840
        %v843 = vmul.f32 %v712, %v840
        %v844 = vmul.f32 %v717, %v840
        %v845 = vmul.f32 %v720, %v840
        %v846 = vmul.f32 %v725, %v840
        %v847 = vmul.f32 %v728, %v840
        %v848 = vmul.f32 %v733, %v840
        %v849 = vmul.f32 %v736, %v840
        %v850 = vmul.f32 %v741, %v840
        %v851 = vmul.f32 %v744, %v840
        %v852 = vmul.f32 %v749, %v840
        %v853 = vmul.f32 %v752, %v840
        %v854 = vmul.f32 %v757, %v840
        %v855 = vmul.f32 %v760, %v840
        %v856 = vmul.f32 %v765, %v840
        %v857 = vmul.f32 %v768, %v840
        %v858 = vmul.f32 %v773, %v840
        %v859 = vmul.f32 %v776, %v840
        %v860 = vmul.f32 %v781, %v840
        %v861 = vmul.f32 %v784, %v840
        %v862 = vmul.f32 %v789, %v840
        %v863 = vmul.f32 %v792, %v840
        %v864 = vmul.f32 %v797, %v840
        %v865 = vmul.f32 %v800, %v840
        %v866 = vmul.f32 %v805, %v840
        %v867 = vmul.f32 %v808, %v840
        %v868 = vmul.f32 %v813, %v840
        %v869 = vmul.f32 %v816, %v840
        %v870 = vmul.f32 %v821, %v840
        %v871 = vmul.f32 %v824, %v840
        %v872 = vmul.f32 %v829, %v840
        %v873 = vmul.f32 %v832, %v840
        %v874 = vld [vmem:[%s3] sm:$0x1]
        %v876 = vlaneseq
        %v877 = vshrl.u32 %v876, 7
        %v878 = vsub.s32 0, %v877
        %v879 = vrot.slane %v874, %v878
        %v881 = vadd.f32 %v842, %v879
        %v882 = vadd.f32 %v843, %v879
        %v883 = vadd.f32 %v844, %v879
        %v884 = vadd.f32 %v845, %v879
        %v885 = vadd.f32 %v846, %v879
        %v886 = vadd.f32 %v847, %v879
        %v887 = vadd.f32 %v848, %v879
        %v888 = vadd.f32 %v849, %v879
        %v889 = vadd.f32 %v850, %v879
        %v890 = vadd.f32 %v851, %v879
        %v891 = vadd.f32 %v852, %v879
        %v892 = vadd.f32 %v853, %v879
        %v893 = vadd.f32 %v854, %v879
        %v894 = vadd.f32 %v855, %v879
        %v895 = vadd.f32 %v856, %v879
        %v896 = vadd.f32 %v857, %v879
        %v897 = vadd.f32 %v858, %v879
        %v898 = vadd.f32 %v859, %v879
        %v899 = vadd.f32 %v860, %v879
        %v900 = vadd.f32 %v861, %v879
        %v901 = vadd.f32 %v862, %v879
        %v902 = vadd.f32 %v863, %v879
        %v903 = vadd.f32 %v864, %v879
        %v904 = vadd.f32 %v865, %v879
        %v905 = vadd.f32 %v866, %v879
        %v906 = vadd.f32 %v867, %v879
        %v907 = vadd.f32 %v868, %v879
        %v908 = vadd.f32 %v869, %v879
        %v909 = vadd.f32 %v870, %v879
        %v910 = vadd.f32 %v871, %v879
        %v911 = vadd.f32 %v872, %v879
        %v912 = vadd.f32 %v873, %v879
        %v913 = vmax.f32 %v881, 0.0
        %v914 = vmax.f32 %v882, 0.0
        %v915 = vmax.f32 %v883, 0.0
        %v916 = vmax.f32 %v884, 0.0
        %v917 = vmax.f32 %v885, 0.0
        %v918 = vmax.f32 %v886, 0.0
        %v919 = vmax.f32 %v887, 0.0
        %v920 = vmax.f32 %v888, 0.0
        %v921 = vmax.f32 %v889, 0.0
        %v922 = vmax.f32 %v890, 0.0
        %v923 = vmax.f32 %v891, 0.0
        %v924 = vmax.f32 %v892, 0.0
        %v925 = vmax.f32 %v893, 0.0
        %v926 = vmax.f32 %v894, 0.0
        %v927 = vmax.f32 %v895, 0.0
        %v928 = vmax.f32 %v896, 0.0
        %v929 = vmax.f32 %v897, 0.0
        %v930 = vmax.f32 %v898, 0.0
        %v931 = vmax.f32 %v899, 0.0
        %v932 = vmax.f32 %v900, 0.0
        %v933 = vmax.f32 %v901, 0.0
        %v934 = vmax.f32 %v902, 0.0
        %v935 = vmax.f32 %v903, 0.0
        %v936 = vmax.f32 %v904, 0.0
        %v937 = vmax.f32 %v905, 0.0
        %v938 = vmax.f32 %v906, 0.0
        %v939 = vmax.f32 %v907, 0.0
        %v940 = vmax.f32 %v908, 0.0
        %v941 = vmax.f32 %v909, 0.0
        %v942 = vmax.f32 %v910, 0.0
        %v943 = vmax.f32 %v911, 0.0
        %v944 = vmax.f32 %v912, 0.0
        %v945 = vlaneseq
        %v946 = vshrl.u32 %v945, 7
        %v947 = vadd.s32 %v946, 8
        %v948 = vadd.s32 %v946, 16
        %v949 = vadd.s32 %v946, 24
        %v950 = vadd.s32 %v946, 32
        %v951 = vadd.s32 %v946, 40
        %v952 = vadd.s32 %v946, 48
        %v953 = vadd.s32 %v946, 56
        %v954 = vadd.s32 %v946, 64
        %v955 = vadd.s32 %v946, 72
        %v956 = vadd.s32 %v946, 80
        %v957 = vadd.s32 %v946, 88
        %v958 = vadd.s32 %v946, 96
        %v959 = vadd.s32 %v946, 104
        %v960 = vadd.s32 %v946, 112
        %v961 = vadd.s32 %v946, 120
        %v962 = vadd.s32 %v946, 128
        %v963 = vadd.s32 %v946, 136
        %v964 = vadd.s32 %v946, 144
        %v965 = vadd.s32 %v946, 152
        %v966 = vadd.s32 %v946, 160
        %v967 = vadd.s32 %v946, 168
        %v968 = vadd.s32 %v946, 176
        %v969 = vadd.s32 %v946, 184
        %v970 = vadd.s32 %v946, 192
        %v971 = vadd.s32 %v946, 200
        %v972 = vadd.s32 %v946, 208
        %v973 = vadd.s32 %v946, 216
        %v974 = vadd.s32 %v946, 224
        %v975 = vadd.s32 %v946, 232
        %v976 = vadd.s32 %v946, 240
        %v977 = vadd.s32 %v946, 248
        %vm978 = vcmp.lt.s32.totalorder %v946, 0
        %v979 = vsub.s32 0, %v946
        %v980 = vsel %vm978, %v979, %v946
        %v981 = vshrl.u32 %v980, 4
        %v982 = vand.u32 %v980, 15
        %v983 = vsub.s32 0, %v982
        %v984 = vsel %vm978, %v983, %v982
        %vm985 = vcmp.lt.s32.totalorder %v947, 0
        %v986 = vsub.s32 0, %v947
        %v987 = vsel %vm985, %v986, %v947
        %v988 = vshrl.u32 %v987, 4
        %v989 = vand.u32 %v987, 15
        %v990 = vsub.s32 0, %v989
        %v991 = vsel %vm985, %v990, %v989
        %vm992 = vcmp.lt.s32.totalorder %v948, 0
        %v993 = vsub.s32 0, %v948
        %v994 = vsel %vm992, %v993, %v948
        %v995 = vshrl.u32 %v994, 4
        %v996 = vand.u32 %v994, 15
        %v997 = vsub.s32 0, %v996
        %v998 = vsel %vm992, %v997, %v996
        %vm999 = vcmp.lt.s32.totalorder %v949, 0
        %v1000 = vsub.s32 0, %v949
        %v1001 = vsel %vm999, %v1000, %v949
        %v1002 = vshrl.u32 %v1001, 4
        %v1003 = vand.u32 %v1001, 15
        %v1004 = vsub.s32 0, %v1003
        %v1005 = vsel %vm999, %v1004, %v1003
        %vm1006 = vcmp.lt.s32.totalorder %v950, 0
        %v1007 = vsub.s32 0, %v950
        %v1008 = vsel %vm1006, %v1007, %v950
        %v1009 = vshrl.u32 %v1008, 4
        %v1010 = vand.u32 %v1008, 15
        %v1011 = vsub.s32 0, %v1010
        %v1012 = vsel %vm1006, %v1011, %v1010
        %vm1013 = vcmp.lt.s32.totalorder %v951, 0
        %v1014 = vsub.s32 0, %v951
        %v1015 = vsel %vm1013, %v1014, %v951
        %v1016 = vshrl.u32 %v1015, 4
        %v1017 = vand.u32 %v1015, 15
        %v1018 = vsub.s32 0, %v1017
        %v1019 = vsel %vm1013, %v1018, %v1017
        %vm1020 = vcmp.lt.s32.totalorder %v952, 0
        %v1021 = vsub.s32 0, %v952
        %v1022 = vsel %vm1020, %v1021, %v952
        %v1023 = vshrl.u32 %v1022, 4
        %v1024 = vand.u32 %v1022, 15
        %v1025 = vsub.s32 0, %v1024
        %v1026 = vsel %vm1020, %v1025, %v1024
        %vm1027 = vcmp.lt.s32.totalorder %v953, 0
        %v1028 = vsub.s32 0, %v953
        %v1029 = vsel %vm1027, %v1028, %v953
        %v1030 = vshrl.u32 %v1029, 4
        %v1031 = vand.u32 %v1029, 15
        %v1032 = vsub.s32 0, %v1031
        %v1033 = vsel %vm1027, %v1032, %v1031
        %vm1034 = vcmp.lt.s32.totalorder %v954, 0
        %v1035 = vsub.s32 0, %v954
        %v1036 = vsel %vm1034, %v1035, %v954
        %v1037 = vshrl.u32 %v1036, 4
        %v1038 = vand.u32 %v1036, 15
        %v1039 = vsub.s32 0, %v1038
        %v1040 = vsel %vm1034, %v1039, %v1038
        %vm1041 = vcmp.lt.s32.totalorder %v955, 0
        %v1042 = vsub.s32 0, %v955
        %v1043 = vsel %vm1041, %v1042, %v955
        %v1044 = vshrl.u32 %v1043, 4
        %v1045 = vand.u32 %v1043, 15
        %v1046 = vsub.s32 0, %v1045
        %v1047 = vsel %vm1041, %v1046, %v1045
        %vm1048 = vcmp.lt.s32.totalorder %v956, 0
        %v1049 = vsub.s32 0, %v956
        %v1050 = vsel %vm1048, %v1049, %v956
        %v1051 = vshrl.u32 %v1050, 4
        %v1052 = vand.u32 %v1050, 15
        %v1053 = vsub.s32 0, %v1052
        %v1054 = vsel %vm1048, %v1053, %v1052
        %vm1055 = vcmp.lt.s32.totalorder %v957, 0
        %v1056 = vsub.s32 0, %v957
        %v1057 = vsel %vm1055, %v1056, %v957
        %v1058 = vshrl.u32 %v1057, 4
        %v1059 = vand.u32 %v1057, 15
        %v1060 = vsub.s32 0, %v1059
        %v1061 = vsel %vm1055, %v1060, %v1059
        %vm1062 = vcmp.lt.s32.totalorder %v958, 0
        %v1063 = vsub.s32 0, %v958
        %v1064 = vsel %vm1062, %v1063, %v958
        %v1065 = vshrl.u32 %v1064, 4
        %v1066 = vand.u32 %v1064, 15
        %v1067 = vsub.s32 0, %v1066
        %v1068 = vsel %vm1062, %v1067, %v1066
        %vm1069 = vcmp.lt.s32.totalorder %v959, 0
        %v1070 = vsub.s32 0, %v959
        %v1071 = vsel %vm1069, %v1070, %v959
        %v1072 = vshrl.u32 %v1071, 4
        %v1073 = vand.u32 %v1071, 15
        %v1074 = vsub.s32 0, %v1073
        %v1075 = vsel %vm1069, %v1074, %v1073
        %vm1076 = vcmp.lt.s32.totalorder %v960, 0
        %v1077 = vsub.s32 0, %v960
        %v1078 = vsel %vm1076, %v1077, %v960
        %v1079 = vshrl.u32 %v1078, 4
        %v1080 = vand.u32 %v1078, 15
        %v1081 = vsub.s32 0, %v1080
        %v1082 = vsel %vm1076, %v1081, %v1080
        %vm1083 = vcmp.lt.s32.totalorder %v961, 0
        %v1084 = vsub.s32 0, %v961
        %v1085 = vsel %vm1083, %v1084, %v961
        %v1086 = vshrl.u32 %v1085, 4
        %v1087 = vand.u32 %v1085, 15
        %v1088 = vsub.s32 0, %v1087
        %v1089 = vsel %vm1083, %v1088, %v1087
        %vm1090 = vcmp.lt.s32.totalorder %v962, 0
        %v1091 = vsub.s32 0, %v962
        %v1092 = vsel %vm1090, %v1091, %v962
        %v1093 = vshrl.u32 %v1092, 4
        %v1094 = vand.u32 %v1092, 15
        %v1095 = vsub.s32 0, %v1094
        %v1096 = vsel %vm1090, %v1095, %v1094
        %vm1097 = vcmp.lt.s32.totalorder %v963, 0
        %v1098 = vsub.s32 0, %v963
        %v1099 = vsel %vm1097, %v1098, %v963
        %v1100 = vshrl.u32 %v1099, 4
        %v1101 = vand.u32 %v1099, 15
        %v1102 = vsub.s32 0, %v1101
        %v1103 = vsel %vm1097, %v1102, %v1101
        %vm1104 = vcmp.lt.s32.totalorder %v964, 0
        %v1105 = vsub.s32 0, %v964
        %v1106 = vsel %vm1104, %v1105, %v964
        %v1107 = vshrl.u32 %v1106, 4
        %v1108 = vand.u32 %v1106, 15
        %v1109 = vsub.s32 0, %v1108
        %v1110 = vsel %vm1104, %v1109, %v1108
        %vm1111 = vcmp.lt.s32.totalorder %v965, 0
        %v1112 = vsub.s32 0, %v965
        %v1113 = vsel %vm1111, %v1112, %v965
        %v1114 = vshrl.u32 %v1113, 4
        %v1115 = vand.u32 %v1113, 15
        %v1116 = vsub.s32 0, %v1115
        %v1117 = vsel %vm1111, %v1116, %v1115
        %vm1118 = vcmp.lt.s32.totalorder %v966, 0
        %v1119 = vsub.s32 0, %v966
        %v1120 = vsel %vm1118, %v1119, %v966
        %v1121 = vshrl.u32 %v1120, 4
        %v1122 = vand.u32 %v1120, 15
        %v1123 = vsub.s32 0, %v1122
        %v1124 = vsel %vm1118, %v1123, %v1122
        %vm1125 = vcmp.lt.s32.totalorder %v967, 0
        %v1126 = vsub.s32 0, %v967
        %v1127 = vsel %vm1125, %v1126, %v967
        %v1128 = vshrl.u32 %v1127, 4
        %v1129 = vand.u32 %v1127, 15
        %v1130 = vsub.s32 0, %v1129
        %v1131 = vsel %vm1125, %v1130, %v1129
        %vm1132 = vcmp.lt.s32.totalorder %v968, 0
        %v1133 = vsub.s32 0, %v968
        %v1134 = vsel %vm1132, %v1133, %v968
        %v1135 = vshrl.u32 %v1134, 4
        %v1136 = vand.u32 %v1134, 15
        %v1137 = vsub.s32 0, %v1136
        %v1138 = vsel %vm1132, %v1137, %v1136
        %vm1139 = vcmp.lt.s32.totalorder %v969, 0
        %v1140 = vsub.s32 0, %v969
        %v1141 = vsel %vm1139, %v1140, %v969
        %v1142 = vshrl.u32 %v1141, 4
        %v1143 = vand.u32 %v1141, 15
        %v1144 = vsub.s32 0, %v1143
        %v1145 = vsel %vm1139, %v1144, %v1143
        %vm1146 = vcmp.lt.s32.totalorder %v970, 0
        %v1147 = vsub.s32 0, %v970
        %v1148 = vsel %vm1146, %v1147, %v970
        %v1149 = vshrl.u32 %v1148, 4
        %v1150 = vand.u32 %v1148, 15
        %v1151 = vsub.s32 0, %v1150
        %v1152 = vsel %vm1146, %v1151, %v1150
        %vm1153 = vcmp.lt.s32.totalorder %v971, 0
        %v1154 = vsub.s32 0, %v971
        %v1155 = vsel %vm1153, %v1154, %v971
        %v1156 = vshrl.u32 %v1155, 4
        %v1157 = vand.u32 %v1155, 15
        %v1158 = vsub.s32 0, %v1157
        %v1159 = vsel %vm1153, %v1158, %v1157
        %vm1160 = vcmp.lt.s32.totalorder %v972, 0
        %v1161 = vsub.s32 0, %v972
        %v1162 = vsel %vm1160, %v1161, %v972
        %v1163 = vshrl.u32 %v1162, 4
        %v1164 = vand.u32 %v1162, 15
        %v1165 = vsub.s32 0, %v1164
        %v1166 = vsel %vm1160, %v1165, %v1164
        %vm1167 = vcmp.lt.s32.totalorder %v973, 0
        %v1168 = vsub.s32 0, %v973
        %v1169 = vsel %vm1167, %v1168, %v973
        %v1170 = vshrl.u32 %v1169, 4
        %v1171 = vand.u32 %v1169, 15
        %v1172 = vsub.s32 0, %v1171
        %v1173 = vsel %vm1167, %v1172, %v1171
        %vm1174 = vcmp.lt.s32.totalorder %v974, 0
        %v1175 = vsub.s32 0, %v974
        %v1176 = vsel %vm1174, %v1175, %v974
        %v1177 = vshrl.u32 %v1176, 4
        %v1178 = vand.u32 %v1176, 15
        %v1179 = vsub.s32 0, %v1178
        %v1180 = vsel %vm1174, %v1179, %v1178
        %vm1181 = vcmp.lt.s32.totalorder %v975, 0
        %v1182 = vsub.s32 0, %v975
        %v1183 = vsel %vm1181, %v1182, %v975
        %v1184 = vshrl.u32 %v1183, 4
        %v1185 = vand.u32 %v1183, 15
        %v1186 = vsub.s32 0, %v1185
        %v1187 = vsel %vm1181, %v1186, %v1185
        %vm1188 = vcmp.lt.s32.totalorder %v976, 0
        %v1189 = vsub.s32 0, %v976
        %v1190 = vsel %vm1188, %v1189, %v976
        %v1191 = vshrl.u32 %v1190, 4
        %v1192 = vand.u32 %v1190, 15
        %v1193 = vsub.s32 0, %v1192
        %v1194 = vsel %vm1188, %v1193, %v1192
        %vm1195 = vcmp.lt.s32.totalorder %v977, 0
        %v1196 = vsub.s32 0, %v977
        %v1197 = vsel %vm1195, %v1196, %v977
        %v1198 = vshrl.u32 %v1197, 4
        %v1199 = vand.u32 %v1197, 15
        %v1200 = vsub.s32 0, %v1199
        %v1201 = vsel %vm1195, %v1200, %v1199
        %vm1202 = vcmp.ne.s32.totalorder %v984, 0
        %vm1203 = vcmp.ne.s32.totalorder %v991, 0
        %vm1204 = vcmp.ne.s32.totalorder %v998, 0
        %vm1205 = vcmp.ne.s32.totalorder %v1005, 0
        %vm1206 = vcmp.ne.s32.totalorder %v1012, 0
        %vm1207 = vcmp.ne.s32.totalorder %v1019, 0
        %vm1208 = vcmp.ne.s32.totalorder %v1026, 0
        %vm1209 = vcmp.ne.s32.totalorder %v1033, 0
        %vm1210 = vcmp.ne.s32.totalorder %v1040, 0
        %vm1211 = vcmp.ne.s32.totalorder %v1047, 0
        %vm1212 = vcmp.ne.s32.totalorder %v1054, 0
        %vm1213 = vcmp.ne.s32.totalorder %v1061, 0
        %vm1214 = vcmp.ne.s32.totalorder %v1068, 0
        %vm1215 = vcmp.ne.s32.totalorder %v1075, 0
        %vm1216 = vcmp.ne.s32.totalorder %v1082, 0
        %vm1217 = vcmp.ne.s32.totalorder %v1089, 0
        %vm1218 = vcmp.ne.s32.totalorder %v1096, 0
        %vm1219 = vcmp.ne.s32.totalorder %v1103, 0
        %vm1220 = vcmp.ne.s32.totalorder %v1110, 0
        %vm1221 = vcmp.ne.s32.totalorder %v1117, 0
        %vm1222 = vcmp.ne.s32.totalorder %v1124, 0
        %vm1223 = vcmp.ne.s32.totalorder %v1131, 0
        %vm1224 = vcmp.ne.s32.totalorder %v1138, 0
        %vm1225 = vcmp.ne.s32.totalorder %v1145, 0
        %vm1226 = vcmp.ne.s32.totalorder %v1152, 0
        %vm1227 = vcmp.ne.s32.totalorder %v1159, 0
        %vm1228 = vcmp.ne.s32.totalorder %v1166, 0
        %vm1229 = vcmp.ne.s32.totalorder %v1173, 0
        %vm1230 = vcmp.ne.s32.totalorder %v1180, 0
        %vm1231 = vcmp.ne.s32.totalorder %v1187, 0
        %vm1232 = vcmp.ne.s32.totalorder %v1194, 0
        %vm1233 = vcmp.ne.s32.totalorder %v1201, 0
        %vm1234 = vcmp.lt.s32.totalorder %v984, 0
        %vm1235 = vcmp.lt.s32.totalorder %v991, 0
        %vm1236 = vcmp.lt.s32.totalorder %v998, 0
        %vm1237 = vcmp.lt.s32.totalorder %v1005, 0
        %vm1238 = vcmp.lt.s32.totalorder %v1012, 0
        %vm1239 = vcmp.lt.s32.totalorder %v1019, 0
        %vm1240 = vcmp.lt.s32.totalorder %v1026, 0
        %vm1241 = vcmp.lt.s32.totalorder %v1033, 0
        %vm1242 = vcmp.lt.s32.totalorder %v1040, 0
        %vm1243 = vcmp.lt.s32.totalorder %v1047, 0
        %vm1244 = vcmp.lt.s32.totalorder %v1054, 0
        %vm1245 = vcmp.lt.s32.totalorder %v1061, 0
        %vm1246 = vcmp.lt.s32.totalorder %v1068, 0
        %vm1247 = vcmp.lt.s32.totalorder %v1075, 0
        %vm1248 = vcmp.lt.s32.totalorder %v1082, 0
        %vm1249 = vcmp.lt.s32.totalorder %v1089, 0
        %vm1250 = vcmp.lt.s32.totalorder %v1096, 0
        %vm1251 = vcmp.lt.s32.totalorder %v1103, 0
        %vm1252 = vcmp.lt.s32.totalorder %v1110, 0
        %vm1253 = vcmp.lt.s32.totalorder %v1117, 0
        %vm1254 = vcmp.lt.s32.totalorder %v1124, 0
        %vm1255 = vcmp.lt.s32.totalorder %v1131, 0
        %vm1256 = vcmp.lt.s32.totalorder %v1138, 0
        %vm1257 = vcmp.lt.s32.totalorder %v1145, 0
        %vm1258 = vcmp.lt.s32.totalorder %v1152, 0
        %vm1259 = vcmp.lt.s32.totalorder %v1159, 0
        %vm1260 = vcmp.lt.s32.totalorder %v1166, 0
        %vm1261 = vcmp.lt.s32.totalorder %v1173, 0
        %vm1262 = vcmp.lt.s32.totalorder %v1180, 0
        %vm1263 = vcmp.lt.s32.totalorder %v1187, 0
        %vm1264 = vcmp.lt.s32.totalorder %v1194, 0
        %vm1265 = vcmp.lt.s32.totalorder %v1201, 0
        %vm1266 = vmand %vm1234, %vm1202
        %vm1267 = vmand %vm1235, %vm1203
        %vm1268 = vmand %vm1236, %vm1204
        %vm1269 = vmand %vm1237, %vm1205
        %vm1270 = vmand %vm1238, %vm1206
        %vm1271 = vmand %vm1239, %vm1207
        %vm1272 = vmand %vm1240, %vm1208
        %vm1273 = vmand %vm1241, %vm1209
        %vm1274 = vmand %vm1242, %vm1210
        %vm1275 = vmand %vm1243, %vm1211
        %vm1276 = vmand %vm1244, %vm1212
        %vm1277 = vmand %vm1245, %vm1213
        %vm1278 = vmand %vm1246, %vm1214
        %vm1279 = vmand %vm1247, %vm1215
        %vm1280 = vmand %vm1248, %vm1216
        %vm1281 = vmand %vm1249, %vm1217
        %vm1282 = vmand %vm1250, %vm1218
        %vm1283 = vmand %vm1251, %vm1219
        %vm1284 = vmand %vm1252, %vm1220
        %vm1285 = vmand %vm1253, %vm1221
        %vm1286 = vmand %vm1254, %vm1222
        %vm1287 = vmand %vm1255, %vm1223
        %vm1288 = vmand %vm1256, %vm1224
        %vm1289 = vmand %vm1257, %vm1225
        %vm1290 = vmand %vm1258, %vm1226
        %vm1291 = vmand %vm1259, %vm1227
        %vm1292 = vmand %vm1260, %vm1228
        %vm1293 = vmand %vm1261, %vm1229
        %vm1294 = vmand %vm1262, %vm1230
        %vm1295 = vmand %vm1263, %vm1231
        %vm1296 = vmand %vm1264, %vm1232
        %vm1297 = vmand %vm1265, %vm1233
        %v1298 = vadd.s32 %v984, 16
        %v1299 = vadd.s32 %v991, 16
        %v1300 = vadd.s32 %v998, 16
        %v1301 = vadd.s32 %v1005, 16
        %v1302 = vadd.s32 %v1012, 16
        %v1303 = vadd.s32 %v1019, 16
        %v1304 = vadd.s32 %v1026, 16
        %v1305 = vadd.s32 %v1033, 16
        %v1306 = vadd.s32 %v1040, 16
        %v1307 = vadd.s32 %v1047, 16
        %v1308 = vadd.s32 %v1054, 16
        %v1309 = vadd.s32 %v1061, 16
        %v1310 = vadd.s32 %v1068, 16
        %v1311 = vadd.s32 %v1075, 16
        %v1312 = vadd.s32 %v1082, 16
        %v1313 = vadd.s32 %v1089, 16
        %v1314 = vadd.s32 %v1096, 16
        %v1315 = vadd.s32 %v1103, 16
        %v1316 = vadd.s32 %v1110, 16
        %v1317 = vadd.s32 %v1117, 16
        %v1318 = vadd.s32 %v1124, 16
        %v1319 = vadd.s32 %v1131, 16
        %v1320 = vadd.s32 %v1138, 16
        %v1321 = vadd.s32 %v1145, 16
        %v1322 = vadd.s32 %v1152, 16
        %v1323 = vadd.s32 %v1159, 16
        %v1324 = vadd.s32 %v1166, 16
        %v1325 = vadd.s32 %v1173, 16
        %v1326 = vadd.s32 %v1180, 16
        %v1327 = vadd.s32 %v1187, 16
        %v1328 = vadd.s32 %v1194, 16
        %v1329 = vadd.s32 %v1201, 16
        %v1330 = vsel %vm1266, %v1298, %v984
        %v1331 = vsel %vm1267, %v1299, %v991
        %v1332 = vsel %vm1268, %v1300, %v998
        %v1333 = vsel %vm1269, %v1301, %v1005
        %v1334 = vsel %vm1270, %v1302, %v1012
        %v1335 = vsel %vm1271, %v1303, %v1019
        %v1336 = vsel %vm1272, %v1304, %v1026
        %v1337 = vsel %vm1273, %v1305, %v1033
        %v1338 = vsel %vm1274, %v1306, %v1040
        %v1339 = vsel %vm1275, %v1307, %v1047
        %v1340 = vsel %vm1276, %v1308, %v1054
        %v1341 = vsel %vm1277, %v1309, %v1061
        %v1342 = vsel %vm1278, %v1310, %v1068
        %v1343 = vsel %vm1279, %v1311, %v1075
        %v1344 = vsel %vm1280, %v1312, %v1082
        %v1345 = vsel %vm1281, %v1313, %v1089
        %v1346 = vsel %vm1282, %v1314, %v1096
        %v1347 = vsel %vm1283, %v1315, %v1103
        %v1348 = vsel %vm1284, %v1316, %v1110
        %v1349 = vsel %vm1285, %v1317, %v1117
        %v1350 = vsel %vm1286, %v1318, %v1124
        %v1351 = vsel %vm1287, %v1319, %v1131
        %v1352 = vsel %vm1288, %v1320, %v1138
        %v1353 = vsel %vm1289, %v1321, %v1145
        %v1354 = vsel %vm1290, %v1322, %v1152
        %v1355 = vsel %vm1291, %v1323, %v1159
        %v1356 = vsel %vm1292, %v1324, %v1166
        %v1357 = vsel %vm1293, %v1325, %v1173
        %v1358 = vsel %vm1294, %v1326, %v1180
        %v1359 = vsel %vm1295, %v1327, %v1187
        %v1360 = vsel %vm1296, %v1328, %v1194
        %v1361 = vsel %vm1297, %v1329, %v1201
        %vm1362 = vcmp.ge.s32.totalorder %v946, 16
        %vm1363 = vcmp.ge.s32.totalorder %v947, 16
        %vm1364 = vcmp.ge.s32.totalorder %v948, 16
        %vm1365 = vcmp.ge.s32.totalorder %v949, 16
        %vm1366 = vcmp.ge.s32.totalorder %v950, 16
        %vm1367 = vcmp.ge.s32.totalorder %v951, 16
        %vm1368 = vcmp.ge.s32.totalorder %v952, 16
        %vm1369 = vcmp.ge.s32.totalorder %v953, 16
        %vm1370 = vcmp.ge.s32.totalorder %v954, 16
        %vm1371 = vcmp.ge.s32.totalorder %v955, 16
        %vm1372 = vcmp.ge.s32.totalorder %v956, 16
        %vm1373 = vcmp.ge.s32.totalorder %v957, 16
        %vm1374 = vcmp.ge.s32.totalorder %v958, 16
        %vm1375 = vcmp.ge.s32.totalorder %v959, 16
        %vm1376 = vcmp.ge.s32.totalorder %v960, 16
        %vm1377 = vcmp.ge.s32.totalorder %v961, 16
        %vm1378 = vcmp.ge.s32.totalorder %v962, 16
        %vm1379 = vcmp.ge.s32.totalorder %v963, 16
        %vm1380 = vcmp.ge.s32.totalorder %v964, 16
        %vm1381 = vcmp.ge.s32.totalorder %v965, 16
        %vm1382 = vcmp.ge.s32.totalorder %v966, 16
        %vm1383 = vcmp.ge.s32.totalorder %v967, 16
        %vm1384 = vcmp.ge.s32.totalorder %v968, 16
        %vm1385 = vcmp.ge.s32.totalorder %v969, 16
        %vm1386 = vcmp.ge.s32.totalorder %v970, 16
        %vm1387 = vcmp.ge.s32.totalorder %v971, 16
        %vm1388 = vcmp.ge.s32.totalorder %v972, 16
        %vm1389 = vcmp.ge.s32.totalorder %v973, 16
        %vm1390 = vcmp.ge.s32.totalorder %v974, 16
        %vm1391 = vcmp.ge.s32.totalorder %v975, 16
        %vm1392 = vcmp.ge.s32.totalorder %v976, 16
        %vm1393 = vcmp.ge.s32.totalorder %v977, 16
        %vm1394 = vcmp.lt.s32.totalorder %v946, 240
        %vm1395 = vcmp.lt.s32.totalorder %v947, 240
        %vm1396 = vcmp.lt.s32.totalorder %v948, 240
        %vm1397 = vcmp.lt.s32.totalorder %v949, 240
        %vm1398 = vcmp.lt.s32.totalorder %v950, 240
        %vm1399 = vcmp.lt.s32.totalorder %v951, 240
        %vm1400 = vcmp.lt.s32.totalorder %v952, 240
        %vm1401 = vcmp.lt.s32.totalorder %v953, 240
        %vm1402 = vcmp.lt.s32.totalorder %v954, 240
        %vm1403 = vcmp.lt.s32.totalorder %v955, 240
        %vm1404 = vcmp.lt.s32.totalorder %v956, 240
        %vm1405 = vcmp.lt.s32.totalorder %v957, 240
        %vm1406 = vcmp.lt.s32.totalorder %v958, 240
        %vm1407 = vcmp.lt.s32.totalorder %v959, 240
        %vm1408 = vcmp.lt.s32.totalorder %v960, 240
        %vm1409 = vcmp.lt.s32.totalorder %v961, 240
        %vm1410 = vcmp.lt.s32.totalorder %v962, 240
        %vm1411 = vcmp.lt.s32.totalorder %v963, 240
        %vm1412 = vcmp.lt.s32.totalorder %v964, 240
        %vm1413 = vcmp.lt.s32.totalorder %v965, 240
        %vm1414 = vcmp.lt.s32.totalorder %v966, 240
        %vm1415 = vcmp.lt.s32.totalorder %v967, 240
        %vm1416 = vcmp.lt.s32.totalorder %v968, 240
        %vm1417 = vcmp.lt.s32.totalorder %v969, 240
        %vm1418 = vcmp.lt.s32.totalorder %v970, 240
        %vm1419 = vcmp.lt.s32.totalorder %v971, 240
        %vm1420 = vcmp.lt.s32.totalorder %v972, 240
        %vm1421 = vcmp.lt.s32.totalorder %v973, 240
        %vm1422 = vcmp.lt.s32.totalorder %v974, 240
        %vm1423 = vcmp.lt.s32.totalorder %v975, 240
        %vm1424 = vcmp.lt.s32.totalorder %v976, 240
        %vm1425 = vcmp.lt.s32.totalorder %v977, 240
        %vm1426 = vcmp.ge.s32.totalorder %v1330, 1
        %vm1427 = vcmp.ge.s32.totalorder %v1331, 1
        %vm1428 = vcmp.ge.s32.totalorder %v1332, 1
        %vm1429 = vcmp.ge.s32.totalorder %v1333, 1
        %vm1430 = vcmp.ge.s32.totalorder %v1334, 1
        %vm1431 = vcmp.ge.s32.totalorder %v1335, 1
        %vm1432 = vcmp.ge.s32.totalorder %v1336, 1
        %vm1433 = vcmp.ge.s32.totalorder %v1337, 1
        %vm1434 = vcmp.ge.s32.totalorder %v1338, 1
        %vm1435 = vcmp.ge.s32.totalorder %v1339, 1
        %vm1436 = vcmp.ge.s32.totalorder %v1340, 1
        %vm1437 = vcmp.ge.s32.totalorder %v1341, 1
        %vm1438 = vcmp.ge.s32.totalorder %v1342, 1
        %vm1439 = vcmp.ge.s32.totalorder %v1343, 1
        %vm1440 = vcmp.ge.s32.totalorder %v1344, 1
        %vm1441 = vcmp.ge.s32.totalorder %v1345, 1
        %vm1442 = vcmp.ge.s32.totalorder %v1346, 1
        %vm1443 = vcmp.ge.s32.totalorder %v1347, 1
        %vm1444 = vcmp.ge.s32.totalorder %v1348, 1
        %vm1445 = vcmp.ge.s32.totalorder %v1349, 1
        %vm1446 = vcmp.ge.s32.totalorder %v1350, 1
        %vm1447 = vcmp.ge.s32.totalorder %v1351, 1
        %vm1448 = vcmp.ge.s32.totalorder %v1352, 1
        %vm1449 = vcmp.ge.s32.totalorder %v1353, 1
        %vm1450 = vcmp.ge.s32.totalorder %v1354, 1
        %vm1451 = vcmp.ge.s32.totalorder %v1355, 1
        %vm1452 = vcmp.ge.s32.totalorder %v1356, 1
        %vm1453 = vcmp.ge.s32.totalorder %v1357, 1
        %vm1454 = vcmp.ge.s32.totalorder %v1358, 1
        %vm1455 = vcmp.ge.s32.totalorder %v1359, 1
        %vm1456 = vcmp.ge.s32.totalorder %v1360, 1
        %vm1457 = vcmp.ge.s32.totalorder %v1361, 1
        %vm1458 = vcmp.lt.s32.totalorder %v1330, 15
        %vm1459 = vcmp.lt.s32.totalorder %v1331, 15
        %vm1460 = vcmp.lt.s32.totalorder %v1332, 15
        %vm1461 = vcmp.lt.s32.totalorder %v1333, 15
        %vm1462 = vcmp.lt.s32.totalorder %v1334, 15
        %vm1463 = vcmp.lt.s32.totalorder %v1335, 15
        %vm1464 = vcmp.lt.s32.totalorder %v1336, 15
        %vm1465 = vcmp.lt.s32.totalorder %v1337, 15
        %vm1466 = vcmp.lt.s32.totalorder %v1338, 15
        %vm1467 = vcmp.lt.s32.totalorder %v1339, 15
        %vm1468 = vcmp.lt.s32.totalorder %v1340, 15
        %vm1469 = vcmp.lt.s32.totalorder %v1341, 15
        %vm1470 = vcmp.lt.s32.totalorder %v1342, 15
        %vm1471 = vcmp.lt.s32.totalorder %v1343, 15
        %vm1472 = vcmp.lt.s32.totalorder %v1344, 15
        %vm1473 = vcmp.lt.s32.totalorder %v1345, 15
        %vm1474 = vcmp.lt.s32.totalorder %v1346, 15
        %vm1475 = vcmp.lt.s32.totalorder %v1347, 15
        %vm1476 = vcmp.lt.s32.totalorder %v1348, 15
        %vm1477 = vcmp.lt.s32.totalorder %v1349, 15
        %vm1478 = vcmp.lt.s32.totalorder %v1350, 15
        %vm1479 = vcmp.lt.s32.totalorder %v1351, 15
        %vm1480 = vcmp.lt.s32.totalorder %v1352, 15
        %vm1481 = vcmp.lt.s32.totalorder %v1353, 15
        %vm1482 = vcmp.lt.s32.totalorder %v1354, 15
        %vm1483 = vcmp.lt.s32.totalorder %v1355, 15
        %vm1484 = vcmp.lt.s32.totalorder %v1356, 15
        %vm1485 = vcmp.lt.s32.totalorder %v1357, 15
        %vm1486 = vcmp.lt.s32.totalorder %v1358, 15
        %vm1487 = vcmp.lt.s32.totalorder %v1359, 15
        %vm1488 = vcmp.lt.s32.totalorder %v1360, 15
        %vm1489 = vcmp.lt.s32.totalorder %v1361, 15
        %v1490 = vrot.slane %v913, 7
        %v1491 = vrot.slane %v914, 7
        %v1492 = vrot.slane %v915, 7
        %v1493 = vrot.slane %v916, 7
        %v1494 = vrot.slane %v917, 7
        %v1495 = vrot.slane %v918, 7
        %v1496 = vrot.slane %v919, 7
        %v1497 = vrot.slane %v920, 7
        %v1498 = vrot.slane %v921, 7
        %v1499 = vrot.slane %v922, 7
        %v1500 = vrot.slane %v923, 7
        %v1501 = vrot.slane %v924, 7
        %v1502 = vrot.slane %v925, 7
        %v1503 = vrot.slane %v926, 7
        %v1504 = vrot.slane %v927, 7
        %v1505 = vrot.slane %v928, 7
        %v1506 = vrot.slane %v929, 7
        %v1507 = vrot.slane %v930, 7
        %v1508 = vrot.slane %v931, 7
        %v1509 = vrot.slane %v932, 7
        %v1510 = vrot.slane %v933, 7
        %v1511 = vrot.slane %v934, 7
        %v1512 = vrot.slane %v935, 7
        %v1513 = vrot.slane %v936, 7
        %v1514 = vrot.slane %v937, 7
        %v1515 = vrot.slane %v938, 7
        %v1516 = vrot.slane %v939, 7
        %v1517 = vrot.slane %v940, 7
        %v1518 = vrot.slane %v941, 7
        %v1519 = vrot.slane %v942, 7
        %v1520 = vrot.slane %v943, 7
        %v1521 = vrot.slane %v944, 7
        %vm1522 = vcmp.lt.s32.totalorder %v946, 1
        %v1523 = vsel %vm1522, %v1520, %v1521
        %v1524 = vsel %vm1522, %v1519, %v1520
        %v1525 = vsel %vm1522, %v1518, %v1519
        %v1526 = vsel %vm1522, %v1517, %v1518
        %v1527 = vsel %vm1522, %v1516, %v1517
        %v1528 = vsel %vm1522, %v1515, %v1516
        %v1529 = vsel %vm1522, %v1514, %v1515
        %v1530 = vsel %vm1522, %v1513, %v1514
        %v1531 = vsel %vm1522, %v1512, %v1513
        %v1532 = vsel %vm1522, %v1511, %v1512
        %v1533 = vsel %vm1522, %v1510, %v1511
        %v1534 = vsel %vm1522, %v1509, %v1510
        %v1535 = vsel %vm1522, %v1508, %v1509
        %v1536 = vsel %vm1522, %v1507, %v1508
        %v1537 = vsel %vm1522, %v1506, %v1507
        %v1538 = vsel %vm1522, %v1505, %v1506
        %v1539 = vsel %vm1522, %v1504, %v1505
        %v1540 = vsel %vm1522, %v1503, %v1504
        %v1541 = vsel %vm1522, %v1502, %v1503
        %v1542 = vsel %vm1522, %v1501, %v1502
        %v1543 = vsel %vm1522, %v1500, %v1501
        %v1544 = vsel %vm1522, %v1499, %v1500
        %v1545 = vsel %vm1522, %v1498, %v1499
        %v1546 = vsel %vm1522, %v1497, %v1498
        %v1547 = vsel %vm1522, %v1496, %v1497
        %v1548 = vsel %vm1522, %v1495, %v1496
        %v1549 = vsel %vm1522, %v1494, %v1495
        %v1550 = vsel %vm1522, %v1493, %v1494
        %v1551 = vsel %vm1522, %v1492, %v1493
        %v1552 = vsel %vm1522, %v1491, %v1492
        %v1553 = vsel %vm1522, %v1490, %v1491
        %v1554 = vsel %vm1522, %v1521, %v1490
        %vm1555 = vmand %vm1362, %vm1426
        %vm1556 = vmand %vm1363, %vm1427
        %vm1557 = vmand %vm1364, %vm1428
        %vm1558 = vmand %vm1365, %vm1429
        %vm1559 = vmand %vm1366, %vm1430
        %vm1560 = vmand %vm1367, %vm1431
        %vm1561 = vmand %vm1368, %vm1432
        %vm1562 = vmand %vm1369, %vm1433
        %vm1563 = vmand %vm1370, %vm1434
        %vm1564 = vmand %vm1371, %vm1435
        %vm1565 = vmand %vm1372, %vm1436
        %vm1566 = vmand %vm1373, %vm1437
        %vm1567 = vmand %vm1374, %vm1438
        %vm1568 = vmand %vm1375, %vm1439
        %vm1569 = vmand %vm1376, %vm1440
        %vm1570 = vmand %vm1377, %vm1441
        %vm1571 = vmand %vm1378, %vm1442
        %vm1572 = vmand %vm1379, %vm1443
        %vm1573 = vmand %vm1380, %vm1444
        %vm1574 = vmand %vm1381, %vm1445
        %vm1575 = vmand %vm1382, %vm1446
        %vm1576 = vmand %vm1383, %vm1447
        %vm1577 = vmand %vm1384, %vm1448
        %vm1578 = vmand %vm1385, %vm1449
        %vm1579 = vmand %vm1386, %vm1450
        %vm1580 = vmand %vm1387, %vm1451
        %vm1581 = vmand %vm1388, %vm1452
        %vm1582 = vmand %vm1389, %vm1453
        %vm1583 = vmand %vm1390, %vm1454
        %vm1584 = vmand %vm1391, %vm1455
        %vm1585 = vmand %vm1392, %vm1456
        %vm1586 = vmand %vm1393, %vm1457
        %v1587 = vsel %vm1555, 1, 0
        %v1588 = vsel %vm1556, 1, 0
        %v1589 = vsel %vm1557, 1, 0
        %v1590 = vsel %vm1558, 1, 0
        %v1591 = vsel %vm1559, 1, 0
        %v1592 = vsel %vm1560, 1, 0
        %v1593 = vsel %vm1561, 1, 0
        %v1594 = vsel %vm1562, 1, 0
        %v1595 = vsel %vm1563, 1, 0
        %v1596 = vsel %vm1564, 1, 0
        %v1597 = vsel %vm1565, 1, 0
        %v1598 = vsel %vm1566, 1, 0
        %v1599 = vsel %vm1567, 1, 0
        %v1600 = vsel %vm1568, 1, 0
        %v1601 = vsel %vm1569, 1, 0
        %v1602 = vsel %vm1570, 1, 0
        %v1603 = vsel %vm1571, 1, 0
        %v1604 = vsel %vm1572, 1, 0
        %v1605 = vsel %vm1573, 1, 0
        %v1606 = vsel %vm1574, 1, 0
        %v1607 = vsel %vm1575, 1, 0
        %v1608 = vsel %vm1576, 1, 0
        %v1609 = vsel %vm1577, 1, 0
        %v1610 = vsel %vm1578, 1, 0
        %v1611 = vsel %vm1579, 1, 0
        %v1612 = vsel %vm1580, 1, 0
        %v1613 = vsel %vm1581, 1, 0
        %v1614 = vsel %vm1582, 1, 0
        %v1615 = vsel %vm1583, 1, 0
        %v1616 = vsel %vm1584, 1, 0
        %v1617 = vsel %vm1585, 1, 0
        %v1618 = vsel %vm1586, 1, 0
        %v1619 = vcvt.s32.f32 %v1587
        %v1620 = vcvt.s32.f32 %v1588
        %v1621 = vcvt.s32.f32 %v1589
        %v1622 = vcvt.s32.f32 %v1590
        %v1623 = vcvt.s32.f32 %v1591
        %v1624 = vcvt.s32.f32 %v1592
        %v1625 = vcvt.s32.f32 %v1593
        %v1626 = vcvt.s32.f32 %v1594
        %v1627 = vcvt.s32.f32 %v1595
        %v1628 = vcvt.s32.f32 %v1596
        %v1629 = vcvt.s32.f32 %v1597
        %v1630 = vcvt.s32.f32 %v1598
        %v1631 = vcvt.s32.f32 %v1599
        %v1632 = vcvt.s32.f32 %v1600
        %v1633 = vcvt.s32.f32 %v1601
        %v1634 = vcvt.s32.f32 %v1602
        %v1635 = vcvt.s32.f32 %v1603
        %v1636 = vcvt.s32.f32 %v1604
        %v1637 = vcvt.s32.f32 %v1605
        %v1638 = vcvt.s32.f32 %v1606
        %v1639 = vcvt.s32.f32 %v1607
        %v1640 = vcvt.s32.f32 %v1608
        %v1641 = vcvt.s32.f32 %v1609
        %v1642 = vcvt.s32.f32 %v1610
        %v1643 = vcvt.s32.f32 %v1611
        %v1644 = vcvt.s32.f32 %v1612
        %v1645 = vcvt.s32.f32 %v1613
        %v1646 = vcvt.s32.f32 %v1614
        %v1647 = vcvt.s32.f32 %v1615
        %v1648 = vcvt.s32.f32 %v1616
        %v1649 = vcvt.s32.f32 %v1617
        %v1650 = vcvt.s32.f32 %v1618
        %v1651 = vmul.f32 %v1524, %v1619
        %v1652 = vmul.f32 %v1523, %v1620
        %v1653 = vmul.f32 %v1554, %v1621
        %v1654 = vmul.f32 %v1553, %v1622
        %v1655 = vmul.f32 %v1552, %v1623
        %v1656 = vmul.f32 %v1551, %v1624
        %v1657 = vmul.f32 %v1550, %v1625
        %v1658 = vmul.f32 %v1549, %v1626
        %v1659 = vmul.f32 %v1548, %v1627
        %v1660 = vmul.f32 %v1547, %v1628
        %v1661 = vmul.f32 %v1546, %v1629
        %v1662 = vmul.f32 %v1545, %v1630
        %v1663 = vmul.f32 %v1544, %v1631
        %v1664 = vmul.f32 %v1543, %v1632
        %v1665 = vmul.f32 %v1542, %v1633
        %v1666 = vmul.f32 %v1541, %v1634
        %v1667 = vmul.f32 %v1540, %v1635
        %v1668 = vmul.f32 %v1539, %v1636
        %v1669 = vmul.f32 %v1538, %v1637
        %v1670 = vmul.f32 %v1537, %v1638
        %v1671 = vmul.f32 %v1536, %v1639
        %v1672 = vmul.f32 %v1535, %v1640
        %v1673 = vmul.f32 %v1534, %v1641
        %v1674 = vmul.f32 %v1533, %v1642
        %v1675 = vmul.f32 %v1532, %v1643
        %v1676 = vmul.f32 %v1531, %v1644
        %v1677 = vmul.f32 %v1530, %v1645
        %v1678 = vmul.f32 %v1529, %v1646
        %v1679 = vmul.f32 %v1528, %v1647
        %v1680 = vmul.f32 %v1527, %v1648
        %v1681 = vmul.f32 %v1526, %v1649
        %v1682 = vmul.f32 %v1525, %v1650
        %v1683 = vpack.c.bf16 %v1652, %v1651
        %v1684 = vpack.c.bf16 %v1654, %v1653
        %v1685 = vpack.c.bf16 %v1656, %v1655
        %v1686 = vpack.c.bf16 %v1658, %v1657
        %v1687 = vpack.c.bf16 %v1660, %v1659
        %v1688 = vpack.c.bf16 %v1662, %v1661
        %v1689 = vpack.c.bf16 %v1664, %v1663
        %v1690 = vpack.c.bf16 %v1666, %v1665
        %v1691 = vpack.c.bf16 %v1668, %v1667
        %v1692 = vpack.c.bf16 %v1670, %v1669
        %v1693 = vpack.c.bf16 %v1672, %v1671
        %v1694 = vpack.c.bf16 %v1674, %v1673
        %v1695 = vpack.c.bf16 %v1676, %v1675
        %v1696 = vpack.c.bf16 %v1678, %v1677
        %v1697 = vpack.c.bf16 %v1680, %v1679
        %v1698 = vpack.c.bf16 %v1682, %v1681
        %v1699 = vsel %vm1362, 1, 0
        %v1700 = vsel %vm1363, 1, 0
        %v1701 = vsel %vm1364, 1, 0
        %v1702 = vsel %vm1365, 1, 0
        %v1703 = vsel %vm1366, 1, 0
        %v1704 = vsel %vm1367, 1, 0
        %v1705 = vsel %vm1368, 1, 0
        %v1706 = vsel %vm1369, 1, 0
        %v1707 = vsel %vm1370, 1, 0
        %v1708 = vsel %vm1371, 1, 0
        %v1709 = vsel %vm1372, 1, 0
        %v1710 = vsel %vm1373, 1, 0
        %v1711 = vsel %vm1374, 1, 0
        %v1712 = vsel %vm1375, 1, 0
        %v1713 = vsel %vm1376, 1, 0
        %v1714 = vsel %vm1377, 1, 0
        %v1715 = vsel %vm1378, 1, 0
        %v1716 = vsel %vm1379, 1, 0
        %v1717 = vsel %vm1380, 1, 0
        %v1718 = vsel %vm1381, 1, 0
        %v1719 = vsel %vm1382, 1, 0
        %v1720 = vsel %vm1383, 1, 0
        %v1721 = vsel %vm1384, 1, 0
        %v1722 = vsel %vm1385, 1, 0
        %v1723 = vsel %vm1386, 1, 0
        %v1724 = vsel %vm1387, 1, 0
        %v1725 = vsel %vm1388, 1, 0
        %v1726 = vsel %vm1389, 1, 0
        %v1727 = vsel %vm1390, 1, 0
        %v1728 = vsel %vm1391, 1, 0
        %v1729 = vsel %vm1392, 1, 0
        %v1730 = vsel %vm1393, 1, 0
        %v1731 = vcvt.s32.f32 %v1699
        %v1732 = vcvt.s32.f32 %v1700
        %v1733 = vcvt.s32.f32 %v1701
        %v1734 = vcvt.s32.f32 %v1702
        %v1735 = vcvt.s32.f32 %v1703
        %v1736 = vcvt.s32.f32 %v1704
        %v1737 = vcvt.s32.f32 %v1705
        %v1738 = vcvt.s32.f32 %v1706
        %v1739 = vcvt.s32.f32 %v1707
        %v1740 = vcvt.s32.f32 %v1708
        %v1741 = vcvt.s32.f32 %v1709
        %v1742 = vcvt.s32.f32 %v1710
        %v1743 = vcvt.s32.f32 %v1711
        %v1744 = vcvt.s32.f32 %v1712
        %v1745 = vcvt.s32.f32 %v1713
        %v1746 = vcvt.s32.f32 %v1714
        %v1747 = vcvt.s32.f32 %v1715
        %v1748 = vcvt.s32.f32 %v1716
        %v1749 = vcvt.s32.f32 %v1717
        %v1750 = vcvt.s32.f32 %v1718
        %v1751 = vcvt.s32.f32 %v1719
        %v1752 = vcvt.s32.f32 %v1720
        %v1753 = vcvt.s32.f32 %v1721
        %v1754 = vcvt.s32.f32 %v1722
        %v1755 = vcvt.s32.f32 %v1723
        %v1756 = vcvt.s32.f32 %v1724
        %v1757 = vcvt.s32.f32 %v1725
        %v1758 = vcvt.s32.f32 %v1726
        %v1759 = vcvt.s32.f32 %v1727
        %v1760 = vcvt.s32.f32 %v1728
        %v1761 = vcvt.s32.f32 %v1729
        %v1762 = vcvt.s32.f32 %v1730
        %v1763 = vmul.f32 %v943, %v1731
        %v1764 = vmul.f32 %v944, %v1732
        %v1765 = vmul.f32 %v913, %v1733
        %v1766 = vmul.f32 %v914, %v1734
        %v1767 = vmul.f32 %v915, %v1735
        %v1768 = vmul.f32 %v916, %v1736
        %v1769 = vmul.f32 %v917, %v1737
        %v1770 = vmul.f32 %v918, %v1738
        %v1771 = vmul.f32 %v919, %v1739
        %v1772 = vmul.f32 %v920, %v1740
        %v1773 = vmul.f32 %v921, %v1741
        %v1774 = vmul.f32 %v922, %v1742
        %v1775 = vmul.f32 %v923, %v1743
        %v1776 = vmul.f32 %v924, %v1744
        %v1777 = vmul.f32 %v925, %v1745
        %v1778 = vmul.f32 %v926, %v1746
        %v1779 = vmul.f32 %v927, %v1747
        %v1780 = vmul.f32 %v928, %v1748
        %v1781 = vmul.f32 %v929, %v1749
        %v1782 = vmul.f32 %v930, %v1750
        %v1783 = vmul.f32 %v931, %v1751
        %v1784 = vmul.f32 %v932, %v1752
        %v1785 = vmul.f32 %v933, %v1753
        %v1786 = vmul.f32 %v934, %v1754
        %v1787 = vmul.f32 %v935, %v1755
        %v1788 = vmul.f32 %v936, %v1756
        %v1789 = vmul.f32 %v937, %v1757
        %v1790 = vmul.f32 %v938, %v1758
        %v1791 = vmul.f32 %v939, %v1759
        %v1792 = vmul.f32 %v940, %v1760
        %v1793 = vmul.f32 %v941, %v1761
        %v1794 = vmul.f32 %v942, %v1762
        %v1795 = vpack.c.bf16 %v1764, %v1763
        %v1796 = vpack.c.bf16 %v1766, %v1765
        %v1797 = vpack.c.bf16 %v1768, %v1767
        %v1798 = vpack.c.bf16 %v1770, %v1769
        %v1799 = vpack.c.bf16 %v1772, %v1771
        %v1800 = vpack.c.bf16 %v1774, %v1773
        %v1801 = vpack.c.bf16 %v1776, %v1775
        %v1802 = vpack.c.bf16 %v1778, %v1777
        %v1803 = vpack.c.bf16 %v1780, %v1779
        %v1804 = vpack.c.bf16 %v1782, %v1781
        %v1805 = vpack.c.bf16 %v1784, %v1783
        %v1806 = vpack.c.bf16 %v1786, %v1785
        %v1807 = vpack.c.bf16 %v1788, %v1787
        %v1808 = vpack.c.bf16 %v1790, %v1789
        %v1809 = vpack.c.bf16 %v1792, %v1791
        %v1810 = vpack.c.bf16 %v1794, %v1793
        %v1811 = vrot.slane %v913, 1
        %v1812 = vrot.slane %v914, 1
        %v1813 = vrot.slane %v915, 1
        %v1814 = vrot.slane %v916, 1
        %v1815 = vrot.slane %v917, 1
        %v1816 = vrot.slane %v918, 1
        %v1817 = vrot.slane %v919, 1
        %v1818 = vrot.slane %v920, 1
        %v1819 = vrot.slane %v921, 1
        %v1820 = vrot.slane %v922, 1
        %v1821 = vrot.slane %v923, 1
        %v1822 = vrot.slane %v924, 1
        %v1823 = vrot.slane %v925, 1
        %v1824 = vrot.slane %v926, 1
        %v1825 = vrot.slane %v927, 1
        %v1826 = vrot.slane %v928, 1
        %v1827 = vrot.slane %v929, 1
        %v1828 = vrot.slane %v930, 1
        %v1829 = vrot.slane %v931, 1
        %v1830 = vrot.slane %v932, 1
        %v1831 = vrot.slane %v933, 1
        %v1832 = vrot.slane %v934, 1
        %v1833 = vrot.slane %v935, 1
        %v1834 = vrot.slane %v936, 1
        %v1835 = vrot.slane %v937, 1
        %v1836 = vrot.slane %v938, 1
        %v1837 = vrot.slane %v939, 1
        %v1838 = vrot.slane %v940, 1
        %v1839 = vrot.slane %v941, 1
        %v1840 = vrot.slane %v942, 1
        %v1841 = vrot.slane %v943, 1
        %v1842 = vrot.slane %v944, 1
        %vm1843 = vcmp.lt.s32.totalorder %v946, 7
        %v1844 = vsel %vm1843, %v1841, %v1842
        %v1845 = vsel %vm1843, %v1840, %v1841
        %v1846 = vsel %vm1843, %v1839, %v1840
        %v1847 = vsel %vm1843, %v1838, %v1839
        %v1848 = vsel %vm1843, %v1837, %v1838
        %v1849 = vsel %vm1843, %v1836, %v1837
        %v1850 = vsel %vm1843, %v1835, %v1836
        %v1851 = vsel %vm1843, %v1834, %v1835
        %v1852 = vsel %vm1843, %v1833, %v1834
        %v1853 = vsel %vm1843, %v1832, %v1833
        %v1854 = vsel %vm1843, %v1831, %v1832
        %v1855 = vsel %vm1843, %v1830, %v1831
        %v1856 = vsel %vm1843, %v1829, %v1830
        %v1857 = vsel %vm1843, %v1828, %v1829
        %v1858 = vsel %vm1843, %v1827, %v1828
        %v1859 = vsel %vm1843, %v1826, %v1827
        %v1860 = vsel %vm1843, %v1825, %v1826
        %v1861 = vsel %vm1843, %v1824, %v1825
        %v1862 = vsel %vm1843, %v1823, %v1824
        %v1863 = vsel %vm1843, %v1822, %v1823
        %v1864 = vsel %vm1843, %v1821, %v1822
        %v1865 = vsel %vm1843, %v1820, %v1821
        %v1866 = vsel %vm1843, %v1819, %v1820
        %v1867 = vsel %vm1843, %v1818, %v1819
        %v1868 = vsel %vm1843, %v1817, %v1818
        %v1869 = vsel %vm1843, %v1816, %v1817
        %v1870 = vsel %vm1843, %v1815, %v1816
        %v1871 = vsel %vm1843, %v1814, %v1815
        %v1872 = vsel %vm1843, %v1813, %v1814
        %v1873 = vsel %vm1843, %v1812, %v1813
        %v1874 = vsel %vm1843, %v1811, %v1812
        %v1875 = vsel %vm1843, %v1842, %v1811
        %vm1876 = vmand %vm1362, %vm1458
        %vm1877 = vmand %vm1363, %vm1459
        %vm1878 = vmand %vm1364, %vm1460
        %vm1879 = vmand %vm1365, %vm1461
        %vm1880 = vmand %vm1366, %vm1462
        %vm1881 = vmand %vm1367, %vm1463
        %vm1882 = vmand %vm1368, %vm1464
        %vm1883 = vmand %vm1369, %vm1465
        %vm1884 = vmand %vm1370, %vm1466
        %vm1885 = vmand %vm1371, %vm1467
        %vm1886 = vmand %vm1372, %vm1468
        %vm1887 = vmand %vm1373, %vm1469
        %vm1888 = vmand %vm1374, %vm1470
        %vm1889 = vmand %vm1375, %vm1471
        %vm1890 = vmand %vm1376, %vm1472
        %vm1891 = vmand %vm1377, %vm1473
        %vm1892 = vmand %vm1378, %vm1474
        %vm1893 = vmand %vm1379, %vm1475
        %vm1894 = vmand %vm1380, %vm1476
        %vm1895 = vmand %vm1381, %vm1477
        %vm1896 = vmand %vm1382, %vm1478
        %vm1897 = vmand %vm1383, %vm1479
        %vm1898 = vmand %vm1384, %vm1480
        %vm1899 = vmand %vm1385, %vm1481
        %vm1900 = vmand %vm1386, %vm1482
        %vm1901 = vmand %vm1387, %vm1483
        %vm1902 = vmand %vm1388, %vm1484
        %vm1903 = vmand %vm1389, %vm1485
        %vm1904 = vmand %vm1390, %vm1486
        %vm1905 = vmand %vm1391, %vm1487
        %vm1906 = vmand %vm1392, %vm1488
        %vm1907 = vmand %vm1393, %vm1489
        %v1908 = vsel %vm1876, 1, 0
        %v1909 = vsel %vm1877, 1, 0
        %v1910 = vsel %vm1878, 1, 0
        %v1911 = vsel %vm1879, 1, 0
        %v1912 = vsel %vm1880, 1, 0
        %v1913 = vsel %vm1881, 1, 0
        %v1914 = vsel %vm1882, 1, 0
        %v1915 = vsel %vm1883, 1, 0
        %v1916 = vsel %vm1884, 1, 0
        %v1917 = vsel %vm1885, 1, 0
        %v1918 = vsel %vm1886, 1, 0
        %v1919 = vsel %vm1887, 1, 0
        %v1920 = vsel %vm1888, 1, 0
        %v1921 = vsel %vm1889, 1, 0
        %v1922 = vsel %vm1890, 1, 0
        %v1923 = vsel %vm1891, 1, 0
        %v1924 = vsel %vm1892, 1, 0
        %v1925 = vsel %vm1893, 1, 0
        %v1926 = vsel %vm1894, 1, 0
        %v1927 = vsel %vm1895, 1, 0
        %v1928 = vsel %vm1896, 1, 0
        %v1929 = vsel %vm1897, 1, 0
        %v1930 = vsel %vm1898, 1, 0
        %v1931 = vsel %vm1899, 1, 0
        %v1932 = vsel %vm1900, 1, 0
        %v1933 = vsel %vm1901, 1, 0
        %v1934 = vsel %vm1902, 1, 0
        %v1935 = vsel %vm1903, 1, 0
        %v1936 = vsel %vm1904, 1, 0
        %v1937 = vsel %vm1905, 1, 0
        %v1938 = vsel %vm1906, 1, 0
        %v1939 = vsel %vm1907, 1, 0
        %v1940 = vcvt.s32.f32 %v1908
        %v1941 = vcvt.s32.f32 %v1909
        %v1942 = vcvt.s32.f32 %v1910
        %v1943 = vcvt.s32.f32 %v1911
        %v1944 = vcvt.s32.f32 %v1912
        %v1945 = vcvt.s32.f32 %v1913
        %v1946 = vcvt.s32.f32 %v1914
        %v1947 = vcvt.s32.f32 %v1915
        %v1948 = vcvt.s32.f32 %v1916
        %v1949 = vcvt.s32.f32 %v1917
        %v1950 = vcvt.s32.f32 %v1918
        %v1951 = vcvt.s32.f32 %v1919
        %v1952 = vcvt.s32.f32 %v1920
        %v1953 = vcvt.s32.f32 %v1921
        %v1954 = vcvt.s32.f32 %v1922
        %v1955 = vcvt.s32.f32 %v1923
        %v1956 = vcvt.s32.f32 %v1924
        %v1957 = vcvt.s32.f32 %v1925
        %v1958 = vcvt.s32.f32 %v1926
        %v1959 = vcvt.s32.f32 %v1927
        %v1960 = vcvt.s32.f32 %v1928
        %v1961 = vcvt.s32.f32 %v1929
        %v1962 = vcvt.s32.f32 %v1930
        %v1963 = vcvt.s32.f32 %v1931
        %v1964 = vcvt.s32.f32 %v1932
        %v1965 = vcvt.s32.f32 %v1933
        %v1966 = vcvt.s32.f32 %v1934
        %v1967 = vcvt.s32.f32 %v1935
        %v1968 = vcvt.s32.f32 %v1936
        %v1969 = vcvt.s32.f32 %v1937
        %v1970 = vcvt.s32.f32 %v1938
        %v1971 = vcvt.s32.f32 %v1939
        %v1972 = vmul.f32 %v1844, %v1940
        %v1973 = vmul.f32 %v1875, %v1941
        %v1974 = vmul.f32 %v1874, %v1942
        %v1975 = vmul.f32 %v1873, %v1943
        %v1976 = vmul.f32 %v1872, %v1944
        %v1977 = vmul.f32 %v1871, %v1945
        %v1978 = vmul.f32 %v1870, %v1946
        %v1979 = vmul.f32 %v1869, %v1947
        %v1980 = vmul.f32 %v1868, %v1948
        %v1981 = vmul.f32 %v1867, %v1949
        %v1982 = vmul.f32 %v1866, %v1950
        %v1983 = vmul.f32 %v1865, %v1951
        %v1984 = vmul.f32 %v1864, %v1952
        %v1985 = vmul.f32 %v1863, %v1953
        %v1986 = vmul.f32 %v1862, %v1954
        %v1987 = vmul.f32 %v1861, %v1955
        %v1988 = vmul.f32 %v1860, %v1956
        %v1989 = vmul.f32 %v1859, %v1957
        %v1990 = vmul.f32 %v1858, %v1958
        %v1991 = vmul.f32 %v1857, %v1959
        %v1992 = vmul.f32 %v1856, %v1960
        %v1993 = vmul.f32 %v1855, %v1961
        %v1994 = vmul.f32 %v1854, %v1962
        %v1995 = vmul.f32 %v1853, %v1963
        %v1996 = vmul.f32 %v1852, %v1964
        %v1997 = vmul.f32 %v1851, %v1965
        %v1998 = vmul.f32 %v1850, %v1966
        %v1999 = vmul.f32 %v1849, %v1967
        %v2000 = vmul.f32 %v1848, %v1968
        %v2001 = vmul.f32 %v1847, %v1969
        %v2002 = vmul.f32 %v1846, %v1970
        %v2003 = vmul.f32 %v1845, %v1971
        %v2004 = vpack.c.bf16 %v1973, %v1972
        %v2005 = vpack.c.bf16 %v1975, %v1974
        %v2006 = vpack.c.bf16 %v1977, %v1976
        %v2007 = vpack.c.bf16 %v1979, %v1978
        %v2008 = vpack.c.bf16 %v1981, %v1980
        %v2009 = vpack.c.bf16 %v1983, %v1982
        %v2010 = vpack.c.bf16 %v1985, %v1984
        %v2011 = vpack.c.bf16 %v1987, %v1986
        %v2012 = vpack.c.bf16 %v1989, %v1988
        %v2013 = vpack.c.bf16 %v1991, %v1990
        %v2014 = vpack.c.bf16 %v1993, %v1992
        %v2015 = vpack.c.bf16 %v1995, %v1994
        %v2016 = vpack.c.bf16 %v1997, %v1996
        %v2017 = vpack.c.bf16 %v1999, %v1998
        %v2018 = vpack.c.bf16 %v2001, %v2000
        %v2019 = vpack.c.bf16 %v2003, %v2002
        %v2020 = vsel %vm1426, 1, 0
        %v2021 = vsel %vm1427, 1, 0
        %v2022 = vsel %vm1428, 1, 0
        %v2023 = vsel %vm1429, 1, 0
        %v2024 = vsel %vm1430, 1, 0
        %v2025 = vsel %vm1431, 1, 0
        %v2026 = vsel %vm1432, 1, 0
        %v2027 = vsel %vm1433, 1, 0
        %v2028 = vsel %vm1434, 1, 0
        %v2029 = vsel %vm1435, 1, 0
        %v2030 = vsel %vm1436, 1, 0
        %v2031 = vsel %vm1437, 1, 0
        %v2032 = vsel %vm1438, 1, 0
        %v2033 = vsel %vm1439, 1, 0
        %v2034 = vsel %vm1440, 1, 0
        %v2035 = vsel %vm1441, 1, 0
        %v2036 = vsel %vm1442, 1, 0
        %v2037 = vsel %vm1443, 1, 0
        %v2038 = vsel %vm1444, 1, 0
        %v2039 = vsel %vm1445, 1, 0
        %v2040 = vsel %vm1446, 1, 0
        %v2041 = vsel %vm1447, 1, 0
        %v2042 = vsel %vm1448, 1, 0
        %v2043 = vsel %vm1449, 1, 0
        %v2044 = vsel %vm1450, 1, 0
        %v2045 = vsel %vm1451, 1, 0
        %v2046 = vsel %vm1452, 1, 0
        %v2047 = vsel %vm1453, 1, 0
        %v2048 = vsel %vm1454, 1, 0
        %v2049 = vsel %vm1455, 1, 0
        %v2050 = vsel %vm1456, 1, 0
        %v2051 = vsel %vm1457, 1, 0
        %v2052 = vcvt.s32.f32 %v2020
        %v2053 = vcvt.s32.f32 %v2021
        %v2054 = vcvt.s32.f32 %v2022
        %v2055 = vcvt.s32.f32 %v2023
        %v2056 = vcvt.s32.f32 %v2024
        %v2057 = vcvt.s32.f32 %v2025
        %v2058 = vcvt.s32.f32 %v2026
        %v2059 = vcvt.s32.f32 %v2027
        %v2060 = vcvt.s32.f32 %v2028
        %v2061 = vcvt.s32.f32 %v2029
        %v2062 = vcvt.s32.f32 %v2030
        %v2063 = vcvt.s32.f32 %v2031
        %v2064 = vcvt.s32.f32 %v2032
        %v2065 = vcvt.s32.f32 %v2033
        %v2066 = vcvt.s32.f32 %v2034
        %v2067 = vcvt.s32.f32 %v2035
        %v2068 = vcvt.s32.f32 %v2036
        %v2069 = vcvt.s32.f32 %v2037
        %v2070 = vcvt.s32.f32 %v2038
        %v2071 = vcvt.s32.f32 %v2039
        %v2072 = vcvt.s32.f32 %v2040
        %v2073 = vcvt.s32.f32 %v2041
        %v2074 = vcvt.s32.f32 %v2042
        %v2075 = vcvt.s32.f32 %v2043
        %v2076 = vcvt.s32.f32 %v2044
        %v2077 = vcvt.s32.f32 %v2045
        %v2078 = vcvt.s32.f32 %v2046
        %v2079 = vcvt.s32.f32 %v2047
        %v2080 = vcvt.s32.f32 %v2048
        %v2081 = vcvt.s32.f32 %v2049
        %v2082 = vcvt.s32.f32 %v2050
        %v2083 = vcvt.s32.f32 %v2051
        %v2084 = vmul.f32 %v1554, %v2052
        %v2085 = vmul.f32 %v1553, %v2053
        %v2086 = vmul.f32 %v1552, %v2054
        %v2087 = vmul.f32 %v1551, %v2055
        %v2088 = vmul.f32 %v1550, %v2056
        %v2089 = vmul.f32 %v1549, %v2057
        %v2090 = vmul.f32 %v1548, %v2058
        %v2091 = vmul.f32 %v1547, %v2059
        %v2092 = vmul.f32 %v1546, %v2060
        %v2093 = vmul.f32 %v1545, %v2061
        %v2094 = vmul.f32 %v1544, %v2062
        %v2095 = vmul.f32 %v1543, %v2063
        %v2096 = vmul.f32 %v1542, %v2064
        %v2097 = vmul.f32 %v1541, %v2065
        %v2098 = vmul.f32 %v1540, %v2066
        %v2099 = vmul.f32 %v1539, %v2067
        %v2100 = vmul.f32 %v1538, %v2068
        %v2101 = vmul.f32 %v1537, %v2069
        %v2102 = vmul.f32 %v1536, %v2070
        %v2103 = vmul.f32 %v1535, %v2071
        %v2104 = vmul.f32 %v1534, %v2072
        %v2105 = vmul.f32 %v1533, %v2073
        %v2106 = vmul.f32 %v1532, %v2074
        %v2107 = vmul.f32 %v1531, %v2075
        %v2108 = vmul.f32 %v1530, %v2076
        %v2109 = vmul.f32 %v1529, %v2077
        %v2110 = vmul.f32 %v1528, %v2078
        %v2111 = vmul.f32 %v1527, %v2079
        %v2112 = vmul.f32 %v1526, %v2080
        %v2113 = vmul.f32 %v1525, %v2081
        %v2114 = vmul.f32 %v1524, %v2082
        %v2115 = vmul.f32 %v1523, %v2083
        %v2116 = vpack.c.bf16 %v2085, %v2084
        %v2117 = vpack.c.bf16 %v2087, %v2086
        %v2118 = vpack.c.bf16 %v2089, %v2088
        %v2119 = vpack.c.bf16 %v2091, %v2090
        %v2120 = vpack.c.bf16 %v2093, %v2092
        %v2121 = vpack.c.bf16 %v2095, %v2094
        %v2122 = vpack.c.bf16 %v2097, %v2096
        %v2123 = vpack.c.bf16 %v2099, %v2098
        %v2124 = vpack.c.bf16 %v2101, %v2100
        %v2125 = vpack.c.bf16 %v2103, %v2102
        %v2126 = vpack.c.bf16 %v2105, %v2104
        %v2127 = vpack.c.bf16 %v2107, %v2106
        %v2128 = vpack.c.bf16 %v2109, %v2108
        %v2129 = vpack.c.bf16 %v2111, %v2110
        %v2130 = vpack.c.bf16 %v2113, %v2112
        %v2131 = vpack.c.bf16 %v2115, %v2114
        %v2132 = vpack.c.bf16 %v914, %v913
        %v2133 = vpack.c.bf16 %v916, %v915
        %v2134 = vpack.c.bf16 %v918, %v917
        %v2135 = vpack.c.bf16 %v920, %v919
        %v2136 = vpack.c.bf16 %v922, %v921
        %v2137 = vpack.c.bf16 %v924, %v923
        %v2138 = vpack.c.bf16 %v926, %v925
        %v2139 = vpack.c.bf16 %v928, %v927
        %v2140 = vpack.c.bf16 %v930, %v929
        %v2141 = vpack.c.bf16 %v932, %v931
        %v2142 = vpack.c.bf16 %v934, %v933
        %v2143 = vpack.c.bf16 %v936, %v935
        %v2144 = vpack.c.bf16 %v938, %v937
        %v2145 = vpack.c.bf16 %v940, %v939
        %v2146 = vpack.c.bf16 %v942, %v941
        %v2147 = vpack.c.bf16 %v944, %v943
        %v2148 = vsel %vm1458, 1, 0
        %v2149 = vsel %vm1459, 1, 0
        %v2150 = vsel %vm1460, 1, 0
        %v2151 = vsel %vm1461, 1, 0
        %v2152 = vsel %vm1462, 1, 0
        %v2153 = vsel %vm1463, 1, 0
        %v2154 = vsel %vm1464, 1, 0
        %v2155 = vsel %vm1465, 1, 0
        %v2156 = vsel %vm1466, 1, 0
        %v2157 = vsel %vm1467, 1, 0
        %v2158 = vsel %vm1468, 1, 0
        %v2159 = vsel %vm1469, 1, 0
        %v2160 = vsel %vm1470, 1, 0
        %v2161 = vsel %vm1471, 1, 0
        %v2162 = vsel %vm1472, 1, 0
        %v2163 = vsel %vm1473, 1, 0
        %v2164 = vsel %vm1474, 1, 0
        %v2165 = vsel %vm1475, 1, 0
        %v2166 = vsel %vm1476, 1, 0
        %v2167 = vsel %vm1477, 1, 0
        %v2168 = vsel %vm1478, 1, 0
        %v2169 = vsel %vm1479, 1, 0
        %v2170 = vsel %vm1480, 1, 0
        %v2171 = vsel %vm1481, 1, 0
        %v2172 = vsel %vm1482, 1, 0
        %v2173 = vsel %vm1483, 1, 0
        %v2174 = vsel %vm1484, 1, 0
        %v2175 = vsel %vm1485, 1, 0
        %v2176 = vsel %vm1486, 1, 0
        %v2177 = vsel %vm1487, 1, 0
        %v2178 = vsel %vm1488, 1, 0
        %v2179 = vsel %vm1489, 1, 0
        %v2180 = vcvt.s32.f32 %v2148
        %v2181 = vcvt.s32.f32 %v2149
        %v2182 = vcvt.s32.f32 %v2150
        %v2183 = vcvt.s32.f32 %v2151
        %v2184 = vcvt.s32.f32 %v2152
        %v2185 = vcvt.s32.f32 %v2153
        %v2186 = vcvt.s32.f32 %v2154
        %v2187 = vcvt.s32.f32 %v2155
        %v2188 = vcvt.s32.f32 %v2156
        %v2189 = vcvt.s32.f32 %v2157
        %v2190 = vcvt.s32.f32 %v2158
        %v2191 = vcvt.s32.f32 %v2159
        %v2192 = vcvt.s32.f32 %v2160
        %v2193 = vcvt.s32.f32 %v2161
        %v2194 = vcvt.s32.f32 %v2162
        %v2195 = vcvt.s32.f32 %v2163
        %v2196 = vcvt.s32.f32 %v2164
        %v2197 = vcvt.s32.f32 %v2165
        %v2198 = vcvt.s32.f32 %v2166
        %v2199 = vcvt.s32.f32 %v2167
        %v2200 = vcvt.s32.f32 %v2168
        %v2201 = vcvt.s32.f32 %v2169
        %v2202 = vcvt.s32.f32 %v2170
        %v2203 = vcvt.s32.f32 %v2171
        %v2204 = vcvt.s32.f32 %v2172
        %v2205 = vcvt.s32.f32 %v2173
        %v2206 = vcvt.s32.f32 %v2174
        %v2207 = vcvt.s32.f32 %v2175
        %v2208 = vcvt.s32.f32 %v2176
        %v2209 = vcvt.s32.f32 %v2177
        %v2210 = vcvt.s32.f32 %v2178
        %v2211 = vcvt.s32.f32 %v2179
        %v2212 = vmul.f32 %v1874, %v2180
        %v2213 = vmul.f32 %v1873, %v2181
        %v2214 = vmul.f32 %v1872, %v2182
        %v2215 = vmul.f32 %v1871, %v2183
        %v2216 = vmul.f32 %v1870, %v2184
        %v2217 = vmul.f32 %v1869, %v2185
        %v2218 = vmul.f32 %v1868, %v2186
        %v2219 = vmul.f32 %v1867, %v2187
        %v2220 = vmul.f32 %v1866, %v2188
        %v2221 = vmul.f32 %v1865, %v2189
        %v2222 = vmul.f32 %v1864, %v2190
        %v2223 = vmul.f32 %v1863, %v2191
        %v2224 = vmul.f32 %v1862, %v2192
        %v2225 = vmul.f32 %v1861, %v2193
        %v2226 = vmul.f32 %v1860, %v2194
        %v2227 = vmul.f32 %v1859, %v2195
        %v2228 = vmul.f32 %v1858, %v2196
        %v2229 = vmul.f32 %v1857, %v2197
        %v2230 = vmul.f32 %v1856, %v2198
        %v2231 = vmul.f32 %v1855, %v2199
        %v2232 = vmul.f32 %v1854, %v2200
        %v2233 = vmul.f32 %v1853, %v2201
        %v2234 = vmul.f32 %v1852, %v2202
        %v2235 = vmul.f32 %v1851, %v2203
        %v2236 = vmul.f32 %v1850, %v2204
        %v2237 = vmul.f32 %v1849, %v2205
        %v2238 = vmul.f32 %v1848, %v2206
        %v2239 = vmul.f32 %v1847, %v2207
        %v2240 = vmul.f32 %v1846, %v2208
        %v2241 = vmul.f32 %v1845, %v2209
        %v2242 = vmul.f32 %v1844, %v2210
        %v2243 = vmul.f32 %v1875, %v2211
        %v2244 = vpack.c.bf16 %v2213, %v2212
        %v2245 = vpack.c.bf16 %v2215, %v2214
        %v2246 = vpack.c.bf16 %v2217, %v2216
        %v2247 = vpack.c.bf16 %v2219, %v2218
        %v2248 = vpack.c.bf16 %v2221, %v2220
        %v2249 = vpack.c.bf16 %v2223, %v2222
        %v2250 = vpack.c.bf16 %v2225, %v2224
        %v2251 = vpack.c.bf16 %v2227, %v2226
        %v2252 = vpack.c.bf16 %v2229, %v2228
        %v2253 = vpack.c.bf16 %v2231, %v2230
        %v2254 = vpack.c.bf16 %v2233, %v2232
        %v2255 = vpack.c.bf16 %v2235, %v2234
        %v2256 = vpack.c.bf16 %v2237, %v2236
        %v2257 = vpack.c.bf16 %v2239, %v2238
        %v2258 = vpack.c.bf16 %v2241, %v2240
        %v2259 = vpack.c.bf16 %v2243, %v2242
        %vm2260 = vmand %vm1394, %vm1426
        %vm2261 = vmand %vm1395, %vm1427
        %vm2262 = vmand %vm1396, %vm1428
        %vm2263 = vmand %vm1397, %vm1429
        %vm2264 = vmand %vm1398, %vm1430
        %vm2265 = vmand %vm1399, %vm1431
        %vm2266 = vmand %vm1400, %vm1432
        %vm2267 = vmand %vm1401, %vm1433
        %vm2268 = vmand %vm1402, %vm1434
        %vm2269 = vmand %vm1403, %vm1435
        %vm2270 = vmand %vm1404, %vm1436
        %vm2271 = vmand %vm1405, %vm1437
        %vm2272 = vmand %vm1406, %vm1438
        %vm2273 = vmand %vm1407, %vm1439
        %vm2274 = vmand %vm1408, %vm1440
        %vm2275 = vmand %vm1409, %vm1441
        %vm2276 = vmand %vm1410, %vm1442
        %vm2277 = vmand %vm1411, %vm1443
        %vm2278 = vmand %vm1412, %vm1444
        %vm2279 = vmand %vm1413, %vm1445
        %vm2280 = vmand %vm1414, %vm1446
        %vm2281 = vmand %vm1415, %vm1447
        %vm2282 = vmand %vm1416, %vm1448
        %vm2283 = vmand %vm1417, %vm1449
        %vm2284 = vmand %vm1418, %vm1450
        %vm2285 = vmand %vm1419, %vm1451
        %vm2286 = vmand %vm1420, %vm1452
        %vm2287 = vmand %vm1421, %vm1453
        %vm2288 = vmand %vm1422, %vm1454
        %vm2289 = vmand %vm1423, %vm1455
        %vm2290 = vmand %vm1424, %vm1456
        %vm2291 = vmand %vm1425, %vm1457
        %v2292 = vsel %vm2260, 1, 0
        %v2293 = vsel %vm2261, 1, 0
        %v2294 = vsel %vm2262, 1, 0
        %v2295 = vsel %vm2263, 1, 0
        %v2296 = vsel %vm2264, 1, 0
        %v2297 = vsel %vm2265, 1, 0
        %v2298 = vsel %vm2266, 1, 0
        %v2299 = vsel %vm2267, 1, 0
        %v2300 = vsel %vm2268, 1, 0
        %v2301 = vsel %vm2269, 1, 0
        %v2302 = vsel %vm2270, 1, 0
        %v2303 = vsel %vm2271, 1, 0
        %v2304 = vsel %vm2272, 1, 0
        %v2305 = vsel %vm2273, 1, 0
        %v2306 = vsel %vm2274, 1, 0
        %v2307 = vsel %vm2275, 1, 0
        %v2308 = vsel %vm2276, 1, 0
        %v2309 = vsel %vm2277, 1, 0
        %v2310 = vsel %vm2278, 1, 0
        %v2311 = vsel %vm2279, 1, 0
        %v2312 = vsel %vm2280, 1, 0
        %v2313 = vsel %vm2281, 1, 0
        %v2314 = vsel %vm2282, 1, 0
        %v2315 = vsel %vm2283, 1, 0
        %v2316 = vsel %vm2284, 1, 0
        %v2317 = vsel %vm2285, 1, 0
        %v2318 = vsel %vm2286, 1, 0
        %v2319 = vsel %vm2287, 1, 0
        %v2320 = vsel %vm2288, 1, 0
        %v2321 = vsel %vm2289, 1, 0
        %v2322 = vsel %vm2290, 1, 0
        %v2323 = vsel %vm2291, 1, 0
        %v2324 = vcvt.s32.f32 %v2292
        %v2325 = vcvt.s32.f32 %v2293
        %v2326 = vcvt.s32.f32 %v2294
        %v2327 = vcvt.s32.f32 %v2295
        %v2328 = vcvt.s32.f32 %v2296
        %v2329 = vcvt.s32.f32 %v2297
        %v2330 = vcvt.s32.f32 %v2298
        %v2331 = vcvt.s32.f32 %v2299
        %v2332 = vcvt.s32.f32 %v2300
        %v2333 = vcvt.s32.f32 %v2301
        %v2334 = vcvt.s32.f32 %v2302
        %v2335 = vcvt.s32.f32 %v2303
        %v2336 = vcvt.s32.f32 %v2304
        %v2337 = vcvt.s32.f32 %v2305
        %v2338 = vcvt.s32.f32 %v2306
        %v2339 = vcvt.s32.f32 %v2307
        %v2340 = vcvt.s32.f32 %v2308
        %v2341 = vcvt.s32.f32 %v2309
        %v2342 = vcvt.s32.f32 %v2310
        %v2343 = vcvt.s32.f32 %v2311
        %v2344 = vcvt.s32.f32 %v2312
        %v2345 = vcvt.s32.f32 %v2313
        %v2346 = vcvt.s32.f32 %v2314
        %v2347 = vcvt.s32.f32 %v2315
        %v2348 = vcvt.s32.f32 %v2316
        %v2349 = vcvt.s32.f32 %v2317
        %v2350 = vcvt.s32.f32 %v2318
        %v2351 = vcvt.s32.f32 %v2319
        %v2352 = vcvt.s32.f32 %v2320
        %v2353 = vcvt.s32.f32 %v2321
        %v2354 = vcvt.s32.f32 %v2322
        %v2355 = vcvt.s32.f32 %v2323
        %v2356 = vmul.f32 %v1552, %v2324
        %v2357 = vmul.f32 %v1551, %v2325
        %v2358 = vmul.f32 %v1550, %v2326
        %v2359 = vmul.f32 %v1549, %v2327
        %v2360 = vmul.f32 %v1548, %v2328
        %v2361 = vmul.f32 %v1547, %v2329
        %v2362 = vmul.f32 %v1546, %v2330
        %v2363 = vmul.f32 %v1545, %v2331
        %v2364 = vmul.f32 %v1544, %v2332
        %v2365 = vmul.f32 %v1543, %v2333
        %v2366 = vmul.f32 %v1542, %v2334
        %v2367 = vmul.f32 %v1541, %v2335
        %v2368 = vmul.f32 %v1540, %v2336
        %v2369 = vmul.f32 %v1539, %v2337
        %v2370 = vmul.f32 %v1538, %v2338
        %v2371 = vmul.f32 %v1537, %v2339
        %v2372 = vmul.f32 %v1536, %v2340
        %v2373 = vmul.f32 %v1535, %v2341
        %v2374 = vmul.f32 %v1534, %v2342
        %v2375 = vmul.f32 %v1533, %v2343
        %v2376 = vmul.f32 %v1532, %v2344
        %v2377 = vmul.f32 %v1531, %v2345
        %v2378 = vmul.f32 %v1530, %v2346
        %v2379 = vmul.f32 %v1529, %v2347
        %v2380 = vmul.f32 %v1528, %v2348
        %v2381 = vmul.f32 %v1527, %v2349
        %v2382 = vmul.f32 %v1526, %v2350
        %v2383 = vmul.f32 %v1525, %v2351
        %v2384 = vmul.f32 %v1524, %v2352
        %v2385 = vmul.f32 %v1523, %v2353
        %v2386 = vmul.f32 %v1554, %v2354
        %v2387 = vmul.f32 %v1553, %v2355
        %v2388 = vpack.c.bf16 %v2357, %v2356
        %v2389 = vpack.c.bf16 %v2359, %v2358
        %v2390 = vpack.c.bf16 %v2361, %v2360
        %v2391 = vpack.c.bf16 %v2363, %v2362
        %v2392 = vpack.c.bf16 %v2365, %v2364
        %v2393 = vpack.c.bf16 %v2367, %v2366
        %v2394 = vpack.c.bf16 %v2369, %v2368
        %v2395 = vpack.c.bf16 %v2371, %v2370
        %v2396 = vpack.c.bf16 %v2373, %v2372
        %v2397 = vpack.c.bf16 %v2375, %v2374
        %v2398 = vpack.c.bf16 %v2377, %v2376
        %v2399 = vpack.c.bf16 %v2379, %v2378
        %v2400 = vpack.c.bf16 %v2381, %v2380
        %v2401 = vpack.c.bf16 %v2383, %v2382
        %v2402 = vpack.c.bf16 %v2385, %v2384
        %v2403 = vpack.c.bf16 %v2387, %v2386
        %v2404 = vsel %vm1394, 1, 0
        %v2405 = vsel %vm1395, 1, 0
        %v2406 = vsel %vm1396, 1, 0
        %v2407 = vsel %vm1397, 1, 0
        %v2408 = vsel %vm1398, 1, 0
        %v2409 = vsel %vm1399, 1, 0
        %v2410 = vsel %vm1400, 1, 0
        %v2411 = vsel %vm1401, 1, 0
        %v2412 = vsel %vm1402, 1, 0
        %v2413 = vsel %vm1403, 1, 0
        %v2414 = vsel %vm1404, 1, 0
        %v2415 = vsel %vm1405, 1, 0
        %v2416 = vsel %vm1406, 1, 0
        %v2417 = vsel %vm1407, 1, 0
        %v2418 = vsel %vm1408, 1, 0
        %v2419 = vsel %vm1409, 1, 0
        %v2420 = vsel %vm1410, 1, 0
        %v2421 = vsel %vm1411, 1, 0
        %v2422 = vsel %vm1412, 1, 0
        %v2423 = vsel %vm1413, 1, 0
        %v2424 = vsel %vm1414, 1, 0
        %v2425 = vsel %vm1415, 1, 0
        %v2426 = vsel %vm1416, 1, 0
        %v2427 = vsel %vm1417, 1, 0
        %v2428 = vsel %vm1418, 1, 0
        %v2429 = vsel %vm1419, 1, 0
        %v2430 = vsel %vm1420, 1, 0
        %v2431 = vsel %vm1421, 1, 0
        %v2432 = vsel %vm1422, 1, 0
        %v2433 = vsel %vm1423, 1, 0
        %v2434 = vsel %vm1424, 1, 0
        %v2435 = vsel %vm1425, 1, 0
        %v2436 = vcvt.s32.f32 %v2404
        %v2437 = vcvt.s32.f32 %v2405
        %v2438 = vcvt.s32.f32 %v2406
        %v2439 = vcvt.s32.f32 %v2407
        %v2440 = vcvt.s32.f32 %v2408
        %v2441 = vcvt.s32.f32 %v2409
        %v2442 = vcvt.s32.f32 %v2410
        %v2443 = vcvt.s32.f32 %v2411
        %v2444 = vcvt.s32.f32 %v2412
        %v2445 = vcvt.s32.f32 %v2413
        %v2446 = vcvt.s32.f32 %v2414
        %v2447 = vcvt.s32.f32 %v2415
        %v2448 = vcvt.s32.f32 %v2416
        %v2449 = vcvt.s32.f32 %v2417
        %v2450 = vcvt.s32.f32 %v2418
        %v2451 = vcvt.s32.f32 %v2419
        %v2452 = vcvt.s32.f32 %v2420
        %v2453 = vcvt.s32.f32 %v2421
        %v2454 = vcvt.s32.f32 %v2422
        %v2455 = vcvt.s32.f32 %v2423
        %v2456 = vcvt.s32.f32 %v2424
        %v2457 = vcvt.s32.f32 %v2425
        %v2458 = vcvt.s32.f32 %v2426
        %v2459 = vcvt.s32.f32 %v2427
        %v2460 = vcvt.s32.f32 %v2428
        %v2461 = vcvt.s32.f32 %v2429
        %v2462 = vcvt.s32.f32 %v2430
        %v2463 = vcvt.s32.f32 %v2431
        %v2464 = vcvt.s32.f32 %v2432
        %v2465 = vcvt.s32.f32 %v2433
        %v2466 = vcvt.s32.f32 %v2434
        %v2467 = vcvt.s32.f32 %v2435
        %v2468 = vmul.f32 %v915, %v2436
        %v2469 = vmul.f32 %v916, %v2437
        %v2470 = vmul.f32 %v917, %v2438
        %v2471 = vmul.f32 %v918, %v2439
        %v2472 = vmul.f32 %v919, %v2440
        %v2473 = vmul.f32 %v920, %v2441
        %v2474 = vmul.f32 %v921, %v2442
        %v2475 = vmul.f32 %v922, %v2443
        %v2476 = vmul.f32 %v923, %v2444
        %v2477 = vmul.f32 %v924, %v2445
        %v2478 = vmul.f32 %v925, %v2446
        %v2479 = vmul.f32 %v926, %v2447
        %v2480 = vmul.f32 %v927, %v2448
        %v2481 = vmul.f32 %v928, %v2449
        %v2482 = vmul.f32 %v929, %v2450
        %v2483 = vmul.f32 %v930, %v2451
        %v2484 = vmul.f32 %v931, %v2452
        %v2485 = vmul.f32 %v932, %v2453
        %v2486 = vmul.f32 %v933, %v2454
        %v2487 = vmul.f32 %v934, %v2455
        %v2488 = vmul.f32 %v935, %v2456
        %v2489 = vmul.f32 %v936, %v2457
        %v2490 = vmul.f32 %v937, %v2458
        %v2491 = vmul.f32 %v938, %v2459
        %v2492 = vmul.f32 %v939, %v2460
        %v2493 = vmul.f32 %v940, %v2461
        %v2494 = vmul.f32 %v941, %v2462
        %v2495 = vmul.f32 %v942, %v2463
        %v2496 = vmul.f32 %v943, %v2464
        %v2497 = vmul.f32 %v944, %v2465
        %v2498 = vmul.f32 %v913, %v2466
        %v2499 = vmul.f32 %v914, %v2467
        %v2500 = vpack.c.bf16 %v2469, %v2468
        %v2501 = vpack.c.bf16 %v2471, %v2470
        %v2502 = vpack.c.bf16 %v2473, %v2472
        %v2503 = vpack.c.bf16 %v2475, %v2474
        %v2504 = vpack.c.bf16 %v2477, %v2476
        %v2505 = vpack.c.bf16 %v2479, %v2478
        %v2506 = vpack.c.bf16 %v2481, %v2480
        %v2507 = vpack.c.bf16 %v2483, %v2482
        %v2508 = vpack.c.bf16 %v2485, %v2484
        %v2509 = vpack.c.bf16 %v2487, %v2486
        %v2510 = vpack.c.bf16 %v2489, %v2488
        %v2511 = vpack.c.bf16 %v2491, %v2490
        %v2512 = vpack.c.bf16 %v2493, %v2492
        %v2513 = vpack.c.bf16 %v2495, %v2494
        %v2514 = vpack.c.bf16 %v2497, %v2496
        %v2515 = vpack.c.bf16 %v2499, %v2498
        %vm2516 = vmand %vm1394, %vm1458
        %vm2517 = vmand %vm1395, %vm1459
        %vm2518 = vmand %vm1396, %vm1460
        %vm2519 = vmand %vm1397, %vm1461
        %vm2520 = vmand %vm1398, %vm1462
        %vm2521 = vmand %vm1399, %vm1463
        %vm2522 = vmand %vm1400, %vm1464
        %vm2523 = vmand %vm1401, %vm1465
        %vm2524 = vmand %vm1402, %vm1466
        %vm2525 = vmand %vm1403, %vm1467
        %vm2526 = vmand %vm1404, %vm1468
        %vm2527 = vmand %vm1405, %vm1469
        %vm2528 = vmand %vm1406, %vm1470
        %vm2529 = vmand %vm1407, %vm1471
        %vm2530 = vmand %vm1408, %vm1472
        %vm2531 = vmand %vm1409, %vm1473
        %vm2532 = vmand %vm1410, %vm1474
        %vm2533 = vmand %vm1411, %vm1475
        %vm2534 = vmand %vm1412, %vm1476
        %vm2535 = vmand %vm1413, %vm1477
        %vm2536 = vmand %vm1414, %vm1478
        %vm2537 = vmand %vm1415, %vm1479
        %vm2538 = vmand %vm1416, %vm1480
        %vm2539 = vmand %vm1417, %vm1481
        %vm2540 = vmand %vm1418, %vm1482
        %vm2541 = vmand %vm1419, %vm1483
        %vm2542 = vmand %vm1420, %vm1484
        %vm2543 = vmand %vm1421, %vm1485
        %vm2544 = vmand %vm1422, %vm1486
        %vm2545 = vmand %vm1423, %vm1487
        %vm2546 = vmand %vm1424, %vm1488
        %vm2547 = vmand %vm1425, %vm1489
        %v2548 = vsel %vm2516, 1, 0
        %v2549 = vsel %vm2517, 1, 0
        %v2550 = vsel %vm2518, 1, 0
        %v2551 = vsel %vm2519, 1, 0
        %v2552 = vsel %vm2520, 1, 0
        %v2553 = vsel %vm2521, 1, 0
        %v2554 = vsel %vm2522, 1, 0
        %v2555 = vsel %vm2523, 1, 0
        %v2556 = vsel %vm2524, 1, 0
        %v2557 = vsel %vm2525, 1, 0
        %v2558 = vsel %vm2526, 1, 0
        %v2559 = vsel %vm2527, 1, 0
        %v2560 = vsel %vm2528, 1, 0
        %v2561 = vsel %vm2529, 1, 0
        %v2562 = vsel %vm2530, 1, 0
        %v2563 = vsel %vm2531, 1, 0
        %v2564 = vsel %vm2532, 1, 0
        %v2565 = vsel %vm2533, 1, 0
        %v2566 = vsel %vm2534, 1, 0
        %v2567 = vsel %vm2535, 1, 0
        %v2568 = vsel %vm2536, 1, 0
        %v2569 = vsel %vm2537, 1, 0
        %v2570 = vsel %vm2538, 1, 0
        %v2571 = vsel %vm2539, 1, 0
        %v2572 = vsel %vm2540, 1, 0
        %v2573 = vsel %vm2541, 1, 0
        %v2574 = vsel %vm2542, 1, 0
        %v2575 = vsel %vm2543, 1, 0
        %v2576 = vsel %vm2544, 1, 0
        %v2577 = vsel %vm2545, 1, 0
        %v2578 = vsel %vm2546, 1, 0
        %v2579 = vsel %vm2547, 1, 0
        %v2580 = vcvt.s32.f32 %v2548
        %v2581 = vcvt.s32.f32 %v2549
        %v2582 = vcvt.s32.f32 %v2550
        %v2583 = vcvt.s32.f32 %v2551
        %v2584 = vcvt.s32.f32 %v2552
        %v2585 = vcvt.s32.f32 %v2553
        %v2586 = vcvt.s32.f32 %v2554
        %v2587 = vcvt.s32.f32 %v2555
        %v2588 = vcvt.s32.f32 %v2556
        %v2589 = vcvt.s32.f32 %v2557
        %v2590 = vcvt.s32.f32 %v2558
        %v2591 = vcvt.s32.f32 %v2559
        %v2592 = vcvt.s32.f32 %v2560
        %v2593 = vcvt.s32.f32 %v2561
        %v2594 = vcvt.s32.f32 %v2562
        %v2595 = vcvt.s32.f32 %v2563
        %v2596 = vcvt.s32.f32 %v2564
        %v2597 = vcvt.s32.f32 %v2565
        %v2598 = vcvt.s32.f32 %v2566
        %v2599 = vcvt.s32.f32 %v2567
        %v2600 = vcvt.s32.f32 %v2568
        %v2601 = vcvt.s32.f32 %v2569
        %v2602 = vcvt.s32.f32 %v2570
        %v2603 = vcvt.s32.f32 %v2571
        %v2604 = vcvt.s32.f32 %v2572
        %v2605 = vcvt.s32.f32 %v2573
        %v2606 = vcvt.s32.f32 %v2574
        %v2607 = vcvt.s32.f32 %v2575
        %v2608 = vcvt.s32.f32 %v2576
        %v2609 = vcvt.s32.f32 %v2577
        %v2610 = vcvt.s32.f32 %v2578
        %v2611 = vcvt.s32.f32 %v2579
        %v2612 = vmul.f32 %v1872, %v2580
        %v2613 = vmul.f32 %v1871, %v2581
        %v2614 = vmul.f32 %v1870, %v2582
        %v2615 = vmul.f32 %v1869, %v2583
        %v2616 = vmul.f32 %v1868, %v2584
        %v2617 = vmul.f32 %v1867, %v2585
        %v2618 = vmul.f32 %v1866, %v2586
        %v2619 = vmul.f32 %v1865, %v2587
        %v2620 = vmul.f32 %v1864, %v2588
        %v2621 = vmul.f32 %v1863, %v2589
        %v2622 = vmul.f32 %v1862, %v2590
        %v2623 = vmul.f32 %v1861, %v2591
        %v2624 = vmul.f32 %v1860, %v2592
        %v2625 = vmul.f32 %v1859, %v2593
        %v2626 = vmul.f32 %v1858, %v2594
        %v2627 = vmul.f32 %v1857, %v2595
        %v2628 = vmul.f32 %v1856, %v2596
        %v2629 = vmul.f32 %v1855, %v2597
        %v2630 = vmul.f32 %v1854, %v2598
        %v2631 = vmul.f32 %v1853, %v2599
        %v2632 = vmul.f32 %v1852, %v2600
        %v2633 = vmul.f32 %v1851, %v2601
        %v2634 = vmul.f32 %v1850, %v2602
        %v2635 = vmul.f32 %v1849, %v2603
        %v2636 = vmul.f32 %v1848, %v2604
        %v2637 = vmul.f32 %v1847, %v2605
        %v2638 = vmul.f32 %v1846, %v2606
        %v2639 = vmul.f32 %v1845, %v2607
        %v2640 = vmul.f32 %v1844, %v2608
        %v2641 = vmul.f32 %v1875, %v2609
        %v2642 = vmul.f32 %v1874, %v2610
        %v2643 = vmul.f32 %v1873, %v2611
        %v2644 = vpack.c.bf16 %v2613, %v2612
        %v2645 = vpack.c.bf16 %v2615, %v2614
        %v2646 = vpack.c.bf16 %v2617, %v2616
        %v2647 = vpack.c.bf16 %v2619, %v2618
        %v2648 = vpack.c.bf16 %v2621, %v2620
        %v2649 = vpack.c.bf16 %v2623, %v2622
        %v2650 = vpack.c.bf16 %v2625, %v2624
        %v2651 = vpack.c.bf16 %v2627, %v2626
        %v2652 = vpack.c.bf16 %v2629, %v2628
        %v2653 = vpack.c.bf16 %v2631, %v2630
        %v2654 = vpack.c.bf16 %v2633, %v2632
        %v2655 = vpack.c.bf16 %v2635, %v2634
        %v2656 = vpack.c.bf16 %v2637, %v2636
        %v2657 = vpack.c.bf16 %v2639, %v2638
        %v2658 = vpack.c.bf16 %v2641, %v2640
        %v2659 = vpack.c.bf16 %v2643, %v2642
        %v2660 = vld [vmem:[#allocation7] sm:$0xf]
        %v2661 = vld [vmem:[#allocation7 + $0x4] sm:$0xf]
        %v2662 = vld [vmem:[#allocation7 + $0x8] sm:$0xf]
        %v2663 = vld [vmem:[#allocation7 + $0xc] sm:$0xf]
        %v2664 = vld [vmem:[#allocation7 + $0x10] sm:$0xf]
        %v2665 = vld [vmem:[#allocation7 + $0x14] sm:$0xf]
        %v2666 = vld [vmem:[#allocation7 + $0x18] sm:$0xf]
        %v2667 = vld [vmem:[#allocation7 + $0x1c] sm:$0xf]
        %v2668 = vld [vmem:[#allocation7 + $0x20] sm:$0xf]
        %v2669 = vld [vmem:[#allocation7 + $0x24] sm:$0xf]
        %v2670 = vld [vmem:[#allocation7 + $0x28] sm:$0xf]
        %v2671 = vld [vmem:[#allocation7 + $0x2c] sm:$0xf]
        %v2672 = vld [vmem:[#allocation7 + $0x30] sm:$0xf]
        %v2673 = vld [vmem:[#allocation7 + $0x34] sm:$0xf]
        %v2674 = vld [vmem:[#allocation7 + $0x38] sm:$0xf]
        %v2675 = vld [vmem:[#allocation7 + $0x3c] sm:$0xf]
        %v2676 = vld [vmem:[#allocation7 + $0x40] sm:$0xf]
        %v2677 = vld [vmem:[#allocation7 + $0x44] sm:$0xf]
        %v2678 = vld [vmem:[#allocation7 + $0x48] sm:$0xf]
        %v2679 = vld [vmem:[#allocation7 + $0x4c] sm:$0xf]
        %v2680 = vld [vmem:[#allocation7 + $0x50] sm:$0xf]
        %v2681 = vld [vmem:[#allocation7 + $0x54] sm:$0xf]
        %v2682 = vld [vmem:[#allocation7 + $0x58] sm:$0xf]
        %v2683 = vld [vmem:[#allocation7 + $0x5c] sm:$0xf]
        %v2684 = vld [vmem:[#allocation7 + $0x60] sm:$0xf]
        %v2685 = vld [vmem:[#allocation7 + $0x64] sm:$0xf]
        %v2686 = vld [vmem:[#allocation7 + $0x68] sm:$0xf]
        %v2687 = vld [vmem:[#allocation7 + $0x6c] sm:$0xf]
        %v2688 = vld [vmem:[#allocation7 + $0x70] sm:$0xf]
        %v2689 = vld [vmem:[#allocation7 + $0x74] sm:$0xf]
        %v2690 = vld [vmem:[#allocation7 + $0x78] sm:$0xf]
        %v2691 = vld [vmem:[#allocation7 + $0x7c] sm:$0xf]
        %v2692 = vld [vmem:[#allocation7 + $0x80] sm:$0xf]
        %v2693 = vld [vmem:[#allocation7 + $0x84] sm:$0xf]
        %v2694 = vld [vmem:[#allocation7 + $0x88] sm:$0xf]
        %v2695 = vld [vmem:[#allocation7 + $0x8c] sm:$0xf]
        %v2696 = vld [vmem:[#allocation7 + $0x90] sm:$0xf]
        %v2697 = vld [vmem:[#allocation7 + $0x94] sm:$0xf]
        %v2698 = vld [vmem:[#allocation7 + $0x98] sm:$0xf]
        %v2699 = vld [vmem:[#allocation7 + $0x9c] sm:$0xf]
        %v2700 = vld [vmem:[#allocation7 + $0xa0] sm:$0xf]
        %v2701 = vld [vmem:[#allocation7 + $0xa4] sm:$0xf]
        %v2702 = vld [vmem:[#allocation7 + $0xa8] sm:$0xf]
        %v2703 = vld [vmem:[#allocation7 + $0xac] sm:$0xf]
        %v2704 = vld [vmem:[#allocation7 + $0xb0] sm:$0xf]
        %v2705 = vld [vmem:[#allocation7 + $0xb4] sm:$0xf]
        %v2706 = vld [vmem:[#allocation7 + $0xb8] sm:$0xf]
        %v2707 = vld [vmem:[#allocation7 + $0xbc] sm:$0xf]
        %v2708 = vld [vmem:[#allocation7 + $0xc0] sm:$0xf]
        %v2709 = vld [vmem:[#allocation7 + $0xc4] sm:$0xf]
        %v2710 = vld [vmem:[#allocation7 + $0xc8] sm:$0xf]
        %v2711 = vld [vmem:[#allocation7 + $0xcc] sm:$0xf]
        %v2712 = vld [vmem:[#allocation7 + $0xd0] sm:$0xf]
        %v2713 = vld [vmem:[#allocation7 + $0xd4] sm:$0xf]
        %v2714 = vld [vmem:[#allocation7 + $0xd8] sm:$0xf]
        %v2715 = vld [vmem:[#allocation7 + $0xdc] sm:$0xf]
        %v2716 = vld [vmem:[#allocation7 + $0xe0] sm:$0xf]
        %v2717 = vld [vmem:[#allocation7 + $0xe4] sm:$0xf]
        %v2718 = vld [vmem:[#allocation7 + $0xe8] sm:$0xf]
        %v2719 = vld [vmem:[#allocation7 + $0xec] sm:$0xf]
        %v2720 = vld [vmem:[#allocation7 + $0xf0] sm:$0xf]
        %v2721 = vld [vmem:[#allocation7 + $0xf4] sm:$0xf]
        %v2722 = vld [vmem:[#allocation7 + $0xf8] sm:$0xf]
        %v2723 = vld [vmem:[#allocation7 + $0xfc] sm:$0xf]
        %v2724 = vld [vmem:[#allocation7 + $0x100] sm:$0xf]
        %v2725 = vld [vmem:[#allocation7 + $0x104] sm:$0xf]
        %v2726 = vld [vmem:[#allocation7 + $0x108] sm:$0xf]
        %v2727 = vld [vmem:[#allocation7 + $0x10c] sm:$0xf]
        %v2728 = vld [vmem:[#allocation7 + $0x110] sm:$0xf]
        %v2729 = vld [vmem:[#allocation7 + $0x114] sm:$0xf]
        %v2730 = vld [vmem:[#allocation7 + $0x118] sm:$0xf]
        %v2731 = vld [vmem:[#allocation7 + $0x11c] sm:$0xf]
        %v2732 = vld [vmem:[#allocation7 + $0x120] sm:$0xf]
        %v2733 = vld [vmem:[#allocation7 + $0x124] sm:$0xf]
        %v2734 = vld [vmem:[#allocation7 + $0x128] sm:$0xf]
        %v2735 = vld [vmem:[#allocation7 + $0x12c] sm:$0xf]
        %v2736 = vld [vmem:[#allocation7 + $0x130] sm:$0xf]
        %v2737 = vld [vmem:[#allocation7 + $0x134] sm:$0xf]
        %v2738 = vld [vmem:[#allocation7 + $0x138] sm:$0xf]
        %v2739 = vld [vmem:[#allocation7 + $0x13c] sm:$0xf]
        %v2740 = vld [vmem:[#allocation7 + $0x140] sm:$0xf]
        %v2741 = vld [vmem:[#allocation7 + $0x144] sm:$0xf]
        %v2742 = vld [vmem:[#allocation7 + $0x148] sm:$0xf]
        %v2743 = vld [vmem:[#allocation7 + $0x14c] sm:$0xf]
        %v2744 = vld [vmem:[#allocation7 + $0x150] sm:$0xf]
        %v2745 = vld [vmem:[#allocation7 + $0x154] sm:$0xf]
        %v2746 = vld [vmem:[#allocation7 + $0x158] sm:$0xf]
        %v2747 = vld [vmem:[#allocation7 + $0x15c] sm:$0xf]
        %v2748 = vld [vmem:[#allocation7 + $0x160] sm:$0xf]
        %v2749 = vld [vmem:[#allocation7 + $0x164] sm:$0xf]
        %v2750 = vld [vmem:[#allocation7 + $0x168] sm:$0xf]
        %v2751 = vld [vmem:[#allocation7 + $0x16c] sm:$0xf]
        %v2752 = vld [vmem:[#allocation7 + $0x170] sm:$0xf]
        %v2753 = vld [vmem:[#allocation7 + $0x174] sm:$0xf]
        %v2754 = vld [vmem:[#allocation7 + $0x178] sm:$0xf]
        %v2755 = vld [vmem:[#allocation7 + $0x17c] sm:$0xf]
        %v2756 = vld [vmem:[#allocation7 + $0x180] sm:$0xf]
        %v2757 = vld [vmem:[#allocation7 + $0x184] sm:$0xf]
        %v2758 = vld [vmem:[#allocation7 + $0x188] sm:$0xf]
        %v2759 = vld [vmem:[#allocation7 + $0x18c] sm:$0xf]
        %v2760 = vld [vmem:[#allocation7 + $0x190] sm:$0xf]
        %v2761 = vld [vmem:[#allocation7 + $0x194] sm:$0xf]
        %v2762 = vld [vmem:[#allocation7 + $0x198] sm:$0xf]
        %v2763 = vld [vmem:[#allocation7 + $0x19c] sm:$0xf]
        %v2764 = vld [vmem:[#allocation7 + $0x1a0] sm:$0xf]
        %v2765 = vld [vmem:[#allocation7 + $0x1a4] sm:$0xf]
        %v2766 = vld [vmem:[#allocation7 + $0x1a8] sm:$0xf]
        %v2767 = vld [vmem:[#allocation7 + $0x1ac] sm:$0xf]
        %v2768 = vld [vmem:[#allocation7 + $0x1b0] sm:$0xf]
        %v2769 = vld [vmem:[#allocation7 + $0x1b4] sm:$0xf]
        %v2770 = vld [vmem:[#allocation7 + $0x1b8] sm:$0xf]
        %v2771 = vld [vmem:[#allocation7 + $0x1bc] sm:$0xf]
        %v2772 = vld [vmem:[#allocation7 + $0x1c0] sm:$0xf]
        %v2773 = vld [vmem:[#allocation7 + $0x1c4] sm:$0xf]
        %v2774 = vld [vmem:[#allocation7 + $0x1c8] sm:$0xf]
        %v2775 = vld [vmem:[#allocation7 + $0x1cc] sm:$0xf]
        %v2776 = vld [vmem:[#allocation7 + $0x1d0] sm:$0xf]
        %v2777 = vld [vmem:[#allocation7 + $0x1d4] sm:$0xf]
        %v2778 = vld [vmem:[#allocation7 + $0x1d8] sm:$0xf]
        %v2779 = vld [vmem:[#allocation7 + $0x1dc] sm:$0xf]
        %v2780 = vld [vmem:[#allocation7 + $0x1e0] sm:$0xf]
        %v2781 = vld [vmem:[#allocation7 + $0x1e4] sm:$0xf]
        %v2782 = vld [vmem:[#allocation7 + $0x1e8] sm:$0xf]
        %v2783 = vld [vmem:[#allocation7 + $0x1ec] sm:$0xf]
        %v2784 = vld [vmem:[#allocation7 + $0x1f0] sm:$0xf]
        %v2785 = vld [vmem:[#allocation7 + $0x1f4] sm:$0xf]
        %v2786 = vld [vmem:[#allocation7 + $0x1f8] sm:$0xf]
        %v2787 = vld [vmem:[#allocation7 + $0x1fc] sm:$0xf]
        %v2788 = vld [vmem:[#allocation7 + $0x200] sm:$0xf]
        %v2789 = vld [vmem:[#allocation7 + $0x204] sm:$0xf]
        %v2790 = vld [vmem:[#allocation7 + $0x208] sm:$0xf]
        %v2791 = vld [vmem:[#allocation7 + $0x20c] sm:$0xf]
        %v2792 = vld [vmem:[#allocation7 + $0x210] sm:$0xf]
        %v2793 = vld [vmem:[#allocation7 + $0x214] sm:$0xf]
        %v2794 = vld [vmem:[#allocation7 + $0x218] sm:$0xf]
        %v2795 = vld [vmem:[#allocation7 + $0x21c] sm:$0xf]
        %v2796 = vld [vmem:[#allocation7 + $0x220] sm:$0xf]
        %v2797 = vld [vmem:[#allocation7 + $0x224] sm:$0xf]
        %v2798 = vld [vmem:[#allocation7 + $0x228] sm:$0xf]
        %v2799 = vld [vmem:[#allocation7 + $0x22c] sm:$0xf]
        %v2800 = vld [vmem:[#allocation7 + $0x230] sm:$0xf]
        %v2801 = vld [vmem:[#allocation7 + $0x234] sm:$0xf]
        %v2802 = vld [vmem:[#allocation7 + $0x238] sm:$0xf]
        %v2803 = vld [vmem:[#allocation7 + $0x23c] sm:$0xf]
        %v2948 = vunpack.c.l.b16 %v2660
        %v2949 = vunpack.c.l.b16 %v2661
        %v2950 = vunpack.c.l.b16 %v2662
        %v2951 = vunpack.c.l.b16 %v2663
        %v2952 = vunpack.c.l.b16 %v2664
        %v2953 = vunpack.c.l.b16 %v2665
        %v2954 = vunpack.c.l.b16 %v2666
        %v2955 = vunpack.c.l.b16 %v2667
        %v2956 = vunpack.c.l.b16 %v2668
        %v2957 = vunpack.c.l.b16 %v2669
        %v2958 = vunpack.c.l.b16 %v2670
        %v2959 = vunpack.c.l.b16 %v2671
        %v2960 = vunpack.c.l.b16 %v2672
        %v2961 = vunpack.c.l.b16 %v2673
        %v2962 = vunpack.c.l.b16 %v2674
        %v2963 = vunpack.c.l.b16 %v2675
        %v2964 = vunpack.c.l.b16 %v2676
        %v2965 = vunpack.c.l.b16 %v2677
        %v2966 = vunpack.c.l.b16 %v2678
        %v2967 = vunpack.c.l.b16 %v2679
        %v2968 = vunpack.c.l.b16 %v2680
        %v2969 = vunpack.c.l.b16 %v2681
        %v2970 = vunpack.c.l.b16 %v2682
        %v2971 = vunpack.c.l.b16 %v2683
        %v2972 = vunpack.c.l.b16 %v2684
        %v2973 = vunpack.c.l.b16 %v2685
        %v2974 = vunpack.c.l.b16 %v2686
        %v2975 = vunpack.c.l.b16 %v2687
        %v2976 = vunpack.c.l.b16 %v2688
        %v2977 = vunpack.c.l.b16 %v2689
        %v2978 = vunpack.c.l.b16 %v2690
        %v2979 = vunpack.c.l.b16 %v2691
        %v2980 = vunpack.c.l.b16 %v2692
        %v2981 = vunpack.c.l.b16 %v2693
        %v2982 = vunpack.c.l.b16 %v2694
        %v2983 = vunpack.c.l.b16 %v2695
        %v2984 = vunpack.c.l.b16 %v2696
        %v2985 = vunpack.c.l.b16 %v2697
        %v2986 = vunpack.c.l.b16 %v2698
        %v2987 = vunpack.c.l.b16 %v2699
        %v2988 = vunpack.c.l.b16 %v2700
        %v2989 = vunpack.c.l.b16 %v2701
        %v2990 = vunpack.c.l.b16 %v2702
        %v2991 = vunpack.c.l.b16 %v2703
        %v2992 = vunpack.c.l.b16 %v2704
        %v2993 = vunpack.c.l.b16 %v2705
        %v2994 = vunpack.c.l.b16 %v2706
        %v2995 = vunpack.c.l.b16 %v2707
        %v2996 = vunpack.c.l.b16 %v2708
        %v2997 = vunpack.c.l.b16 %v2709
        %v2998 = vunpack.c.l.b16 %v2710
        %v2999 = vunpack.c.l.b16 %v2711
        %v3000 = vunpack.c.l.b16 %v2712
        %v3001 = vunpack.c.l.b16 %v2713
        %v3002 = vunpack.c.l.b16 %v2714
        %v3003 = vunpack.c.l.b16 %v2715
        %v3004 = vunpack.c.l.b16 %v2716
        %v3005 = vunpack.c.l.b16 %v2717
        %v3006 = vunpack.c.l.b16 %v2718
        %v3007 = vunpack.c.l.b16 %v2719
        %v3008 = vunpack.c.l.b16 %v2720
        %v3009 = vunpack.c.l.b16 %v2721
        %v3010 = vunpack.c.l.b16 %v2722
        %v3011 = vunpack.c.l.b16 %v2723
        %v3012 = vunpack.c.l.b16 %v2724
        %v3013 = vunpack.c.l.b16 %v2725
        %v3014 = vunpack.c.l.b16 %v2726
        %v3015 = vunpack.c.l.b16 %v2727
        %v3016 = vunpack.c.l.b16 %v2728
        %v3017 = vunpack.c.l.b16 %v2729
        %v3018 = vunpack.c.l.b16 %v2730
        %v3019 = vunpack.c.l.b16 %v2731
        %v3020 = vunpack.c.l.b16 %v2732
        %v3021 = vunpack.c.l.b16 %v2733
        %v3022 = vunpack.c.l.b16 %v2734
        %v3023 = vunpack.c.l.b16 %v2735
        %v3024 = vunpack.c.l.b16 %v2736
        %v3025 = vunpack.c.l.b16 %v2737
        %v3026 = vunpack.c.l.b16 %v2738
        %v3027 = vunpack.c.l.b16 %v2739
        %v3028 = vunpack.c.l.b16 %v2740
        %v3029 = vunpack.c.l.b16 %v2741
        %v3030 = vunpack.c.l.b16 %v2742
        %v3031 = vunpack.c.l.b16 %v2743
        %v3032 = vunpack.c.l.b16 %v2744
        %v3033 = vunpack.c.l.b16 %v2745
        %v3034 = vunpack.c.l.b16 %v2746
        %v3035 = vunpack.c.l.b16 %v2747
        %v3036 = vunpack.c.l.b16 %v2748
        %v3037 = vunpack.c.l.b16 %v2749
        %v3038 = vunpack.c.l.b16 %v2750
        %v3039 = vunpack.c.l.b16 %v2751
        %v3040 = vunpack.c.l.b16 %v2752
        %v3041 = vunpack.c.l.b16 %v2753
        %v3042 = vunpack.c.l.b16 %v2754
        %v3043 = vunpack.c.l.b16 %v2755
        %v3044 = vunpack.c.l.b16 %v2756
        %v3045 = vunpack.c.l.b16 %v2757
        %v3046 = vunpack.c.l.b16 %v2758
        %v3047 = vunpack.c.l.b16 %v2759
        %v3048 = vunpack.c.l.b16 %v2760
        %v3049 = vunpack.c.l.b16 %v2761
        %v3050 = vunpack.c.l.b16 %v2762
        %v3051 = vunpack.c.l.b16 %v2763
        %v3052 = vunpack.c.l.b16 %v2764
        %v3053 = vunpack.c.l.b16 %v2765
        %v3054 = vunpack.c.l.b16 %v2766
        %v3055 = vunpack.c.l.b16 %v2767
        %v3056 = vunpack.c.l.b16 %v2768
        %v3057 = vunpack.c.l.b16 %v2769
        %v3058 = vunpack.c.l.b16 %v2770
        %v3059 = vunpack.c.l.b16 %v2771
        %v3060 = vunpack.c.l.b16 %v2772
        %v3061 = vunpack.c.l.b16 %v2773
        %v3062 = vunpack.c.l.b16 %v2774
        %v3063 = vunpack.c.l.b16 %v2775
        %v3064 = vunpack.c.l.b16 %v2776
        %v3065 = vunpack.c.l.b16 %v2777
        %v3066 = vunpack.c.l.b16 %v2778
        %v3067 = vunpack.c.l.b16 %v2779
        %v3068 = vunpack.c.l.b16 %v2780
        %v3069 = vunpack.c.l.b16 %v2781
        %v3070 = vunpack.c.l.b16 %v2782
        %v3071 = vunpack.c.l.b16 %v2783
        %v3072 = vunpack.c.l.b16 %v2784
        %v3073 = vunpack.c.l.b16 %v2785
        %v3074 = vunpack.c.l.b16 %v2786
        %v3075 = vunpack.c.l.b16 %v2787
        %v3076 = vunpack.c.l.b16 %v2788
        %v3077 = vunpack.c.l.b16 %v2789
        %v3078 = vunpack.c.l.b16 %v2790
        %v3079 = vunpack.c.l.b16 %v2791
        %v3080 = vunpack.c.l.b16 %v2792
        %v3081 = vunpack.c.l.b16 %v2793
        %v3082 = vunpack.c.l.b16 %v2794
        %v3083 = vunpack.c.l.b16 %v2795
        %v3084 = vunpack.c.l.b16 %v2796
        %v3085 = vunpack.c.l.b16 %v2797
        %v3086 = vunpack.c.l.b16 %v2798
        %v3087 = vunpack.c.l.b16 %v2799
        %v3088 = vunpack.c.l.b16 %v2800
        %v3089 = vunpack.c.l.b16 %v2801
        %v3090 = vunpack.c.l.b16 %v2802
        %v3091 = vunpack.c.l.b16 %v2803
        %v3092 = vpack.c.b16 %v2949, %v2948
        %v3093 = vpack.c.b16 %v2951, %v2950
        %v3094 = vpack.c.b16 %v2953, %v2952
        %v3095 = vpack.c.b16 %v2955, %v2954
        %v3096 = vpack.c.b16 %v2957, %v2956
        %v3097 = vpack.c.b16 %v2959, %v2958
        %v3098 = vpack.c.b16 %v2961, %v2960
        %v3099 = vpack.c.b16 %v2963, %v2962
        %v3100 = vpack.c.b16 %v2965, %v2964
        %v3101 = vpack.c.b16 %v2967, %v2966
        %v3102 = vpack.c.b16 %v2969, %v2968
        %v3103 = vpack.c.b16 %v2971, %v2970
        %v3104 = vpack.c.b16 %v2973, %v2972
        %v3105 = vpack.c.b16 %v2975, %v2974
        %v3106 = vpack.c.b16 %v2977, %v2976
        %v3107 = vpack.c.b16 %v2979, %v2978
        %v3108 = vpack.c.b16 %v2981, %v2980
        %v3109 = vpack.c.b16 %v2983, %v2982
        %v3110 = vpack.c.b16 %v2985, %v2984
        %v3111 = vpack.c.b16 %v2987, %v2986
        %v3112 = vpack.c.b16 %v2989, %v2988
        %v3113 = vpack.c.b16 %v2991, %v2990
        %v3114 = vpack.c.b16 %v2993, %v2992
        %v3115 = vpack.c.b16 %v2995, %v2994
        %v3116 = vpack.c.b16 %v2997, %v2996
        %v3117 = vpack.c.b16 %v2999, %v2998
        %v3118 = vpack.c.b16 %v3001, %v3000
        %v3119 = vpack.c.b16 %v3003, %v3002
        %v3120 = vpack.c.b16 %v3005, %v3004
        %v3121 = vpack.c.b16 %v3007, %v3006
        %v3122 = vpack.c.b16 %v3009, %v3008
        %v3123 = vpack.c.b16 %v3011, %v3010
        %v3124 = vpack.c.b16 %v3013, %v3012
        %v3125 = vpack.c.b16 %v3015, %v3014
        %v3126 = vpack.c.b16 %v3017, %v3016
        %v3127 = vpack.c.b16 %v3019, %v3018
        %v3128 = vpack.c.b16 %v3021, %v3020
        %v3129 = vpack.c.b16 %v3023, %v3022
        %v3130 = vpack.c.b16 %v3025, %v3024
        %v3131 = vpack.c.b16 %v3027, %v3026
        %v3132 = vpack.c.b16 %v3029, %v3028
        %v3133 = vpack.c.b16 %v3031, %v3030
        %v3134 = vpack.c.b16 %v3033, %v3032
        %v3135 = vpack.c.b16 %v3035, %v3034
        %v3136 = vpack.c.b16 %v3037, %v3036
        %v3137 = vpack.c.b16 %v3039, %v3038
        %v3138 = vpack.c.b16 %v3041, %v3040
        %v3139 = vpack.c.b16 %v3043, %v3042
        %v3140 = vpack.c.b16 %v3045, %v3044
        %v3141 = vpack.c.b16 %v3047, %v3046
        %v3142 = vpack.c.b16 %v3049, %v3048
        %v3143 = vpack.c.b16 %v3051, %v3050
        %v3144 = vpack.c.b16 %v3053, %v3052
        %v3145 = vpack.c.b16 %v3055, %v3054
        %v3146 = vpack.c.b16 %v3057, %v3056
        %v3147 = vpack.c.b16 %v3059, %v3058
        %v3148 = vpack.c.b16 %v3061, %v3060
        %v3149 = vpack.c.b16 %v3063, %v3062
        %v3150 = vpack.c.b16 %v3065, %v3064
        %v3151 = vpack.c.b16 %v3067, %v3066
        %v3152 = vpack.c.b16 %v3069, %v3068
        %v3153 = vpack.c.b16 %v3071, %v3070
        %v3154 = vpack.c.b16 %v3073, %v3072
        %v3155 = vpack.c.b16 %v3075, %v3074
        %v3156 = vpack.c.b16 %v3077, %v3076
        %v3157 = vpack.c.b16 %v3079, %v3078
        %v3158 = vpack.c.b16 %v3081, %v3080
        %v3159 = vpack.c.b16 %v3083, %v3082
        %v3160 = vpack.c.b16 %v3085, %v3084
        %v3161 = vpack.c.b16 %v3087, %v3086
        %v3162 = vpack.c.b16 %v3089, %v3088
        %v3163 = vpack.c.b16 %v3091, %v3090
        %3236 = vmatprep.subr.bf16.mxu0 0
        %3237 = vmatpush1.bf16.msra.mxu0 %v3099
        %3238 = vmatprep.subr.bf16.mxu0 0
        %3239 = vmatpush1.bf16.msra.mxu0 %v3098
        %3240 = vmatprep.subr.bf16.mxu0 0
        %3241 = vmatpush1.bf16.msra.mxu0 %v3097
        %3242 = vmatprep.subr.bf16.mxu0 0
        %3243 = vmatpush1.bf16.msra.mxu0 %v3096
        %3244 = vmatprep.subr.bf16.mxu0 0
        %3245 = vmatpush1.bf16.msra.mxu0 %v3095
        %3246 = vmatprep.subr.bf16.mxu0 0
        %3247 = vmatpush1.bf16.msra.mxu0 %v3094
        %3248 = vmatprep.subr.bf16.mxu0 0
        %3249 = vmatpush1.bf16.msra.mxu0 %v3093
        %3250 = vmatprep.subr.bf16.mxu0 0
        %3251 = vmatpush1.bf16.msra.mxu0 %v3092
        %3252 = vmatprep.subr.bf16.mxu0 0
        %3253 = vmatpush2.bf16.msra.mxu0 %v3107
        %3254 = vmatprep.subr.bf16.mxu0 0
        %3255 = vmatpush2.bf16.msra.mxu0 %v3106
        %3256 = vmatprep.subr.bf16.mxu0 0
        %3257 = vmatpush2.bf16.msra.mxu0 %v3105
        %3258 = vmatprep.subr.bf16.mxu0 0
        %3259 = vmatpush2.bf16.msra.mxu0 %v3104
        %3260 = vmatprep.subr.bf16.mxu0 0
        %3261 = vmatpush2.bf16.msra.mxu0 %v3103
        %3262 = vmatprep.subr.bf16.mxu0 0
        %3263 = vmatpush2.bf16.msra.mxu0 %v3102
        %3264 = vmatprep.subr.bf16.mxu0 0
        %3265 = vmatpush2.bf16.msra.mxu0 %v3101
        %3266 = vmatprep.subr.bf16.mxu0 0
        %3267 = vmatpush2.bf16.msra.mxu0 %v3100
        %3268 = vmatprep.mubr.bf16.mxu0 %v1795
        %3269 = vmatmul.mubr.bf16.gmra.mxu0 %v1683
        %v3270 = vpop.f32.mrf.mxu0
        %v3271 = vadd.f32 0.0, %v3270
        %v3272 = vpop.f32.mrf.mxu0
        %v3273 = vpop.f32.mrf.mxu0
        %v3274 = vadd.f32 0.0, %v3273
        %v3275 = vpop.f32.mrf.mxu0
        %3276 = vmatprep.mubr.bf16.mxu0 %v1796
        %3277 = vmatmul.mubr.bf16.gmra.mxu0 %v1684
        %v3278 = vpop.f32.mrf.mxu0
        %v3279 = vadd.f32 0.0, %v3278
        %v3280 = vpop.f32.mrf.mxu0
        %v3281 = vpop.f32.mrf.mxu0
        %v3282 = vadd.f32 0.0, %v3281
        %v3283 = vpop.f32.mrf.mxu0
        %3284 = vmatprep.mubr.bf16.mxu0 %v1797
        %3285 = vmatmul.mubr.bf16.gmra.mxu0 %v1685
        %v3286 = vpop.f32.mrf.mxu0
        %v3287 = vadd.f32 0.0, %v3286
        %v3288 = vpop.f32.mrf.mxu0
        %v3289 = vpop.f32.mrf.mxu0
        %v3290 = vadd.f32 0.0, %v3289
        %v3291 = vpop.f32.mrf.mxu0
        %3292 = vmatprep.mubr.bf16.mxu0 %v1798
        %3293 = vmatmul.mubr.bf16.gmra.mxu0 %v1686
        %v3294 = vpop.f32.mrf.mxu0
        %v3295 = vadd.f32 0.0, %v3294
        %v3296 = vpop.f32.mrf.mxu0
        %v3297 = vpop.f32.mrf.mxu0
        %v3298 = vadd.f32 0.0, %v3297
        %v3299 = vpop.f32.mrf.mxu0
        %3300 = vmatprep.mubr.bf16.mxu0 %v1799
        %3301 = vmatmul.mubr.bf16.gmra.mxu0 %v1687
        %v3302 = vpop.f32.mrf.mxu0
        %v3303 = vadd.f32 0.0, %v3302
        %v3304 = vpop.f32.mrf.mxu0
        %v3305 = vpop.f32.mrf.mxu0
        %v3306 = vadd.f32 0.0, %v3305
        %v3307 = vpop.f32.mrf.mxu0
        %3308 = vmatprep.mubr.bf16.mxu0 %v1800
        %3309 = vmatmul.mubr.bf16.gmra.mxu0 %v1688
        %v3310 = vpop.f32.mrf.mxu0
        %v3311 = vadd.f32 0.0, %v3310
        %v3312 = vpop.f32.mrf.mxu0
        %v3313 = vpop.f32.mrf.mxu0
        %v3314 = vadd.f32 0.0, %v3313
        %v3315 = vpop.f32.mrf.mxu0
        %3316 = vmatprep.mubr.bf16.mxu0 %v1801
        %3317 = vmatmul.mubr.bf16.gmra.mxu0 %v1689
        %v3318 = vpop.f32.mrf.mxu0
        %v3319 = vadd.f32 0.0, %v3318
        %v3320 = vpop.f32.mrf.mxu0
        %v3321 = vpop.f32.mrf.mxu0
        %v3322 = vadd.f32 0.0, %v3321
        %v3323 = vpop.f32.mrf.mxu0
        %3324 = vmatprep.mubr.bf16.mxu0 %v1802
        %3325 = vmatmul.mubr.bf16.gmra.mxu0 %v1690
        %v3326 = vpop.f32.mrf.mxu0
        %v3327 = vadd.f32 0.0, %v3326
        %v3328 = vpop.f32.mrf.mxu0
        %v3329 = vpop.f32.mrf.mxu0
        %v3330 = vadd.f32 0.0, %v3329
        %v3331 = vpop.f32.mrf.mxu0
        %3332 = vmatprep.mubr.bf16.mxu0 %v1803
        %3333 = vmatmul.mubr.bf16.gmra.mxu0 %v1691
        %v3334 = vpop.f32.mrf.mxu0
        %v3335 = vadd.f32 0.0, %v3334
        %v3336 = vpop.f32.mrf.mxu0
        %v3337 = vpop.f32.mrf.mxu0
        %v3338 = vadd.f32 0.0, %v3337
        %v3339 = vpop.f32.mrf.mxu0
        %3340 = vmatprep.mubr.bf16.mxu0 %v1804
        %3341 = vmatmul.mubr.bf16.gmra.mxu0 %v1692
        %v3342 = vpop.f32.mrf.mxu0
        %v3343 = vadd.f32 0.0, %v3342
        %v3344 = vpop.f32.mrf.mxu0
        %v3345 = vpop.f32.mrf.mxu0
        %v3346 = vadd.f32 0.0, %v3345
        %v3347 = vpop.f32.mrf.mxu0
        %3348 = vmatprep.mubr.bf16.mxu0 %v1805
        %3349 = vmatmul.mubr.bf16.gmra.mxu0 %v1693
        %v3350 = vpop.f32.mrf.mxu0
        %v3351 = vadd.f32 0.0, %v3350
        %v3352 = vpop.f32.mrf.mxu0
        %v3353 = vpop.f32.mrf.mxu0
        %v3354 = vadd.f32 0.0, %v3353
        %v3355 = vpop.f32.mrf.mxu0
        %3356 = vmatprep.mubr.bf16.mxu0 %v1806
        %3357 = vmatmul.mubr.bf16.gmra.mxu0 %v1694
        %v3358 = vpop.f32.mrf.mxu0
        %v3359 = vadd.f32 0.0, %v3358
        %v3360 = vpop.f32.mrf.mxu0
        %v3361 = vpop.f32.mrf.mxu0
        %v3362 = vadd.f32 0.0, %v3361
        %v3363 = vpop.f32.mrf.mxu0
        %3364 = vmatprep.mubr.bf16.mxu0 %v1807
        %3365 = vmatmul.mubr.bf16.gmra.mxu0 %v1695
        %v3366 = vpop.f32.mrf.mxu0
        %v3367 = vadd.f32 0.0, %v3366
        %v3368 = vpop.f32.mrf.mxu0
        %v3369 = vpop.f32.mrf.mxu0
        %v3370 = vadd.f32 0.0, %v3369
        %v3371 = vpop.f32.mrf.mxu0
        %3372 = vmatprep.mubr.bf16.mxu0 %v1808
        %3373 = vmatmul.mubr.bf16.gmra.mxu0 %v1696
        %v3374 = vpop.f32.mrf.mxu0
        %v3375 = vadd.f32 0.0, %v3374
        %v3376 = vpop.f32.mrf.mxu0
        %v3377 = vpop.f32.mrf.mxu0
        %v3378 = vadd.f32 0.0, %v3377
        %v3379 = vpop.f32.mrf.mxu0
        %3380 = vmatprep.mubr.bf16.mxu0 %v1809
        %3381 = vmatmul.mubr.bf16.gmra.mxu0 %v1697
        %v3382 = vpop.f32.mrf.mxu0
        %v3383 = vadd.f32 0.0, %v3382
        %v3384 = vpop.f32.mrf.mxu0
        %v3385 = vpop.f32.mrf.mxu0
        %v3386 = vadd.f32 0.0, %v3385
        %v3387 = vpop.f32.mrf.mxu0
        %3388 = vmatprep.mubr.bf16.mxu0 %v1810
        %3389 = vmatmul.mubr.bf16.gmra.mxu0 %v1698
        %v3390 = vpop.f32.mrf.mxu0
        %v3391 = vadd.f32 0.0, %v3390
        %v3392 = vpop.f32.mrf.mxu0
        %v3393 = vpop.f32.mrf.mxu0
        %v3394 = vadd.f32 0.0, %v3393
        %v3395 = vpop.f32.mrf.mxu0
        %3396 = vdwg.mxu0
        %3397 = vmatprep.subr.bf16.mxu0 0
        %3398 = vmatpush1.bf16.msra.mxu0 %v3115
        %3399 = vmatprep.subr.bf16.mxu0 0
        %3400 = vmatpush1.bf16.msra.mxu0 %v3114
        %3401 = vmatprep.subr.bf16.mxu0 0
        %3402 = vmatpush1.bf16.msra.mxu0 %v3113
        %3403 = vmatprep.subr.bf16.mxu0 0
        %3404 = vmatpush1.bf16.msra.mxu0 %v3112
        %3405 = vmatprep.subr.bf16.mxu0 0
        %3406 = vmatpush1.bf16.msra.mxu0 %v3111
        %3407 = vmatprep.subr.bf16.mxu0 0
        %3408 = vmatpush1.bf16.msra.mxu0 %v3110
        %3409 = vmatprep.subr.bf16.mxu0 0
        %3410 = vmatpush1.bf16.msra.mxu0 %v3109
        %3411 = vmatprep.subr.bf16.mxu0 0
        %3412 = vmatpush1.bf16.msra.mxu0 %v3108
        %3413 = vmatprep.subr.bf16.mxu0 0
        %3414 = vmatpush2.bf16.msra.mxu0 %v3123
        %3415 = vmatprep.subr.bf16.mxu0 0
        %3416 = vmatpush2.bf16.msra.mxu0 %v3122
        %3417 = vmatprep.subr.bf16.mxu0 0
        %3418 = vmatpush2.bf16.msra.mxu0 %v3121
        %3419 = vmatprep.subr.bf16.mxu0 0
        %3420 = vmatpush2.bf16.msra.mxu0 %v3120
        %3421 = vmatprep.subr.bf16.mxu0 0
        %3422 = vmatpush2.bf16.msra.mxu0 %v3119
        %3423 = vmatprep.subr.bf16.mxu0 0
        %3424 = vmatpush2.bf16.msra.mxu0 %v3118
        %3425 = vmatprep.subr.bf16.mxu0 0
        %3426 = vmatpush2.bf16.msra.mxu0 %v3117
        %3427 = vmatprep.subr.bf16.mxu0 0
        %3428 = vmatpush2.bf16.msra.mxu0 %v3116
        %3429 = vmatprep.mubr.bf16.mxu0 %v2116
        %3430 = vmatmul.mubr.bf16.gmra.mxu0 %v2004
        %v3431 = vpop.f32.mrf.mxu0
        %v3432 = vadd.f32 %v3271, %v3431
        %v3433 = vpop.f32.mrf.mxu0
        %v3434 = vpop.f32.mrf.mxu0
        %v3435 = vadd.f32 %v3274, %v3434
        %v3436 = vpop.f32.mrf.mxu0
        %3437 = vmatprep.mubr.bf16.mxu0 %v2117
        %3438 = vmatmul.mubr.bf16.gmra.mxu0 %v2005
        %v3439 = vpop.f32.mrf.mxu0
        %v3440 = vadd.f32 %v3279, %v3439
        %v3441 = vpop.f32.mrf.mxu0
        %v3442 = vpop.f32.mrf.mxu0
        %v3443 = vadd.f32 %v3282, %v3442
        %v3444 = vpop.f32.mrf.mxu0
        %3445 = vmatprep.mubr.bf16.mxu0 %v2118
        %3446 = vmatmul.mubr.bf16.gmra.mxu0 %v2006
        %v3447 = vpop.f32.mrf.mxu0
        %v3448 = vadd.f32 %v3287, %v3447
        %v3449 = vpop.f32.mrf.mxu0
        %v3450 = vpop.f32.mrf.mxu0
        %v3451 = vadd.f32 %v3290, %v3450
        %v3452 = vpop.f32.mrf.mxu0
        %3453 = vmatprep.mubr.bf16.mxu0 %v2119
        %3454 = vmatmul.mubr.bf16.gmra.mxu0 %v2007
        %v3455 = vpop.f32.mrf.mxu0
        %v3456 = vadd.f32 %v3295, %v3455
        %v3457 = vpop.f32.mrf.mxu0
        %v3458 = vpop.f32.mrf.mxu0
        %v3459 = vadd.f32 %v3298, %v3458
        %v3460 = vpop.f32.mrf.mxu0
        %3461 = vmatprep.mubr.bf16.mxu0 %v2120
        %3462 = vmatmul.mubr.bf16.gmra.mxu0 %v2008
        %v3463 = vpop.f32.mrf.mxu0
        %v3464 = vadd.f32 %v3303, %v3463
        %v3465 = vpop.f32.mrf.mxu0
        %v3466 = vpop.f32.mrf.mxu0
        %v3467 = vadd.f32 %v3306, %v3466
        %v3468 = vpop.f32.mrf.mxu0
        %3469 = vmatprep.mubr.bf16.mxu0 %v2121
        %3470 = vmatmul.mubr.bf16.gmra.mxu0 %v2009
        %v3471 = vpop.f32.mrf.mxu0
        %v3472 = vadd.f32 %v3311, %v3471
        %v3473 = vpop.f32.mrf.mxu0
        %v3474 = vpop.f32.mrf.mxu0
        %v3475 = vadd.f32 %v3314, %v3474
        %v3476 = vpop.f32.mrf.mxu0
        %3477 = vmatprep.mubr.bf16.mxu0 %v2122
        %3478 = vmatmul.mubr.bf16.gmra.mxu0 %v2010
        %v3479 = vpop.f32.mrf.mxu0
        %v3480 = vadd.f32 %v3319, %v3479
        %v3481 = vpop.f32.mrf.mxu0
        %v3482 = vpop.f32.mrf.mxu0
        %v3483 = vadd.f32 %v3322, %v3482
        %v3484 = vpop.f32.mrf.mxu0
        %3485 = vmatprep.mubr.bf16.mxu0 %v2123
        %3486 = vmatmul.mubr.bf16.gmra.mxu0 %v2011
        %v3487 = vpop.f32.mrf.mxu0
        %v3488 = vadd.f32 %v3327, %v3487
        %v3489 = vpop.f32.mrf.mxu0
        %v3490 = vpop.f32.mrf.mxu0
        %v3491 = vadd.f32 %v3330, %v3490
        %v3492 = vpop.f32.mrf.mxu0
        %3493 = vmatprep.mubr.bf16.mxu0 %v2124
        %3494 = vmatmul.mubr.bf16.gmra.mxu0 %v2012
        %v3495 = vpop.f32.mrf.mxu0
        %v3496 = vadd.f32 %v3335, %v3495
        %v3497 = vpop.f32.mrf.mxu0
        %v3498 = vpop.f32.mrf.mxu0
        %v3499 = vadd.f32 %v3338, %v3498
        %v3500 = vpop.f32.mrf.mxu0
        %3501 = vmatprep.mubr.bf16.mxu0 %v2125
        %3502 = vmatmul.mubr.bf16.gmra.mxu0 %v2013
        %v3503 = vpop.f32.mrf.mxu0
        %v3504 = vadd.f32 %v3343, %v3503
        %v3505 = vpop.f32.mrf.mxu0
        %v3506 = vpop.f32.mrf.mxu0
        %v3507 = vadd.f32 %v3346, %v3506
        %v3508 = vpop.f32.mrf.mxu0
        %3509 = vmatprep.mubr.bf16.mxu0 %v2126
        %3510 = vmatmul.mubr.bf16.gmra.mxu0 %v2014
        %v3511 = vpop.f32.mrf.mxu0
        %v3512 = vadd.f32 %v3351, %v3511
        %v3513 = vpop.f32.mrf.mxu0
        %v3514 = vpop.f32.mrf.mxu0
        %v3515 = vadd.f32 %v3354, %v3514
        %v3516 = vpop.f32.mrf.mxu0
        %3517 = vmatprep.mubr.bf16.mxu0 %v2127
        %3518 = vmatmul.mubr.bf16.gmra.mxu0 %v2015
        %v3519 = vpop.f32.mrf.mxu0
        %v3520 = vadd.f32 %v3359, %v3519
        %v3521 = vpop.f32.mrf.mxu0
        %v3522 = vpop.f32.mrf.mxu0
        %v3523 = vadd.f32 %v3362, %v3522
        %v3524 = vpop.f32.mrf.mxu0
        %3525 = vmatprep.mubr.bf16.mxu0 %v2128
        %3526 = vmatmul.mubr.bf16.gmra.mxu0 %v2016
        %v3527 = vpop.f32.mrf.mxu0
        %v3528 = vadd.f32 %v3367, %v3527
        %v3529 = vpop.f32.mrf.mxu0
        %v3530 = vpop.f32.mrf.mxu0
        %v3531 = vadd.f32 %v3370, %v3530
        %v3532 = vpop.f32.mrf.mxu0
        %3533 = vmatprep.mubr.bf16.mxu0 %v2129
        %3534 = vmatmul.mubr.bf16.gmra.mxu0 %v2017
        %v3535 = vpop.f32.mrf.mxu0
        %v3536 = vadd.f32 %v3375, %v3535
        %v3537 = vpop.f32.mrf.mxu0
        %v3538 = vpop.f32.mrf.mxu0
        %v3539 = vadd.f32 %v3378, %v3538
        %v3540 = vpop.f32.mrf.mxu0
        %3541 = vmatprep.mubr.bf16.mxu0 %v2130
        %3542 = vmatmul.mubr.bf16.gmra.mxu0 %v2018
        %v3543 = vpop.f32.mrf.mxu0
        %v3544 = vadd.f32 %v3383, %v3543
        %v3545 = vpop.f32.mrf.mxu0
        %v3546 = vpop.f32.mrf.mxu0
        %v3547 = vadd.f32 %v3386, %v3546
        %v3548 = vpop.f32.mrf.mxu0
        %3549 = vmatprep.mubr.bf16.mxu0 %v2131
        %3550 = vmatmul.mubr.bf16.gmra.mxu0 %v2019
        %v3551 = vpop.f32.mrf.mxu0
        %v3552 = vadd.f32 %v3391, %v3551
        %v3553 = vpop.f32.mrf.mxu0
        %v3554 = vpop.f32.mrf.mxu0
        %v3555 = vadd.f32 %v3394, %v3554
        %v3556 = vpop.f32.mrf.mxu0
        %3557 = vdwg.mxu0
        %3558 = vmatprep.subr.bf16.mxu0 0
        %3559 = vmatpush1.bf16.msra.mxu0 %v3131
        %3560 = vmatprep.subr.bf16.mxu0 0
        %3561 = vmatpush1.bf16.msra.mxu0 %v3130
        %3562 = vmatprep.subr.bf16.mxu0 0
        %3563 = vmatpush1.bf16.msra.mxu0 %v3129
        %3564 = vmatprep.subr.bf16.mxu0 0
        %3565 = vmatpush1.bf16.msra.mxu0 %v3128
        %3566 = vmatprep.subr.bf16.mxu0 0
        %3567 = vmatpush1.bf16.msra.mxu0 %v3127
        %3568 = vmatprep.subr.bf16.mxu0 0
        %3569 = vmatpush1.bf16.msra.mxu0 %v3126
        %3570 = vmatprep.subr.bf16.mxu0 0
        %3571 = vmatpush1.bf16.msra.mxu0 %v3125
        %3572 = vmatprep.subr.bf16.mxu0 0
        %3573 = vmatpush1.bf16.msra.mxu0 %v3124
        %3574 = vmatprep.subr.bf16.mxu0 0
        %3575 = vmatpush2.bf16.msra.mxu0 %v3139
        %3576 = vmatprep.subr.bf16.mxu0 0
        %3577 = vmatpush2.bf16.msra.mxu0 %v3138
        %3578 = vmatprep.subr.bf16.mxu0 0
        %3579 = vmatpush2.bf16.msra.mxu0 %v3137
        %3580 = vmatprep.subr.bf16.mxu0 0
        %3581 = vmatpush2.bf16.msra.mxu0 %v3136
        %3582 = vmatprep.subr.bf16.mxu0 0
        %3583 = vmatpush2.bf16.msra.mxu0 %v3135
        %3584 = vmatprep.subr.bf16.mxu0 0
        %3585 = vmatpush2.bf16.msra.mxu0 %v3134
        %3586 = vmatprep.subr.bf16.mxu0 0
        %3587 = vmatpush2.bf16.msra.mxu0 %v3133
        %3588 = vmatprep.subr.bf16.mxu0 0
        %3589 = vmatpush2.bf16.msra.mxu0 %v3132
        %3590 = vmatprep.mubr.bf16.mxu0 %v2244
        %3591 = vmatmul.mubr.bf16.gmra.mxu0 %v2132
        %v3592 = vpop.f32.mrf.mxu0
        %v3593 = vadd.f32 %v3432, %v3592
        %v3594 = vpop.f32.mrf.mxu0
        %v3595 = vpop.f32.mrf.mxu0
        %v3596 = vadd.f32 %v3435, %v3595
        %v3597 = vpop.f32.mrf.mxu0
        %3598 = vmatprep.mubr.bf16.mxu0 %v2245
        %3599 = vmatmul.mubr.bf16.gmra.mxu0 %v2133
        %v3600 = vpop.f32.mrf.mxu0
        %v3601 = vadd.f32 %v3440, %v3600
        %v3602 = vpop.f32.mrf.mxu0
        %v3603 = vpop.f32.mrf.mxu0
        %v3604 = vadd.f32 %v3443, %v3603
        %v3605 = vpop.f32.mrf.mxu0
        %3606 = vmatprep.mubr.bf16.mxu0 %v2246
        %3607 = vmatmul.mubr.bf16.gmra.mxu0 %v2134
        %v3608 = vpop.f32.mrf.mxu0
        %v3609 = vadd.f32 %v3448, %v3608
        %v3610 = vpop.f32.mrf.mxu0
        %v3611 = vpop.f32.mrf.mxu0
        %v3612 = vadd.f32 %v3451, %v3611
        %v3613 = vpop.f32.mrf.mxu0
        %3614 = vmatprep.mubr.bf16.mxu0 %v2247
        %3615 = vmatmul.mubr.bf16.gmra.mxu0 %v2135
        %v3616 = vpop.f32.mrf.mxu0
        %v3617 = vadd.f32 %v3456, %v3616
        %v3618 = vpop.f32.mrf.mxu0
        %v3619 = vpop.f32.mrf.mxu0
        %v3620 = vadd.f32 %v3459, %v3619
        %v3621 = vpop.f32.mrf.mxu0
        %3622 = vmatprep.mubr.bf16.mxu0 %v2248
        %3623 = vmatmul.mubr.bf16.gmra.mxu0 %v2136
        %v3624 = vpop.f32.mrf.mxu0
        %v3625 = vadd.f32 %v3464, %v3624
        %v3626 = vpop.f32.mrf.mxu0
        %v3627 = vpop.f32.mrf.mxu0
        %v3628 = vadd.f32 %v3467, %v3627
        %v3629 = vpop.f32.mrf.mxu0
        %3630 = vmatprep.mubr.bf16.mxu0 %v2249
        %3631 = vmatmul.mubr.bf16.gmra.mxu0 %v2137
        %v3632 = vpop.f32.mrf.mxu0
        %v3633 = vadd.f32 %v3472, %v3632
        %v3634 = vpop.f32.mrf.mxu0
        %v3635 = vpop.f32.mrf.mxu0
        %v3636 = vadd.f32 %v3475, %v3635
        %v3637 = vpop.f32.mrf.mxu0
        %3638 = vmatprep.mubr.bf16.mxu0 %v2250
        %3639 = vmatmul.mubr.bf16.gmra.mxu0 %v2138
        %v3640 = vpop.f32.mrf.mxu0
        %v3641 = vadd.f32 %v3480, %v3640
        %v3642 = vpop.f32.mrf.mxu0
        %v3643 = vpop.f32.mrf.mxu0
        %v3644 = vadd.f32 %v3483, %v3643
        %v3645 = vpop.f32.mrf.mxu0
        %3646 = vmatprep.mubr.bf16.mxu0 %v2251
        %3647 = vmatmul.mubr.bf16.gmra.mxu0 %v2139
        %v3648 = vpop.f32.mrf.mxu0
        %v3649 = vadd.f32 %v3488, %v3648
        %v3650 = vpop.f32.mrf.mxu0
        %v3651 = vpop.f32.mrf.mxu0
        %v3652 = vadd.f32 %v3491, %v3651
        %v3653 = vpop.f32.mrf.mxu0
        %3654 = vmatprep.mubr.bf16.mxu0 %v2252
        %3655 = vmatmul.mubr.bf16.gmra.mxu0 %v2140
        %v3656 = vpop.f32.mrf.mxu0
        %v3657 = vadd.f32 %v3496, %v3656
        %v3658 = vpop.f32.mrf.mxu0
        %v3659 = vpop.f32.mrf.mxu0
        %v3660 = vadd.f32 %v3499, %v3659
        %v3661 = vpop.f32.mrf.mxu0
        %3662 = vmatprep.mubr.bf16.mxu0 %v2253
        %3663 = vmatmul.mubr.bf16.gmra.mxu0 %v2141
        %v3664 = vpop.f32.mrf.mxu0
        %v3665 = vadd.f32 %v3504, %v3664
        %v3666 = vpop.f32.mrf.mxu0
        %v3667 = vpop.f32.mrf.mxu0
        %v3668 = vadd.f32 %v3507, %v3667
        %v3669 = vpop.f32.mrf.mxu0
        %3670 = vmatprep.mubr.bf16.mxu0 %v2254
        %3671 = vmatmul.mubr.bf16.gmra.mxu0 %v2142
        %v3672 = vpop.f32.mrf.mxu0
        %v3673 = vadd.f32 %v3512, %v3672
        %v3674 = vpop.f32.mrf.mxu0
        %v3675 = vpop.f32.mrf.mxu0
        %v3676 = vadd.f32 %v3515, %v3675
        %v3677 = vpop.f32.mrf.mxu0
        %3678 = vmatprep.mubr.bf16.mxu0 %v2255
        %3679 = vmatmul.mubr.bf16.gmra.mxu0 %v2143
        %v3680 = vpop.f32.mrf.mxu0
        %v3681 = vadd.f32 %v3520, %v3680
        %v3682 = vpop.f32.mrf.mxu0
        %v3683 = vpop.f32.mrf.mxu0
        %v3684 = vadd.f32 %v3523, %v3683
        %v3685 = vpop.f32.mrf.mxu0
        %3686 = vmatprep.mubr.bf16.mxu0 %v2256
        %3687 = vmatmul.mubr.bf16.gmra.mxu0 %v2144
        %v3688 = vpop.f32.mrf.mxu0
        %v3689 = vadd.f32 %v3528, %v3688
        %v3690 = vpop.f32.mrf.mxu0
        %v3691 = vpop.f32.mrf.mxu0
        %v3692 = vadd.f32 %v3531, %v3691
        %v3693 = vpop.f32.mrf.mxu0
        %3694 = vmatprep.mubr.bf16.mxu0 %v2257
        %3695 = vmatmul.mubr.bf16.gmra.mxu0 %v2145
        %v3696 = vpop.f32.mrf.mxu0
        %v3697 = vadd.f32 %v3536, %v3696
        %v3698 = vpop.f32.mrf.mxu0
        %v3699 = vpop.f32.mrf.mxu0
        %v3700 = vadd.f32 %v3539, %v3699
        %v3701 = vpop.f32.mrf.mxu0
        %3702 = vmatprep.mubr.bf16.mxu0 %v2258
        %3703 = vmatmul.mubr.bf16.gmra.mxu0 %v2146
        %v3704 = vpop.f32.mrf.mxu0
        %v3705 = vadd.f32 %v3544, %v3704
        %v3706 = vpop.f32.mrf.mxu0
        %v3707 = vpop.f32.mrf.mxu0
        %v3708 = vadd.f32 %v3547, %v3707
        %v3709 = vpop.f32.mrf.mxu0
        %3710 = vmatprep.mubr.bf16.mxu0 %v2259
        %3711 = vmatmul.mubr.bf16.gmra.mxu0 %v2147
        %v3712 = vpop.f32.mrf.mxu0
        %v3713 = vadd.f32 %v3552, %v3712
        %v3714 = vpop.f32.mrf.mxu0
        %v3715 = vpop.f32.mrf.mxu0
        %v3716 = vadd.f32 %v3555, %v3715
        %v3717 = vpop.f32.mrf.mxu0
        %3718 = vdwg.mxu0
        %3719 = vmatprep.subr.bf16.mxu0 0
        %3720 = vmatpush1.bf16.msra.mxu0 %v3147
        %3721 = vmatprep.subr.bf16.mxu0 0
        %3722 = vmatpush1.bf16.msra.mxu0 %v3146
        %3723 = vmatprep.subr.bf16.mxu0 0
        %3724 = vmatpush1.bf16.msra.mxu0 %v3145
        %3725 = vmatprep.subr.bf16.mxu0 0
        %3726 = vmatpush1.bf16.msra.mxu0 %v3144
        %3727 = vmatprep.subr.bf16.mxu0 0
        %3728 = vmatpush1.bf16.msra.mxu0 %v3143
        %3729 = vmatprep.subr.bf16.mxu0 0
        %3730 = vmatpush1.bf16.msra.mxu0 %v3142
        %3731 = vmatprep.subr.bf16.mxu0 0
        %3732 = vmatpush1.bf16.msra.mxu0 %v3141
        %3733 = vmatprep.subr.bf16.mxu0 0
        %3734 = vmatpush1.bf16.msra.mxu0 %v3140
        %3735 = vmatprep.subr.bf16.mxu0 0
        %3736 = vmatpush2.bf16.msra.mxu0 %v3155
        %3737 = vmatprep.subr.bf16.mxu0 0
        %3738 = vmatpush2.bf16.msra.mxu0 %v3154
        %3739 = vmatprep.subr.bf16.mxu0 0
        %3740 = vmatpush2.bf16.msra.mxu0 %v3153
        %3741 = vmatprep.subr.bf16.mxu0 0
        %3742 = vmatpush2.bf16.msra.mxu0 %v3152
        %3743 = vmatprep.subr.bf16.mxu0 0
        %3744 = vmatpush2.bf16.msra.mxu0 %v3151
        %3745 = vmatprep.subr.bf16.mxu0 0
        %3746 = vmatpush2.bf16.msra.mxu0 %v3150
        %3747 = vmatprep.subr.bf16.mxu0 0
        %3748 = vmatpush2.bf16.msra.mxu0 %v3149
        %3749 = vmatprep.subr.bf16.mxu0 0
        %3750 = vmatpush2.bf16.msra.mxu0 %v3148
        %3751 = vmatprep.mubr.bf16.mxu0 %v2500
        %3752 = vmatmul.mubr.bf16.gmra.mxu0 %v2388
        %v3753 = vpop.f32.mrf.mxu0
        %v3754 = vadd.f32 %v3593, %v3753
        %v3755 = vpop.f32.mrf.mxu0
        %v3756 = vpop.f32.mrf.mxu0
        %v3757 = vadd.f32 %v3596, %v3756
        %v3758 = vpop.f32.mrf.mxu0
        %3759 = vmatprep.mubr.bf16.mxu0 %v2501
        %3760 = vmatmul.mubr.bf16.gmra.mxu0 %v2389
        %v3761 = vpop.f32.mrf.mxu0
        %v3762 = vadd.f32 %v3601, %v3761
        %v3763 = vpop.f32.mrf.mxu0
        %v3764 = vpop.f32.mrf.mxu0
        %v3765 = vadd.f32 %v3604, %v3764
        %v3766 = vpop.f32.mrf.mxu0
        %3767 = vmatprep.mubr.bf16.mxu0 %v2502
        %3768 = vmatmul.mubr.bf16.gmra.mxu0 %v2390
        %v3769 = vpop.f32.mrf.mxu0
        %v3770 = vadd.f32 %v3609, %v3769
        %v3771 = vpop.f32.mrf.mxu0
        %v3772 = vpop.f32.mrf.mxu0
        %v3773 = vadd.f32 %v3612, %v3772
        %v3774 = vpop.f32.mrf.mxu0
        %3775 = vmatprep.mubr.bf16.mxu0 %v2503
        %3776 = vmatmul.mubr.bf16.gmra.mxu0 %v2391
        %v3777 = vpop.f32.mrf.mxu0
        %v3778 = vadd.f32 %v3617, %v3777
        %v3779 = vpop.f32.mrf.mxu0
        %v3780 = vpop.f32.mrf.mxu0
        %v3781 = vadd.f32 %v3620, %v3780
        %v3782 = vpop.f32.mrf.mxu0
        %3783 = vmatprep.mubr.bf16.mxu0 %v2504
        %3784 = vmatmul.mubr.bf16.gmra.mxu0 %v2392
        %v3785 = vpop.f32.mrf.mxu0
        %v3786 = vadd.f32 %v3625, %v3785
        %v3787 = vpop.f32.mrf.mxu0
        %v3788 = vpop.f32.mrf.mxu0
        %v3789 = vadd.f32 %v3628, %v3788
        %v3790 = vpop.f32.mrf.mxu0
        %3791 = vmatprep.mubr.bf16.mxu0 %v2505
        %3792 = vmatmul.mubr.bf16.gmra.mxu0 %v2393
        %v3793 = vpop.f32.mrf.mxu0
        %v3794 = vadd.f32 %v3633, %v3793
        %v3795 = vpop.f32.mrf.mxu0
        %v3796 = vpop.f32.mrf.mxu0
        %v3797 = vadd.f32 %v3636, %v3796
        %v3798 = vpop.f32.mrf.mxu0
        %3799 = vmatprep.mubr.bf16.mxu0 %v2506
        %3800 = vmatmul.mubr.bf16.gmra.mxu0 %v2394
        %v3801 = vpop.f32.mrf.mxu0
        %v3802 = vadd.f32 %v3641, %v3801
        %v3803 = vpop.f32.mrf.mxu0
        %v3804 = vpop.f32.mrf.mxu0
        %v3805 = vadd.f32 %v3644, %v3804
        %v3806 = vpop.f32.mrf.mxu0
        %3807 = vmatprep.mubr.bf16.mxu0 %v2507
        %3808 = vmatmul.mubr.bf16.gmra.mxu0 %v2395
        %v3809 = vpop.f32.mrf.mxu0
        %v3810 = vadd.f32 %v3649, %v3809
        %v3811 = vpop.f32.mrf.mxu0
        %v3812 = vpop.f32.mrf.mxu0
        %v3813 = vadd.f32 %v3652, %v3812
        %v3814 = vpop.f32.mrf.mxu0
        %3815 = vmatprep.mubr.bf16.mxu0 %v2508
        %3816 = vmatmul.mubr.bf16.gmra.mxu0 %v2396
        %v3817 = vpop.f32.mrf.mxu0
        %v3818 = vadd.f32 %v3657, %v3817
        %v3819 = vpop.f32.mrf.mxu0
        %v3820 = vpop.f32.mrf.mxu0
        %v3821 = vadd.f32 %v3660, %v3820
        %v3822 = vpop.f32.mrf.mxu0
        %3823 = vmatprep.mubr.bf16.mxu0 %v2509
        %3824 = vmatmul.mubr.bf16.gmra.mxu0 %v2397
        %v3825 = vpop.f32.mrf.mxu0
        %v3826 = vadd.f32 %v3665, %v3825
        %v3827 = vpop.f32.mrf.mxu0
        %v3828 = vpop.f32.mrf.mxu0
        %v3829 = vadd.f32 %v3668, %v3828
        %v3830 = vpop.f32.mrf.mxu0
        %3831 = vmatprep.mubr.bf16.mxu0 %v2510
        %3832 = vmatmul.mubr.bf16.gmra.mxu0 %v2398
        %v3833 = vpop.f32.mrf.mxu0
        %v3834 = vadd.f32 %v3673, %v3833
        %v3835 = vpop.f32.mrf.mxu0
        %v3836 = vpop.f32.mrf.mxu0
        %v3837 = vadd.f32 %v3676, %v3836
        %v3838 = vpop.f32.mrf.mxu0
        %3839 = vmatprep.mubr.bf16.mxu0 %v2511
        %3840 = vmatmul.mubr.bf16.gmra.mxu0 %v2399
        %v3841 = vpop.f32.mrf.mxu0
        %v3842 = vadd.f32 %v3681, %v3841
        %v3843 = vpop.f32.mrf.mxu0
        %v3844 = vpop.f32.mrf.mxu0
        %v3845 = vadd.f32 %v3684, %v3844
        %v3846 = vpop.f32.mrf.mxu0
        %3847 = vmatprep.mubr.bf16.mxu0 %v2512
        %3848 = vmatmul.mubr.bf16.gmra.mxu0 %v2400
        %v3849 = vpop.f32.mrf.mxu0
        %v3850 = vadd.f32 %v3689, %v3849
        %v3851 = vpop.f32.mrf.mxu0
        %v3852 = vpop.f32.mrf.mxu0
        %v3853 = vadd.f32 %v3692, %v3852
        %v3854 = vpop.f32.mrf.mxu0
        %3855 = vmatprep.mubr.bf16.mxu0 %v2513
        %3856 = vmatmul.mubr.bf16.gmra.mxu0 %v2401
        %v3857 = vpop.f32.mrf.mxu0
        %v3858 = vadd.f32 %v3697, %v3857
        %v3859 = vpop.f32.mrf.mxu0
        %v3860 = vpop.f32.mrf.mxu0
        %v3861 = vadd.f32 %v3700, %v3860
        %v3862 = vpop.f32.mrf.mxu0
        %3863 = vmatprep.mubr.bf16.mxu0 %v2514
        %3864 = vmatmul.mubr.bf16.gmra.mxu0 %v2402
        %v3865 = vpop.f32.mrf.mxu0
        %v3866 = vadd.f32 %v3705, %v3865
        %v3867 = vpop.f32.mrf.mxu0
        %v3868 = vpop.f32.mrf.mxu0
        %v3869 = vadd.f32 %v3708, %v3868
        %v3870 = vpop.f32.mrf.mxu0
        %3871 = vmatprep.mubr.bf16.mxu0 %v2515
        %3872 = vmatmul.mubr.bf16.gmra.mxu0 %v2403
        %v3873 = vpop.f32.mrf.mxu0
        %v3874 = vadd.f32 %v3713, %v3873
        %v3875 = vpop.f32.mrf.mxu0
        %v3876 = vpop.f32.mrf.mxu0
        %v3877 = vadd.f32 %v3716, %v3876
        %v3878 = vpop.f32.mrf.mxu0
        %3879 = vdwg.mxu0
        %3880 = vmatprep.subr.bf16.mxu0 0
        %3881 = vmatpush1.bf16.msra.mxu0 %v3163
        %3882 = vmatprep.subr.bf16.mxu0 0
        %3883 = vmatpush1.bf16.msra.mxu0 %v3162
        %3884 = vmatprep.subr.bf16.mxu0 0
        %3885 = vmatpush1.bf16.msra.mxu0 %v3161
        %3886 = vmatprep.subr.bf16.mxu0 0
        %3887 = vmatpush1.bf16.msra.mxu0 %v3160
        %3888 = vmatprep.subr.bf16.mxu0 0
        %3889 = vmatpush1.bf16.msra.mxu0 %v3159
        %3890 = vmatprep.subr.bf16.mxu0 0
        %3891 = vmatpush1.bf16.msra.mxu0 %v3158
        %3892 = vmatprep.subr.bf16.mxu0 0
        %3893 = vmatpush1.bf16.msra.mxu0 %v3157
        %3894 = vmatprep.subr.bf16.mxu0 0
        %3895 = vmatpush1.bf16.msra.mxu0 %v3156
        %3896 = vmatprep.subr.bf16.mxu0 0
        %3897 = vmatpush2.bf16.msra.mxu0 0
        %3898 = vmatprep.subr.bf16.mxu0 0
        %3899 = vmatpush2.bf16.msra.mxu0 0
        %3900 = vmatprep.subr.bf16.mxu0 0
        %3901 = vmatpush2.bf16.msra.mxu0 0
        %3902 = vmatprep.subr.bf16.mxu0 0
        %3903 = vmatpush2.bf16.msra.mxu0 0
        %3904 = vmatprep.subr.bf16.mxu0 0
        %3905 = vmatpush2.bf16.msra.mxu0 0
        %3906 = vmatprep.subr.bf16.mxu0 0
        %3907 = vmatpush2.bf16.msra.mxu0 0
        %3908 = vmatprep.subr.bf16.mxu0 0
        %3909 = vmatpush2.bf16.msra.mxu0 0
        %3910 = vmatprep.subr.bf16.mxu0 0
        %3911 = vmatpush2.bf16.msra.mxu0 0
        %3912 = vmatprep.mubr.bf16.mxu0 0
        %3913 = vmatmul.mubr.bf16.gmra.mxu0 %v2644
        %v3914 = vpop.f32.mrf.mxu0
        %v3915 = vadd.f32 %v3754, %v3914
        %v3916 = vpop.f32.mrf.mxu0
        %v3917 = vpop.f32.mrf.mxu0
        %v3918 = vadd.f32 %v3757, %v3917
        %v3919 = vpop.f32.mrf.mxu0
        %3920 = vmatprep.mubr.bf16.mxu0 0
        %3921 = vmatmul.mubr.bf16.gmra.mxu0 %v2645
        %v3922 = vpop.f32.mrf.mxu0
        %v3923 = vadd.f32 %v3762, %v3922
        %v3924 = vpop.f32.mrf.mxu0
        %v3925 = vpop.f32.mrf.mxu0
        %v3926 = vadd.f32 %v3765, %v3925
        %v3927 = vpop.f32.mrf.mxu0
        %3928 = vmatprep.mubr.bf16.mxu0 0
        %3929 = vmatmul.mubr.bf16.gmra.mxu0 %v2646
        %v3930 = vpop.f32.mrf.mxu0
        %v3931 = vadd.f32 %v3770, %v3930
        %v3932 = vpop.f32.mrf.mxu0
        %v3933 = vpop.f32.mrf.mxu0
        %v3934 = vadd.f32 %v3773, %v3933
        %v3935 = vpop.f32.mrf.mxu0
        %3936 = vmatprep.mubr.bf16.mxu0 0
        %3937 = vmatmul.mubr.bf16.gmra.mxu0 %v2647
        %v3938 = vpop.f32.mrf.mxu0
        %v3939 = vadd.f32 %v3778, %v3938
        %v3940 = vpop.f32.mrf.mxu0
        %v3941 = vpop.f32.mrf.mxu0
        %v3942 = vadd.f32 %v3781, %v3941
        %v3943 = vpop.f32.mrf.mxu0
        %3944 = vmatprep.mubr.bf16.mxu0 0
        %3945 = vmatmul.mubr.bf16.gmra.mxu0 %v2648
        %v3946 = vpop.f32.mrf.mxu0
        %v3947 = vadd.f32 %v3786, %v3946
        %v3948 = vpop.f32.mrf.mxu0
        %v3949 = vpop.f32.mrf.mxu0
        %v3950 = vadd.f32 %v3789, %v3949
        %v3951 = vpop.f32.mrf.mxu0
        %3952 = vmatprep.mubr.bf16.mxu0 0
        %3953 = vmatmul.mubr.bf16.gmra.mxu0 %v2649
        %v3954 = vpop.f32.mrf.mxu0
        %v3955 = vadd.f32 %v3794, %v3954
        %v3956 = vpop.f32.mrf.mxu0
        %v3957 = vpop.f32.mrf.mxu0
        %v3958 = vadd.f32 %v3797, %v3957
        %v3959 = vpop.f32.mrf.mxu0
        %3960 = vmatprep.mubr.bf16.mxu0 0
        %3961 = vmatmul.mubr.bf16.gmra.mxu0 %v2650
        %v3962 = vpop.f32.mrf.mxu0
        %v3963 = vadd.f32 %v3802, %v3962
        %v3964 = vpop.f32.mrf.mxu0
        %v3965 = vpop.f32.mrf.mxu0
        %v3966 = vadd.f32 %v3805, %v3965
        %v3967 = vpop.f32.mrf.mxu0
        %3968 = vmatprep.mubr.bf16.mxu0 0
        %3969 = vmatmul.mubr.bf16.gmra.mxu0 %v2651
        %v3970 = vpop.f32.mrf.mxu0
        %v3971 = vadd.f32 %v3810, %v3970
        %v3972 = vpop.f32.mrf.mxu0
        %v3973 = vpop.f32.mrf.mxu0
        %v3974 = vadd.f32 %v3813, %v3973
        %v3975 = vpop.f32.mrf.mxu0
        %3976 = vmatprep.mubr.bf16.mxu0 0
        %3977 = vmatmul.mubr.bf16.gmra.mxu0 %v2652
        %v3978 = vpop.f32.mrf.mxu0
        %v3979 = vadd.f32 %v3818, %v3978
        %v3980 = vpop.f32.mrf.mxu0
        %v3981 = vpop.f32.mrf.mxu0
        %v3982 = vadd.f32 %v3821, %v3981
        %v3983 = vpop.f32.mrf.mxu0
        %3984 = vmatprep.mubr.bf16.mxu0 0
        %3985 = vmatmul.mubr.bf16.gmra.mxu0 %v2653
        %v3986 = vpop.f32.mrf.mxu0
        %v3987 = vadd.f32 %v3826, %v3986
        %v3988 = vpop.f32.mrf.mxu0
        %v3989 = vpop.f32.mrf.mxu0
        %v3990 = vadd.f32 %v3829, %v3989
        %v3991 = vpop.f32.mrf.mxu0
        %3992 = vmatprep.mubr.bf16.mxu0 0
        %3993 = vmatmul.mubr.bf16.gmra.mxu0 %v2654
        %v3994 = vpop.f32.mrf.mxu0
        %v3995 = vadd.f32 %v3834, %v3994
        %v3996 = vpop.f32.mrf.mxu0
        %v3997 = vpop.f32.mrf.mxu0
        %v3998 = vadd.f32 %v3837, %v3997
        %v3999 = vpop.f32.mrf.mxu0
        %4000 = vmatprep.mubr.bf16.mxu0 0
        %4001 = vmatmul.mubr.bf16.gmra.mxu0 %v2655
        %v4002 = vpop.f32.mrf.mxu0
        %v4003 = vadd.f32 %v3842, %v4002
        %v4004 = vpop.f32.mrf.mxu0
        %v4005 = vpop.f32.mrf.mxu0
        %v4006 = vadd.f32 %v3845, %v4005
        %v4007 = vpop.f32.mrf.mxu0
        %4008 = vmatprep.mubr.bf16.mxu0 0
        %4009 = vmatmul.mubr.bf16.gmra.mxu0 %v2656
        %v4010 = vpop.f32.mrf.mxu0
        %v4011 = vadd.f32 %v3850, %v4010
        %v4012 = vpop.f32.mrf.mxu0
        %v4013 = vpop.f32.mrf.mxu0
        %v4014 = vadd.f32 %v3853, %v4013
        %v4015 = vpop.f32.mrf.mxu0
        %4016 = vmatprep.mubr.bf16.mxu0 0
        %4017 = vmatmul.mubr.bf16.gmra.mxu0 %v2657
        %v4018 = vpop.f32.mrf.mxu0
        %v4019 = vadd.f32 %v3858, %v4018
        %v4020 = vpop.f32.mrf.mxu0
        %v4021 = vpop.f32.mrf.mxu0
        %v4022 = vadd.f32 %v3861, %v4021
        %v4023 = vpop.f32.mrf.mxu0
        %4024 = vmatprep.mubr.bf16.mxu0 0
        %4025 = vmatmul.mubr.bf16.gmra.mxu0 %v2658
        %v4026 = vpop.f32.mrf.mxu0
        %v4027 = vadd.f32 %v3866, %v4026
        %v4028 = vpop.f32.mrf.mxu0
        %v4029 = vpop.f32.mrf.mxu0
        %v4030 = vadd.f32 %v3869, %v4029
        %v4031 = vpop.f32.mrf.mxu0
        %4032 = vmatprep.mubr.bf16.mxu0 0
        %4033 = vmatmul.mubr.bf16.gmra.mxu0 %v2659
        %v4034 = vpop.f32.mrf.mxu0
        %v4035 = vadd.f32 %v3874, %v4034
        %v4036 = vpop.f32.mrf.mxu0
        %v4037 = vpop.f32.mrf.mxu0
        %v4038 = vadd.f32 %v3877, %v4037
        %v4039 = vpop.f32.mrf.mxu0
        %4040 = vdwg.mxu0
        %v4041 = vld [vmem:[%s5] sm:$0x1]
        %v4043 = vlaneseq
        %v4044 = vshrl.u32 %v4043, 7
        %v4045 = vsub.s32 0, %v4044
        %v4046 = vrot.slane %v4041, %v4045
        %v4048 = vmul.f32 %v3915, %v4046
        %v4049 = vmul.f32 %v3918, %v4046
        %v4050 = vmul.f32 %v3923, %v4046
        %v4051 = vmul.f32 %v3926, %v4046
        %v4052 = vmul.f32 %v3931, %v4046
        %v4053 = vmul.f32 %v3934, %v4046
        %v4054 = vmul.f32 %v3939, %v4046
        %v4055 = vmul.f32 %v3942, %v4046
        %v4056 = vmul.f32 %v3947, %v4046
        %v4057 = vmul.f32 %v3950, %v4046
        %v4058 = vmul.f32 %v3955, %v4046
        %v4059 = vmul.f32 %v3958, %v4046
        %v4060 = vmul.f32 %v3963, %v4046
        %v4061 = vmul.f32 %v3966, %v4046
        %v4062 = vmul.f32 %v3971, %v4046
        %v4063 = vmul.f32 %v3974, %v4046
        %v4064 = vmul.f32 %v3979, %v4046
        %v4065 = vmul.f32 %v3982, %v4046
        %v4066 = vmul.f32 %v3987, %v4046
        %v4067 = vmul.f32 %v3990, %v4046
        %v4068 = vmul.f32 %v3995, %v4046
        %v4069 = vmul.f32 %v3998, %v4046
        %v4070 = vmul.f32 %v4003, %v4046
        %v4071 = vmul.f32 %v4006, %v4046
        %v4072 = vmul.f32 %v4011, %v4046
        %v4073 = vmul.f32 %v4014, %v4046
        %v4074 = vmul.f32 %v4019, %v4046
        %v4075 = vmul.f32 %v4022, %v4046
        %v4076 = vmul.f32 %v4027, %v4046
        %v4077 = vmul.f32 %v4030, %v4046
        %v4078 = vmul.f32 %v4035, %v4046
        %v4079 = vmul.f32 %v4038, %v4046
        %v4080 = vld [vmem:[%s6] sm:$0x1]
        %v4082 = vlaneseq
        %v4083 = vshrl.u32 %v4082, 7
        %v4084 = vsub.s32 0, %v4083
        %v4085 = vrot.slane %v4080, %v4084
        %v4087 = vadd.f32 %v4048, %v4085
        %v4088 = vadd.f32 %v4049, %v4085
        %v4089 = vadd.f32 %v4050, %v4085
        %v4090 = vadd.f32 %v4051, %v4085
        %v4091 = vadd.f32 %v4052, %v4085
        %v4092 = vadd.f32 %v4053, %v4085
        %v4093 = vadd.f32 %v4054, %v4085
        %v4094 = vadd.f32 %v4055, %v4085
        %v4095 = vadd.f32 %v4056, %v4085
        %v4096 = vadd.f32 %v4057, %v4085
        %v4097 = vadd.f32 %v4058, %v4085
        %v4098 = vadd.f32 %v4059, %v4085
        %v4099 = vadd.f32 %v4060, %v4085
        %v4100 = vadd.f32 %v4061, %v4085
        %v4101 = vadd.f32 %v4062, %v4085
        %v4102 = vadd.f32 %v4063, %v4085
        %v4103 = vadd.f32 %v4064, %v4085
        %v4104 = vadd.f32 %v4065, %v4085
        %v4105 = vadd.f32 %v4066, %v4085
        %v4106 = vadd.f32 %v4067, %v4085
        %v4107 = vadd.f32 %v4068, %v4085
        %v4108 = vadd.f32 %v4069, %v4085
        %v4109 = vadd.f32 %v4070, %v4085
        %v4110 = vadd.f32 %v4071, %v4085
        %v4111 = vadd.f32 %v4072, %v4085
        %v4112 = vadd.f32 %v4073, %v4085
        %v4113 = vadd.f32 %v4074, %v4085
        %v4114 = vadd.f32 %v4075, %v4085
        %v4115 = vadd.f32 %v4076, %v4085
        %v4116 = vadd.f32 %v4077, %v4085
        %v4117 = vadd.f32 %v4078, %v4085
        %v4118 = vadd.f32 %v4079, %v4085
        %v4119 = vmax.f32 %v4087, 0.0
        %v4120 = vmax.f32 %v4088, 0.0
        %v4121 = vmax.f32 %v4089, 0.0
        %v4122 = vmax.f32 %v4090, 0.0
        %v4123 = vmax.f32 %v4091, 0.0
        %v4124 = vmax.f32 %v4092, 0.0
        %v4125 = vmax.f32 %v4093, 0.0
        %v4126 = vmax.f32 %v4094, 0.0
        %v4127 = vmax.f32 %v4095, 0.0
        %v4128 = vmax.f32 %v4096, 0.0
        %v4129 = vmax.f32 %v4097, 0.0
        %v4130 = vmax.f32 %v4098, 0.0
        %v4131 = vmax.f32 %v4099, 0.0
        %v4132 = vmax.f32 %v4100, 0.0
        %v4133 = vmax.f32 %v4101, 0.0
        %v4134 = vmax.f32 %v4102, 0.0
        %v4135 = vmax.f32 %v4103, 0.0
        %v4136 = vmax.f32 %v4104, 0.0
        %v4137 = vmax.f32 %v4105, 0.0
        %v4138 = vmax.f32 %v4106, 0.0
        %v4139 = vmax.f32 %v4107, 0.0
        %v4140 = vmax.f32 %v4108, 0.0
        %v4141 = vmax.f32 %v4109, 0.0
        %v4142 = vmax.f32 %v4110, 0.0
        %v4143 = vmax.f32 %v4111, 0.0
        %v4144 = vmax.f32 %v4112, 0.0
        %v4145 = vmax.f32 %v4113, 0.0
        %v4146 = vmax.f32 %v4114, 0.0
        %v4147 = vmax.f32 %v4115, 0.0
        %v4148 = vmax.f32 %v4116, 0.0
        %v4149 = vmax.f32 %v4117, 0.0
        %v4150 = vmax.f32 %v4118, 0.0
        %v4151 = vpack.c.bf16 %v4120, %v4119
        %v4152 = vpack.c.bf16 %v4122, %v4121
        %v4153 = vpack.c.bf16 %v4124, %v4123
        %v4154 = vpack.c.bf16 %v4126, %v4125
        %v4155 = vpack.c.bf16 %v4128, %v4127
        %v4156 = vpack.c.bf16 %v4130, %v4129
        %v4157 = vpack.c.bf16 %v4132, %v4131
        %v4158 = vpack.c.bf16 %v4134, %v4133
        %v4159 = vpack.c.bf16 %v4136, %v4135
        %v4160 = vpack.c.bf16 %v4138, %v4137
        %v4161 = vpack.c.bf16 %v4140, %v4139
        %v4162 = vpack.c.bf16 %v4142, %v4141
        %v4163 = vpack.c.bf16 %v4144, %v4143
        %v4164 = vpack.c.bf16 %v4146, %v4145
        %v4165 = vpack.c.bf16 %v4148, %v4147
        %v4166 = vpack.c.bf16 %v4150, %v4149
        %v4167 = vld [vmem:[#allocation8] sm:$0xf]
        %v4168 = vld [vmem:[#allocation8 + $0x4] sm:$0xf]
        %v4169 = vld [vmem:[#allocation8 + $0x8] sm:$0xf]
        %v4170 = vld [vmem:[#allocation8 + $0xc] sm:$0xf]
        %v4171 = vld [vmem:[#allocation8 + $0x10] sm:$0xf]
        %v4172 = vld [vmem:[#allocation8 + $0x14] sm:$0xf]
        %v4173 = vld [vmem:[#allocation8 + $0x18] sm:$0xf]
        %v4174 = vld [vmem:[#allocation8 + $0x1c] sm:$0xf]
        %v4175 = vld [vmem:[#allocation8 + $0x20] sm:$0xf]
        %v4176 = vld [vmem:[#allocation8 + $0x24] sm:$0xf]
        %v4177 = vld [vmem:[#allocation8 + $0x28] sm:$0xf]
        %v4178 = vld [vmem:[#allocation8 + $0x2c] sm:$0xf]
        %v4179 = vld [vmem:[#allocation8 + $0x30] sm:$0xf]
        %v4180 = vld [vmem:[#allocation8 + $0x34] sm:$0xf]
        %v4181 = vld [vmem:[#allocation8 + $0x38] sm:$0xf]
        %v4182 = vld [vmem:[#allocation8 + $0x3c] sm:$0xf]
        %v4199 = vunpack.c.l.b16 %v4167
        %v4200 = vunpack.c.l.b16 %v4168
        %v4201 = vunpack.c.l.b16 %v4169
        %v4202 = vunpack.c.l.b16 %v4170
        %v4203 = vunpack.c.l.b16 %v4171
        %v4204 = vunpack.c.l.b16 %v4172
        %v4205 = vunpack.c.l.b16 %v4173
        %v4206 = vunpack.c.l.b16 %v4174
        %v4207 = vunpack.c.l.b16 %v4175
        %v4208 = vunpack.c.l.b16 %v4176
        %v4209 = vunpack.c.l.b16 %v4177
        %v4210 = vunpack.c.l.b16 %v4178
        %v4211 = vunpack.c.l.b16 %v4179
        %v4212 = vunpack.c.l.b16 %v4180
        %v4213 = vunpack.c.l.b16 %v4181
        %v4214 = vunpack.c.l.b16 %v4182
        %v4215 = vpack.c.b16 %v4200, %v4199
        %v4216 = vpack.c.b16 %v4202, %v4201
        %v4217 = vpack.c.b16 %v4204, %v4203
        %v4218 = vpack.c.b16 %v4206, %v4205
        %v4219 = vpack.c.b16 %v4208, %v4207
        %v4220 = vpack.c.b16 %v4210, %v4209
        %v4221 = vpack.c.b16 %v4212, %v4211
        %v4222 = vpack.c.b16 %v4214, %v4213
        %4231 = vmatprep.subr.bf16.mxu0 0
        %4232 = vmatpush1.bf16.msra.mxu0 %v4222
        %4233 = vmatprep.subr.bf16.mxu0 0
        %4234 = vmatpush1.bf16.msra.mxu0 %v4221
        %4235 = vmatprep.subr.bf16.mxu0 0
        %4236 = vmatpush1.bf16.msra.mxu0 %v4220
        %4237 = vmatprep.subr.bf16.mxu0 0
        %4238 = vmatpush1.bf16.msra.mxu0 %v4219
        %4239 = vmatprep.subr.bf16.mxu0 0
        %4240 = vmatpush1.bf16.msra.mxu0 %v4218
        %4241 = vmatprep.subr.bf16.mxu0 0
        %4242 = vmatpush1.bf16.msra.mxu0 %v4217
        %4243 = vmatprep.subr.bf16.mxu0 0
        %4244 = vmatpush1.bf16.msra.mxu0 %v4216
        %4245 = vmatprep.subr.bf16.mxu0 0
        %4246 = vmatpush1.bf16.msra.mxu0 %v4215
        %4247 = vmatprep.subr.bf16.mxu0 0
        %4248 = vmatpush2.bf16.msra.mxu0 0
        %4249 = vmatprep.subr.bf16.mxu0 0
        %4250 = vmatpush2.bf16.msra.mxu0 0
        %4251 = vmatprep.subr.bf16.mxu0 0
        %4252 = vmatpush2.bf16.msra.mxu0 0
        %4253 = vmatprep.subr.bf16.mxu0 0
        %4254 = vmatpush2.bf16.msra.mxu0 0
        %4255 = vmatprep.subr.bf16.mxu0 0
        %4256 = vmatpush2.bf16.msra.mxu0 0
        %4257 = vmatprep.subr.bf16.mxu0 0
        %4258 = vmatpush2.bf16.msra.mxu0 0
        %4259 = vmatprep.subr.bf16.mxu0 0
        %4260 = vmatpush2.bf16.msra.mxu0 0
        %4261 = vmatprep.subr.bf16.mxu0 0
        %4262 = vmatpush2.bf16.msra.mxu0 0
        %4263 = vmatprep.mubr.bf16.mxu0 0
        %4264 = vmatmul.mubr.bf16.gmra.mxu0 %v4151
        %v4265 = vpop.f32.mrf.mxu0
        %v4266 = vadd.f32 0.0, %v4265
        %v4267 = vpop.f32.mrf.mxu0
        %v4268 = vpop.f32.mrf.mxu0
        %v4269 = vadd.f32 0.0, %v4268
        %v4270 = vpop.f32.mrf.mxu0
        %4271 = vmatprep.mubr.bf16.mxu0 0
        %4272 = vmatmul.mubr.bf16.gmra.mxu0 %v4152
        %v4273 = vpop.f32.mrf.mxu0
        %v4274 = vadd.f32 0.0, %v4273
        %v4275 = vpop.f32.mrf.mxu0
        %v4276 = vpop.f32.mrf.mxu0
        %v4277 = vadd.f32 0.0, %v4276
        %v4278 = vpop.f32.mrf.mxu0
        %4279 = vmatprep.mubr.bf16.mxu0 0
        %4280 = vmatmul.mubr.bf16.gmra.mxu0 %v4153
        %v4281 = vpop.f32.mrf.mxu0
        %v4282 = vadd.f32 0.0, %v4281
        %v4283 = vpop.f32.mrf.mxu0
        %v4284 = vpop.f32.mrf.mxu0
        %v4285 = vadd.f32 0.0, %v4284
        %v4286 = vpop.f32.mrf.mxu0
        %4287 = vmatprep.mubr.bf16.mxu0 0
        %4288 = vmatmul.mubr.bf16.gmra.mxu0 %v4154
        %v4289 = vpop.f32.mrf.mxu0
        %v4290 = vadd.f32 0.0, %v4289
        %v4291 = vpop.f32.mrf.mxu0
        %v4292 = vpop.f32.mrf.mxu0
        %v4293 = vadd.f32 0.0, %v4292
        %v4294 = vpop.f32.mrf.mxu0
        %4295 = vmatprep.mubr.bf16.mxu0 0
        %4296 = vmatmul.mubr.bf16.gmra.mxu0 %v4155
        %v4297 = vpop.f32.mrf.mxu0
        %v4298 = vadd.f32 0.0, %v4297
        %v4299 = vpop.f32.mrf.mxu0
        %v4300 = vpop.f32.mrf.mxu0
        %v4301 = vadd.f32 0.0, %v4300
        %v4302 = vpop.f32.mrf.mxu0
        %4303 = vmatprep.mubr.bf16.mxu0 0
        %4304 = vmatmul.mubr.bf16.gmra.mxu0 %v4156
        %v4305 = vpop.f32.mrf.mxu0
        %v4306 = vadd.f32 0.0, %v4305
        %v4307 = vpop.f32.mrf.mxu0
        %v4308 = vpop.f32.mrf.mxu0
        %v4309 = vadd.f32 0.0, %v4308
        %v4310 = vpop.f32.mrf.mxu0
        %4311 = vmatprep.mubr.bf16.mxu0 0
        %4312 = vmatmul.mubr.bf16.gmra.mxu0 %v4157
        %v4313 = vpop.f32.mrf.mxu0
        %v4314 = vadd.f32 0.0, %v4313
        %v4315 = vpop.f32.mrf.mxu0
        %v4316 = vpop.f32.mrf.mxu0
        %v4317 = vadd.f32 0.0, %v4316
        %v4318 = vpop.f32.mrf.mxu0
        %4319 = vmatprep.mubr.bf16.mxu0 0
        %4320 = vmatmul.mubr.bf16.gmra.mxu0 %v4158
        %v4321 = vpop.f32.mrf.mxu0
        %v4322 = vadd.f32 0.0, %v4321
        %v4323 = vpop.f32.mrf.mxu0
        %v4324 = vpop.f32.mrf.mxu0
        %v4325 = vadd.f32 0.0, %v4324
        %v4326 = vpop.f32.mrf.mxu0
        %4327 = vmatprep.mubr.bf16.mxu0 0
        %4328 = vmatmul.mubr.bf16.gmra.mxu0 %v4159
        %v4329 = vpop.f32.mrf.mxu0
        %v4330 = vadd.f32 0.0, %v4329
        %v4331 = vpop.f32.mrf.mxu0
        %v4332 = vpop.f32.mrf.mxu0
        %v4333 = vadd.f32 0.0, %v4332
        %v4334 = vpop.f32.mrf.mxu0
        %4335 = vmatprep.mubr.bf16.mxu0 0
        %4336 = vmatmul.mubr.bf16.gmra.mxu0 %v4160
        %v4337 = vpop.f32.mrf.mxu0
        %v4338 = vadd.f32 0.0, %v4337
        %v4339 = vpop.f32.mrf.mxu0
        %v4340 = vpop.f32.mrf.mxu0
        %v4341 = vadd.f32 0.0, %v4340
        %v4342 = vpop.f32.mrf.mxu0
        %4343 = vmatprep.mubr.bf16.mxu0 0
        %4344 = vmatmul.mubr.bf16.gmra.mxu0 %v4161
        %v4345 = vpop.f32.mrf.mxu0
        %v4346 = vadd.f32 0.0, %v4345
        %v4347 = vpop.f32.mrf.mxu0
        %v4348 = vpop.f32.mrf.mxu0
        %v4349 = vadd.f32 0.0, %v4348
        %v4350 = vpop.f32.mrf.mxu0
        %4351 = vmatprep.mubr.bf16.mxu0 0
        %4352 = vmatmul.mubr.bf16.gmra.mxu0 %v4162
        %v4353 = vpop.f32.mrf.mxu0
        %v4354 = vadd.f32 0.0, %v4353
        %v4355 = vpop.f32.mrf.mxu0
        %v4356 = vpop.f32.mrf.mxu0
        %v4357 = vadd.f32 0.0, %v4356
        %v4358 = vpop.f32.mrf.mxu0
        %4359 = vmatprep.mubr.bf16.mxu0 0
        %4360 = vmatmul.mubr.bf16.gmra.mxu0 %v4163
        %v4361 = vpop.f32.mrf.mxu0
        %v4362 = vadd.f32 0.0, %v4361
        %v4363 = vpop.f32.mrf.mxu0
        %v4364 = vpop.f32.mrf.mxu0
        %v4365 = vadd.f32 0.0, %v4364
        %v4366 = vpop.f32.mrf.mxu0
        %4367 = vmatprep.mubr.bf16.mxu0 0
        %4368 = vmatmul.mubr.bf16.gmra.mxu0 %v4164
        %v4369 = vpop.f32.mrf.mxu0
        %v4370 = vadd.f32 0.0, %v4369
        %v4371 = vpop.f32.mrf.mxu0
        %v4372 = vpop.f32.mrf.mxu0
        %v4373 = vadd.f32 0.0, %v4372
        %v4374 = vpop.f32.mrf.mxu0
        %4375 = vmatprep.mubr.bf16.mxu0 0
        %4376 = vmatmul.mubr.bf16.gmra.mxu0 %v4165
        %v4377 = vpop.f32.mrf.mxu0
        %v4378 = vadd.f32 0.0, %v4377
        %v4379 = vpop.f32.mrf.mxu0
        %v4380 = vpop.f32.mrf.mxu0
        %v4381 = vadd.f32 0.0, %v4380
        %v4382 = vpop.f32.mrf.mxu0
        %4383 = vmatprep.mubr.bf16.mxu0 0
        %4384 = vmatmul.mubr.bf16.gmra.mxu0 %v4166
        %v4385 = vpop.f32.mrf.mxu0
        %v4386 = vadd.f32 0.0, %v4385
        %v4387 = vpop.f32.mrf.mxu0
        %v4388 = vpop.f32.mrf.mxu0
        %v4389 = vadd.f32 0.0, %v4388
        %v4390 = vpop.f32.mrf.mxu0
        %4391 = vdwg.mxu0
        %v4392 = vld [vmem:[%s8] sm:$0x1]
        %v4394 = vlaneseq
        %v4395 = vshrl.u32 %v4394, 7
        %v4396 = vsub.s32 0, %v4395
        %v4397 = vrot.slane %v4392, %v4396
        %v4399 = vmul.f32 %v4266, %v4397
        %v4400 = vmul.f32 %v4269, %v4397
        %v4401 = vmul.f32 %v4274, %v4397
        %v4402 = vmul.f32 %v4277, %v4397
        %v4403 = vmul.f32 %v4282, %v4397
        %v4404 = vmul.f32 %v4285, %v4397
        %v4405 = vmul.f32 %v4290, %v4397
        %v4406 = vmul.f32 %v4293, %v4397
        %v4407 = vmul.f32 %v4298, %v4397
        %v4408 = vmul.f32 %v4301, %v4397
        %v4409 = vmul.f32 %v4306, %v4397
        %v4410 = vmul.f32 %v4309, %v4397
        %v4411 = vmul.f32 %v4314, %v4397
        %v4412 = vmul.f32 %v4317, %v4397
        %v4413 = vmul.f32 %v4322, %v4397
        %v4414 = vmul.f32 %v4325, %v4397
        %v4415 = vmul.f32 %v4330, %v4397
        %v4416 = vmul.f32 %v4333, %v4397
        %v4417 = vmul.f32 %v4338, %v4397
        %v4418 = vmul.f32 %v4341, %v4397
        %v4419 = vmul.f32 %v4346, %v4397
        %v4420 = vmul.f32 %v4349, %v4397
        %v4421 = vmul.f32 %v4354, %v4397
        %v4422 = vmul.f32 %v4357, %v4397
        %v4423 = vmul.f32 %v4362, %v4397
        %v4424 = vmul.f32 %v4365, %v4397
        %v4425 = vmul.f32 %v4370, %v4397
        %v4426 = vmul.f32 %v4373, %v4397
        %v4427 = vmul.f32 %v4378, %v4397
        %v4428 = vmul.f32 %v4381, %v4397
        %v4429 = vmul.f32 %v4386, %v4397
        %v4430 = vmul.f32 %v4389, %v4397
        %v4431 = vld [vmem:[%s9] sm:$0x1]
        %v4433 = vlaneseq
        %v4434 = vshrl.u32 %v4433, 7
        %v4435 = vsub.s32 0, %v4434
        %v4436 = vrot.slane %v4431, %v4435
        %v4438 = vadd.f32 %v4399, %v4436
        %v4439 = vadd.f32 %v4400, %v4436
        %v4440 = vadd.f32 %v4401, %v4436
        %v4441 = vadd.f32 %v4402, %v4436
        %v4442 = vadd.f32 %v4403, %v4436
        %v4443 = vadd.f32 %v4404, %v4436
        %v4444 = vadd.f32 %v4405, %v4436
        %v4445 = vadd.f32 %v4406, %v4436
        %v4446 = vadd.f32 %v4407, %v4436
        %v4447 = vadd.f32 %v4408, %v4436
        %v4448 = vadd.f32 %v4409, %v4436
        %v4449 = vadd.f32 %v4410, %v4436
        %v4450 = vadd.f32 %v4411, %v4436
        %v4451 = vadd.f32 %v4412, %v4436
        %v4452 = vadd.f32 %v4413, %v4436
        %v4453 = vadd.f32 %v4414, %v4436
        %v4454 = vadd.f32 %v4415, %v4436
        %v4455 = vadd.f32 %v4416, %v4436
        %v4456 = vadd.f32 %v4417, %v4436
        %v4457 = vadd.f32 %v4418, %v4436
        %v4458 = vadd.f32 %v4419, %v4436
        %v4459 = vadd.f32 %v4420, %v4436
        %v4460 = vadd.f32 %v4421, %v4436
        %v4461 = vadd.f32 %v4422, %v4436
        %v4462 = vadd.f32 %v4423, %v4436
        %v4463 = vadd.f32 %v4424, %v4436
        %v4464 = vadd.f32 %v4425, %v4436
        %v4465 = vadd.f32 %v4426, %v4436
        %v4466 = vadd.f32 %v4427, %v4436
        %v4467 = vadd.f32 %v4428, %v4436
        %v4468 = vadd.f32 %v4429, %v4436
        %v4469 = vadd.f32 %v4430, %v4436
        %v4470 = vadd.f32 %v4438, %v4439
        %v4471 = vadd.f32 %v4470, %v4440
        %v4472 = vadd.f32 %v4471, %v4441
        %v4473 = vadd.f32 %v4472, %v4442
        %v4474 = vadd.f32 %v4473, %v4443
        %v4475 = vadd.f32 %v4474, %v4444
        %v4476 = vadd.f32 %v4475, %v4445
        %v4477 = vadd.f32 %v4476, %v4446
        %v4478 = vadd.f32 %v4477, %v4447
        %v4479 = vadd.f32 %v4478, %v4448
        %v4480 = vadd.f32 %v4479, %v4449
        %v4481 = vadd.f32 %v4480, %v4450
        %v4482 = vadd.f32 %v4481, %v4451
        %v4483 = vadd.f32 %v4482, %v4452
        %v4484 = vadd.f32 %v4483, %v4453
        %v4485 = vadd.f32 %v4484, %v4454
        %v4486 = vadd.f32 %v4485, %v4455
        %v4487 = vadd.f32 %v4486, %v4456
        %v4488 = vadd.f32 %v4487, %v4457
        %v4489 = vadd.f32 %v4488, %v4458
        %v4490 = vadd.f32 %v4489, %v4459
        %v4491 = vadd.f32 %v4490, %v4460
        %v4492 = vadd.f32 %v4491, %v4461
        %v4493 = vadd.f32 %v4492, %v4462
        %v4494 = vadd.f32 %v4493, %v4463
        %v4495 = vadd.f32 %v4494, %v4464
        %v4496 = vadd.f32 %v4495, %v4465
        %v4497 = vadd.f32 %v4496, %v4466
        %v4498 = vadd.f32 %v4497, %v4467
        %v4499 = vadd.f32 %v4498, %v4468
        %v4500 = vadd.f32 %v4499, %v4469
        %v4501 = vrot.slane %v4500, 4
        %v4502 = vadd.f32 %v4500, %v4501
        %v4503 = vrot.slane %v4502, 2
        %v4504 = vadd.f32 %v4502, %v4503
        %v4505 = vrot.slane %v4504, 1
        %v4506 = vadd.f32 %v4504, %v4505
        %v4507 = vrcp.pop 256.0
        %v4508 = vmul.f32 %v4506, %v4507
        %v4509 = vpack.c.bf16 %v4508, %v4508
        %v4510 = vld [vmem:[#allocation10] sm:$0xf]
        %v4511 = vld [vmem:[#allocation10 + $0x4] sm:$0xf]
        %v4512 = vld [vmem:[#allocation10 + $0x8] sm:$0xf]
        %v4513 = vld [vmem:[#allocation10 + $0xc] sm:$0xf]
        %v4514 = vld [vmem:[#allocation10 + $0x10] sm:$0xf]
        %v4515 = vld [vmem:[#allocation10 + $0x14] sm:$0xf]
        %v4516 = vld [vmem:[#allocation10 + $0x18] sm:$0xf]
        %v4517 = vld [vmem:[#allocation10 + $0x1c] sm:$0xf]
        %v4518 = vld [vmem:[#allocation10 + $0x20] sm:$0xf]
        %v4519 = vld [vmem:[#allocation10 + $0x24] sm:$0xf]
        %v4520 = vld [vmem:[#allocation10 + $0x28] sm:$0xf]
        %v4521 = vld [vmem:[#allocation10 + $0x2c] sm:$0xf]
        %v4522 = vld [vmem:[#allocation10 + $0x30] sm:$0xf]
        %v4523 = vld [vmem:[#allocation10 + $0x34] sm:$0xf]
        %v4524 = vld [vmem:[#allocation10 + $0x38] sm:$0xf]
        %v4525 = vld [vmem:[#allocation10 + $0x3c] sm:$0xf]
        %v4526 = vld [vmem:[%s11] sm:$0x1]
        %v4543 = vunpack.c.l.b16 %v4510
        %v4544 = vunpack.c.l.b16 %v4511
        %v4545 = vunpack.c.l.b16 %v4512
        %v4546 = vunpack.c.l.b16 %v4513
        %v4547 = vunpack.c.l.b16 %v4514
        %v4548 = vunpack.c.l.b16 %v4515
        %v4549 = vunpack.c.l.b16 %v4516
        %v4550 = vunpack.c.l.b16 %v4517
        %v4551 = vunpack.c.l.b16 %v4518
        %v4552 = vunpack.c.l.b16 %v4519
        %v4553 = vunpack.c.l.b16 %v4520
        %v4554 = vunpack.c.l.b16 %v4521
        %v4555 = vunpack.c.l.b16 %v4522
        %v4556 = vunpack.c.l.b16 %v4523
        %v4557 = vunpack.c.l.b16 %v4524
        %v4558 = vunpack.c.l.b16 %v4525
        %v4559 = vpack.c.b16 %v4544, %v4543
        %v4560 = vpack.c.b16 %v4546, %v4545
        %v4561 = vpack.c.b16 %v4548, %v4547
        %v4562 = vpack.c.b16 %v4550, %v4549
        %v4563 = vpack.c.b16 %v4552, %v4551
        %v4564 = vpack.c.b16 %v4554, %v4553
        %v4565 = vpack.c.b16 %v4556, %v4555
        %v4566 = vpack.c.b16 %v4558, %v4557
        %4575 = vmatprep.subr.bf16.mxu0 0
        %4576 = vmatpush1.bf16.msra.mxu0 %v4566
        %4577 = vmatprep.subr.bf16.mxu0 0
        %4578 = vmatpush1.bf16.msra.mxu0 %v4565
        %4579 = vmatprep.subr.bf16.mxu0 0
        %4580 = vmatpush1.bf16.msra.mxu0 %v4564
        %4581 = vmatprep.subr.bf16.mxu0 0
        %4582 = vmatpush1.bf16.msra.mxu0 %v4563
        %4583 = vmatprep.subr.bf16.mxu0 0
        %4584 = vmatpush1.bf16.msra.mxu0 %v4562
        %4585 = vmatprep.subr.bf16.mxu0 0
        %4586 = vmatpush1.bf16.msra.mxu0 %v4561
        %4587 = vmatprep.subr.bf16.mxu0 0
        %4588 = vmatpush1.bf16.msra.mxu0 %v4560
        %4589 = vmatprep.subr.bf16.mxu0 0
        %4590 = vmatpush1.bf16.msra.mxu0 %v4559
        %4591 = vmatprep.subr.bf16.mxu0 0
        %4592 = vmatpush2.bf16.msra.mxu0 0
        %4593 = vmatprep.subr.bf16.mxu0 0
        %4594 = vmatpush2.bf16.msra.mxu0 0
        %4595 = vmatprep.subr.bf16.mxu0 0
        %4596 = vmatpush2.bf16.msra.mxu0 0
        %4597 = vmatprep.subr.bf16.mxu0 0
        %4598 = vmatpush2.bf16.msra.mxu0 0
        %4599 = vmatprep.subr.bf16.mxu0 0
        %4600 = vmatpush2.bf16.msra.mxu0 0
        %4601 = vmatprep.subr.bf16.mxu0 0
        %4602 = vmatpush2.bf16.msra.mxu0 0
        %4603 = vmatprep.subr.bf16.mxu0 0
        %4604 = vmatpush2.bf16.msra.mxu0 0
        %4605 = vmatprep.subr.bf16.mxu0 0
        %4606 = vmatpush2.bf16.msra.mxu0 0
        %4607 = vmatprep.mubr.bf16.mxu0 0
        %4608 = vmatmul.mubr.bf16.gmra.mxu0 %v4509
        %v4609 = vpop.f32.mrf.mxu0
        %v4610 = vadd.f32 %v4526, %v4609
        %v4611 = vpop.f32.mrf.mxu0
        %v4612 = vpop.f32.mrf.mxu0
        %v4613 = vpop.f32.mrf.mxu0
        %4614 = vdwg.mxu0
        %v4615 = vmax.f32 %v4610, 0.0
        %v4616 = vpack.c.bf16 %v4615, %v4615
        %v4617 = vld [vmem:[#allocation11] sm:$0xf]
        %v4618 = vld [vmem:[#allocation11 + $0x4] sm:$0xf]
        %v4619 = vld [vmem:[#allocation11 + $0x8] sm:$0xf]
        %v4620 = vld [vmem:[#allocation11 + $0xc] sm:$0xf]
        %v4621 = vld [vmem:[#allocation11 + $0x10] sm:$0xf]
        %v4622 = vld [vmem:[#allocation11 + $0x14] sm:$0xf]
        %v4623 = vld [vmem:[#allocation11 + $0x18] sm:$0xf]
        %v4624 = vld [vmem:[#allocation11 + $0x1c] sm:$0xf]
        %v4625 = vld [vmem:[#allocation11 + $0x20] sm:$0xf]
        %v4626 = vld [vmem:[#allocation11 + $0x24] sm:$0xf]
        %v4627 = vld [vmem:[#allocation11 + $0x28] sm:$0xf]
        %v4628 = vld [vmem:[#allocation11 + $0x2c] sm:$0xf]
        %v4629 = vld [vmem:[#allocation11 + $0x30] sm:$0xf]
        %v4630 = vld [vmem:[#allocation11 + $0x34] sm:$0xf]
        %v4631 = vld [vmem:[#allocation11 + $0x38] sm:$0xf]
        %v4632 = vld [vmem:[#allocation11 + $0x3c] sm:$0xf]
        %v4633 = vld [vmem:[%s13] sm:$0x1]
        %v4650 = vunpack.c.l.b16 %v4617
        %v4651 = vunpack.c.l.b16 %v4618
        %v4652 = vunpack.c.l.b16 %v4619
        %v4653 = vunpack.c.l.b16 %v4620
        %v4654 = vunpack.c.l.b16 %v4621
        %v4655 = vunpack.c.l.b16 %v4622
        %v4656 = vunpack.c.l.b16 %v4623
        %v4657 = vunpack.c.l.b16 %v4624
        %v4658 = vunpack.c.l.b16 %v4625
        %v4659 = vunpack.c.l.b16 %v4626
        %v4660 = vunpack.c.l.b16 %v4627
        %v4661 = vunpack.c.l.b16 %v4628
        %v4662 = vunpack.c.l.b16 %v4629
        %v4663 = vunpack.c.l.b16 %v4630
        %v4664 = vunpack.c.l.b16 %v4631
        %v4665 = vunpack.c.l.b16 %v4632
        %v4666 = vpack.c.b16 %v4651, %v4650
        %v4667 = vpack.c.b16 %v4653, %v4652
        %v4668 = vpack.c.b16 %v4655, %v4654
        %v4669 = vpack.c.b16 %v4657, %v4656
        %v4670 = vpack.c.b16 %v4659, %v4658
        %v4671 = vpack.c.b16 %v4661, %v4660
        %v4672 = vpack.c.b16 %v4663, %v4662
        %v4673 = vpack.c.b16 %v4665, %v4664
        %4682 = vmatprep.subr.bf16.mxu0 0
        %4683 = vmatpush1.bf16.msra.mxu0 %v4673
        %4684 = vmatprep.subr.bf16.mxu0 0
        %4685 = vmatpush1.bf16.msra.mxu0 %v4672
        %4686 = vmatprep.subr.bf16.mxu0 0
        %4687 = vmatpush1.bf16.msra.mxu0 %v4671
        %4688 = vmatprep.subr.bf16.mxu0 0
        %4689 = vmatpush1.bf16.msra.mxu0 %v4670
        %4690 = vmatprep.subr.bf16.mxu0 0
        %4691 = vmatpush1.bf16.msra.mxu0 %v4669
        %4692 = vmatprep.subr.bf16.mxu0 0
        %4693 = vmatpush1.bf16.msra.mxu0 %v4668
        %4694 = vmatprep.subr.bf16.mxu0 0
        %4695 = vmatpush1.bf16.msra.mxu0 %v4667
        %4696 = vmatprep.subr.bf16.mxu0 0
        %4697 = vmatpush1.bf16.msra.mxu0 %v4666
        %4698 = vmatprep.subr.bf16.mxu0 0
        %4699 = vmatpush2.bf16.msra.mxu0 0
        %4700 = vmatprep.subr.bf16.mxu0 0
        %4701 = vmatpush2.bf16.msra.mxu0 0
        %4702 = vmatprep.subr.bf16.mxu0 0
        %4703 = vmatpush2.bf16.msra.mxu0 0
        %4704 = vmatprep.subr.bf16.mxu0 0
        %4705 = vmatpush2.bf16.msra.mxu0 0
        %4706 = vmatprep.subr.bf16.mxu0 0
        %4707 = vmatpush2.bf16.msra.mxu0 0
        %4708 = vmatprep.subr.bf16.mxu0 0
        %4709 = vmatpush2.bf16.msra.mxu0 0
        %4710 = vmatprep.subr.bf16.mxu0 0
        %4711 = vmatpush2.bf16.msra.mxu0 0
        %4712 = vmatprep.subr.bf16.mxu0 0
        %4713 = vmatpush2.bf16.msra.mxu0 0
        %4714 = vmatprep.mubr.bf16.mxu0 0
        %4715 = vmatmul.mubr.bf16.gmra.mxu0 %v4616
        %v4716 = vpop.f32.mrf.mxu0
        %v4717 = vadd.f32 %v4633, %v4716
        %v4718 = vpop.f32.mrf.mxu0
        %v4719 = vpop.f32.mrf.mxu0
        %v4720 = vpop.f32.mrf.mxu0
        %4721 = vdwg.mxu0
        %v4722 = vsub.f32 0.0, %v4717
        %v4723 = vmul.f32 %v4722, 1.442695
        %v4724 = vpow.pop %v4723
        %v4725 = vadd.f32 %v4724, 1.0
        %v4726 = vrcp.pop %v4725
        %v4727 = vmul.f32 1.0, %v4726
        %v4728 = vlaneseq
        %v4729 = vshrl.u32 %v4728, 7
        %v4730 = vsub.s32 0, %v4729
        %v4731 = vrot.slane %v4727, %v4730
        %v4732 = vmul.f32 %v4438, %v4731
        %v4733 = vmul.f32 %v4439, %v4731
        %v4734 = vmul.f32 %v4440, %v4731
        %v4735 = vmul.f32 %v4441, %v4731
        %v4736 = vmul.f32 %v4442, %v4731
        %v4737 = vmul.f32 %v4443, %v4731
        %v4738 = vmul.f32 %v4444, %v4731
        %v4739 = vmul.f32 %v4445, %v4731
        %v4740 = vmul.f32 %v4446, %v4731
        %v4741 = vmul.f32 %v4447, %v4731
        %v4742 = vmul.f32 %v4448, %v4731
        %v4743 = vmul.f32 %v4449, %v4731
        %v4744 = vmul.f32 %v4450, %v4731
        %v4745 = vmul.f32 %v4451, %v4731
        %v4746 = vmul.f32 %v4452, %v4731
        %v4747 = vmul.f32 %v4453, %v4731
        %v4748 = vmul.f32 %v4454, %v4731
        %v4749 = vmul.f32 %v4455, %v4731
        %v4750 = vmul.f32 %v4456, %v4731
        %v4751 = vmul.f32 %v4457, %v4731
        %v4752 = vmul.f32 %v4458, %v4731
        %v4753 = vmul.f32 %v4459, %v4731
        %v4754 = vmul.f32 %v4460, %v4731
        %v4755 = vmul.f32 %v4461, %v4731
        %v4756 = vmul.f32 %v4462, %v4731
        %v4757 = vmul.f32 %v4463, %v4731
        %v4758 = vmul.f32 %v4464, %v4731
        %v4759 = vmul.f32 %v4465, %v4731
        %v4760 = vmul.f32 %v4466, %v4731
        %v4761 = vmul.f32 %v4467, %v4731
        %v4762 = vmul.f32 %v4468, %v4731
        %v4763 = vmul.f32 %v4469, %v4731
        %v4764 = vadd.f32 %v4732, %v562
        %v4765 = vadd.f32 %v4733, %v563
        %v4766 = vadd.f32 %v4734, %v564
        %v4767 = vadd.f32 %v4735, %v565
        %v4768 = vadd.f32 %v4736, %v566
        %v4769 = vadd.f32 %v4737, %v567
        %v4770 = vadd.f32 %v4738, %v568
        %v4771 = vadd.f32 %v4739, %v569
        %v4772 = vadd.f32 %v4740, %v570
        %v4773 = vadd.f32 %v4741, %v571
        %v4774 = vadd.f32 %v4742, %v572
        %v4775 = vadd.f32 %v4743, %v573
        %v4776 = vadd.f32 %v4744, %v574
        %v4777 = vadd.f32 %v4745, %v575
        %v4778 = vadd.f32 %v4746, %v576
        %v4779 = vadd.f32 %v4747, %v577
        %v4780 = vadd.f32 %v4748, %v578
        %v4781 = vadd.f32 %v4749, %v579
        %v4782 = vadd.f32 %v4750, %v580
        %v4783 = vadd.f32 %v4751, %v581
        %v4784 = vadd.f32 %v4752, %v582
        %v4785 = vadd.f32 %v4753, %v583
        %v4786 = vadd.f32 %v4754, %v584
        %v4787 = vadd.f32 %v4755, %v585
        %v4788 = vadd.f32 %v4756, %v586
        %v4789 = vadd.f32 %v4757, %v587
        %v4790 = vadd.f32 %v4758, %v588
        %v4791 = vadd.f32 %v4759, %v589
        %v4792 = vadd.f32 %v4760, %v590
        %v4793 = vadd.f32 %v4761, %v591
        %v4794 = vadd.f32 %v4762, %v592
        %v4795 = vadd.f32 %v4763, %v593
        %v4796 = vmax.f32 %v4764, 0.0
        %v4797 = vmax.f32 %v4765, 0.0
        %v4798 = vmax.f32 %v4766, 0.0
        %v4799 = vmax.f32 %v4767, 0.0
        %v4800 = vmax.f32 %v4768, 0.0
        %v4801 = vmax.f32 %v4769, 0.0
        %v4802 = vmax.f32 %v4770, 0.0
        %v4803 = vmax.f32 %v4771, 0.0
        %v4804 = vmax.f32 %v4772, 0.0
        %v4805 = vmax.f32 %v4773, 0.0
        %v4806 = vmax.f32 %v4774, 0.0
        %v4807 = vmax.f32 %v4775, 0.0
        %v4808 = vmax.f32 %v4776, 0.0
        %v4809 = vmax.f32 %v4777, 0.0
        %v4810 = vmax.f32 %v4778, 0.0
        %v4811 = vmax.f32 %v4779, 0.0
        %v4812 = vmax.f32 %v4780, 0.0
        %v4813 = vmax.f32 %v4781, 0.0
        %v4814 = vmax.f32 %v4782, 0.0
        %v4815 = vmax.f32 %v4783, 0.0
        %v4816 = vmax.f32 %v4784, 0.0
        %v4817 = vmax.f32 %v4785, 0.0
        %v4818 = vmax.f32 %v4786, 0.0
        %v4819 = vmax.f32 %v4787, 0.0
        %v4820 = vmax.f32 %v4788, 0.0
        %v4821 = vmax.f32 %v4789, 0.0
        %v4822 = vmax.f32 %v4790, 0.0
        %v4823 = vmax.f32 %v4791, 0.0
        %v4824 = vmax.f32 %v4792, 0.0
        %v4825 = vmax.f32 %v4793, 0.0
        %v4826 = vmax.f32 %v4794, 0.0
        %v4827 = vmax.f32 %v4795, 0.0
        %4828 = vst [vmem:[%s558] sm:$0xff] %v4796
        %4829 = vst [vmem:[%s558 + $0x8] sm:$0xff] %v4797
        %4830 = vst [vmem:[%s558 + $0x10] sm:$0xff] %v4798
        %4831 = vst [vmem:[%s558 + $0x18] sm:$0xff] %v4799
        %4832 = vst [vmem:[%s558 + $0x20] sm:$0xff] %v4800
        %4833 = vst [vmem:[%s558 + $0x28] sm:$0xff] %v4801
        %4834 = vst [vmem:[%s558 + $0x30] sm:$0xff] %v4802
        %4835 = vst [vmem:[%s558 + $0x38] sm:$0xff] %v4803
        %4836 = vst [vmem:[%s558 + $0x40] sm:$0xff] %v4804
        %4837 = vst [vmem:[%s558 + $0x48] sm:$0xff] %v4805
        %4838 = vst [vmem:[%s558 + $0x50] sm:$0xff] %v4806
        %4839 = vst [vmem:[%s558 + $0x58] sm:$0xff] %v4807
        %4840 = vst [vmem:[%s558 + $0x60] sm:$0xff] %v4808
        %4841 = vst [vmem:[%s558 + $0x68] sm:$0xff] %v4809
        %4842 = vst [vmem:[%s558 + $0x70] sm:$0xff] %v4810
        %4843 = vst [vmem:[%s558 + $0x78] sm:$0xff] %v4811
        %4844 = vst [vmem:[%s558 + $0x80] sm:$0xff] %v4812
        %4845 = vst [vmem:[%s558 + $0x88] sm:$0xff] %v4813
        %4846 = vst [vmem:[%s558 + $0x90] sm:$0xff] %v4814
        %4847 = vst [vmem:[%s558 + $0x98] sm:$0xff] %v4815
        %4848 = vst [vmem:[%s558 + $0xa0] sm:$0xff] %v4816
        %4849 = vst [vmem:[%s558 + $0xa8] sm:$0xff] %v4817
        %4850 = vst [vmem:[%s558 + $0xb0] sm:$0xff] %v4818
        %4851 = vst [vmem:[%s558 + $0xb8] sm:$0xff] %v4819
        %4852 = vst [vmem:[%s558 + $0xc0] sm:$0xff] %v4820
        %4853 = vst [vmem:[%s558 + $0xc8] sm:$0xff] %v4821
        %4854 = vst [vmem:[%s558 + $0xd0] sm:$0xff] %v4822
        %4855 = vst [vmem:[%s558 + $0xd8] sm:$0xff] %v4823
        %4856 = vst [vmem:[%s558 + $0xe0] sm:$0xff] %v4824
        %4857 = vst [vmem:[%s558 + $0xe8] sm:$0xff] %v4825
        %4858 = vst [vmem:[%s558 + $0xf0] sm:$0xff] %v4826
        %4859 = vst [vmem:[%s558 + $0xf8] sm:$0xff] %v4827
        %s4860 = sand.u32 %s341, 1
        %s4861 = scalar_lea.sflag [#allocation4], %s4860
        %s4862 = sand.u32 %s341, 1
        %s4863 = smul.addr %s4862, 256
        %s4864 = scalar_lea.vmem [#allocation13], %s4863
        // Predicated region
        $region101: #{tpu_custom_call.1} parent=75 // pred_check
          %p4865 = pneg %p351
        $region102: #{tpu_custom_call.1} parent=75 // pred_check_branch
          %4867 = sbr.rel (%p4865) target = $region104
        $region103: #{tpu_custom_call.1} parent=75 // pred_region
          %s4868 = smul.u32 32, %s34
          %s4870 = ssub.s32 4096, 4096
          %4871 = vsyncadd %s4861, %s4870
          %s4872 = smul.addr %s4868, 128
          %s4873 = scalar_lea.hbm %s14, %s4872
          %s4874 = sshll.u32 %s4864, 4
          %s4875 = int_to_ptr.vmem [resolvable:$true] %s4874
          %4880 = dma.vmem_to_hbm [thread:$0]  %s4875, 4096, %s4873, %s4861, 128, 128, 8
        $region104: #{tpu_custom_call.1} parent=75 // pred_fallthru
          _
      $region76: #{tpu_custom_call.1} parent=5 // pred_fallthru
        _
      %p4881 = scmp.le.s32.totalorder 2, %s29
      // Predicated region
      $region105: #{tpu_custom_call.1} parent=5 // pred_check
        %p4882 = pneg %p4881
      $region106: #{tpu_custom_call.1} parent=5 // pred_check_branch
        %4884 = sbr.rel (%p4882) target = $region108
      $region107: #{tpu_custom_call.1} parent=5 // pred_region
        %s4885 = ssub.s32 %s29, 2
        // Predicated region
        $region109: #{tpu_custom_call.1} parent=107 // pred_check
          %p4886 = pneg %p357
        $region110: #{tpu_custom_call.1} parent=107 // pred_check_branch
          %4888 = sbr.rel (%p4886) target = $region112
        $region111: #{tpu_custom_call.1} parent=107 // pred_region
          %s4889 = sand.u32 %s342, 1
          %s4890 = scalar_lea.sflag [#allocation4], %s4889
          %s4891 = sand.u32 %s342, 1
          %s4892 = smul.addr %s4891, 256
          %s4893 = scalar_lea.vmem [#allocation13], %s4892
          %4894 = dma.done %s4890, 4096
        $region112: #{tpu_custom_call.1} parent=107 // pred_fallthru
          _
      $region108: #{tpu_custom_call.1} parent=5 // pred_fallthru
        _
    $region6: #{tpu_custom_call.1} parent=1 // loop_footer
      %s33 = sadd.s32 1, %s29
    $region7: #{tpu_custom_call.1} parent=1 // loop_footer_branch
      %28 = sbr.rel target = $region3
    $region8: #{tpu_custom_call.1} parent=1 // loop_exit
      _
    %4895 = vsyncpa [#allocation3], 1
    %s4896 = scalar_lea.sflag [#allocation3], 1
    %4897 = vsyncpa %s4896, 1
    %4898 = vsyncpa [#allocation6], 1
    %4899 = vsyncpa [#allocation9], 1
    %4900 = vsyncpa [#allocation12], 1
    %4901 = vsyncpa [#allocation4], 1
    %s4902 = scalar_lea.sflag [#allocation4], 1
    %4903 = vsyncpa %s4902, 1

</llo_original>
